<compile_context>
chip_gen: v6e
topology: v6e:2x2x1
jax: 0.10.0
libtpu: 0.0.40
codegen_flags: <defaults>
</compile_context>

<pallas_src>
import functools

import jax
import jax.numpy as jnp
from jax.experimental import pallas as pl
from jax.experimental.pallas import tpu as pltpu


def _dual_sepconv_kernel(x_ref, wfa_ref, shifta_ref, wfb_ref, shiftb_ref,
                         o_ref, pad_a_ref, pad_b_ref, *,
                         k, d, s, p, lpad, hoa, woa, hbo, wbo):
    """Fused DualSepConv for NB batch elements (all intermediates stay in VMEM).

    x_ref       : (NB, H, W, Cin)              unpadded input block (NHWC, C on lanes)
    wfa/b_ref   : (k*k, Cin, Cout_x)  bf16     per-tap folded weights dw * pw * bn_scale
    shifta/b    : (1, Cout_x)         f32      BN shift = beta - mean * scale
    o_ref       : (NB*Hbo*Wbo, Cout)           op_b output, batch+spatial flattened
    pad_a_ref   : (NB, H+2p,   lpad+W+p,   Cin) scratch: zero halo + ReLU(x) interior
    pad_b_ref   : (NB, Hoa+2p, lpad+Woa+p, Cin) scratch: zero halo + ReLU(op_a) interior

    The interior of both scratches starts at column `lpad` (a multiple of 8) so the
    interior stores are sublane-aligned; standard padded column c maps to scratch
    column (lpad - p) + c.
    """
    f32, bf16 = jnp.float32, jnp.bfloat16
    nb, h, w, cin = x_ref.shape
    col0 = lpad - p                       # scratch column of standard padded column 0

    def zero_halo(ref, h_img, w_img):
        # Zero only the halo ring; the interior is fully overwritten every step.
        # Done every step (not just program_id==0) so it stays correct if the
        # "parallel" batch axis is split across TensorCores (scratch is per-core).
        _, hp_, wp_, _ = ref.shape
        if p > 0:
            ref[:, 0:p, :, :] = jnp.zeros((nb, p, wp_, cin), f32)                    # top
            ref[:, p + h_img:hp_, :, :] = jnp.zeros((nb, hp_ - p - h_img, wp_, cin), f32)  # bottom
            ref[:, :, lpad + w_img:wp_, :] = jnp.zeros((nb, hp_, wp_ - lpad - w_img, cin), f32)  # right
        if lpad > 0:
            ref[:, :, 0:lpad, :] = jnp.zeros((nb, hp_, lpad, cin), f32)              # left (aligned)

    def sepconv_matmul(src_ref, wf_ref, shift_ref, ho, wo, stride):
        # Depthwise + pointwise (+BN scale) as k*k accumulated MXU matmuls with the
        # per-tap folded weights; the depthwise tap selection is a (possibly strided)
        # rectangular read from the padded scratch.
        # TODO(synk): for stride>1, deinterleave the W columns of the scratch once into
        # `stride` compact planes so the k*k tap reads become unit-stride vector loads.
        m = nb * ho * wo
        acc = None
        for i in range(k):
            for j in range(k):
                if stride == 1:
                    patch = src_ref[:, i * d:i * d + ho,
                                    col0 + j * d:col0 + j * d + wo, :]
                else:
                    # in-kernel striding: read only the rows/cols the strided conv needs
                    patch = src_ref[:, pl.ds(i * d, ho, stride=stride),
                                    pl.ds(col0 + j * d, wo, stride=stride), :]
                # (nb, ho, wo, cin) -> (m, cin) is layout-free because wo % 8 == 0
                # (guarded in the wrapper); cast to bf16 AFTER the reshape so the
                # collapse happens on the f32 (sublane=8) layout.
                lhs = patch.reshape(m, cin).astype(bf16)
                y = jnp.dot(lhs, wf_ref[i * k + j], preferred_element_type=f32)
                acc = y if acc is None else acc + y
        return acc + shift_ref[0][None, :]

    # ---- op_a: ReLU -> (depthwise stride s x 1x1 x BN-scale) folded -> +BN shift ----
    zero_halo(pad_a_ref, h, w)
    pad_a_ref[:, p:p + h, lpad:lpad + w, :] = jnp.maximum(x_ref[...], 0.0).astype(f32)
    out_a = sepconv_matmul(pad_a_ref, wfa_ref, shifta_ref, hoa, woa, s)  # (nb*hoa*woa, cin)

    # ---- op_b: ReLU -> (depthwise stride 1 x 1x1 x BN-scale) folded -> +BN shift ----
    # op_a's result never leaves VMEM: it is written straight into op_b's padded scratch.
    zero_halo(pad_b_ref, hoa, woa)
    pad_b_ref[:, p:p + hoa, lpad:lpad + woa, :] = (
        jnp.maximum(out_a, 0.0).reshape(nb, hoa, woa, cin))
    out_b = sepconv_matmul(pad_b_ref, wfb_ref, shiftb_ref, hbo, wbo, 1)  # (nb*hbo*wbo, cout)

    # TODO(synk): lane-dense (Hbo, Wbo*Cout) output store — the sublane->lane relayout
    # of out_b costs about what the dense store saves at Cout=16; revisit with a fused
    # W*C lane layout for tiny Cout.
    o_ref[...] = out_b.astype(o_ref.dtype)


def _conv_out(size, k, s, p, d):
    return (size + 2 * p - d * (k - 1) - 1) // s + 1


def _pick_batch_block(n, spatial, target_m=128, cap_m=1024):
    """Divisor NB of n so the MXU M dim (NB*spatial) reaches >=128 without exceeding
    cap_m (128 matches the v5e MXU; 128-256 is fine for v6e/v7x)."""
    nb = 1
    for cand in range(1, n + 1):
        if n % cand:
            continue
        if cand > 1 and cand * spatial > cap_m:
            break
        nb = cand
        if cand * spatial >= target_m:
            break
    return nb


def dual_sep_conv(x_nchw, params_a, params_b, *, kernel_size, stride, padding,
                  dilation, eps=1e-5):
    """DualSepConv forward pass (inference-mode BN). Input/output in PyTorch NCHW."""
    k, d, p, s = kernel_size, dilation, padding, stride
    x = jnp.transpose(x_nchw, (0, 2, 3, 1))          # NCHW -> NHWC (channels on lanes)
    N, H, W, Cin = x.shape

    def prep(params):
        w_dw, w_pw, gamma, beta, mean, var = params
        scale = gamma / jnp.sqrt(var + eps)
        w_pw_scaled = (w_pw * scale[None, :]).astype(jnp.float32)       # fold BN scale
        # Fold the depthwise tap into the (BN-scaled) pointwise weights so each SepConv
        # becomes k*k accumulated MXU matmuls: w_full[t,ci,co] = w_dw[t,ci]*w_pw[ci,co].
        w_dw_flat = w_dw.reshape(k * k, -1).astype(jnp.float32)         # (k*k, Cin)
        w_full = (w_dw_flat[:, :, None] * w_pw_scaled[None, :, :]).astype(jnp.bfloat16)
        shift = (beta - mean * scale).reshape(1, -1).astype(jnp.float32)
        return w_full, shift

    wfa, shifta = prep(params_a)                     # op_a: Cin -> Cin, stride s
    wfb, shiftb = prep(params_b)                     # op_b: Cin -> Cout, stride 1
    Couta, Cout = wfa.shape[-1], wfb.shape[-1]
    assert Couta == Cin, "op_a of DualSepConv maps C_in -> C_in"

    Hoa, Woa = _conv_out(H, k, s, p, d), _conv_out(W, k, s, p, d)
    Hbo, Wbo = _conv_out(Hoa, k, 1, p, d), _conv_out(Woa, k, 1, p, d)
    if Woa % 8 != 0 or Wbo % 8 != 0:
        # TODO(synk): pad Woa/Wbo up to a multiple of 8 in the scratches/accumulators
        # and slice on the store to support general widths (keeps the (NB,Ho,Wo,C) ->
        # (M,C) collapses layout-free).
        raise NotImplementedError(
            f"output widths must be multiples of 8 (got Woa={Woa}, Wbo={Wbo})")

    # Asymmetric left halo: the scratch interiors start at a multiple-of-8 W offset so
    # the per-step interior writebacks are sublane-aligned dense stores.
    lpad = 0 if p == 0 else 8 * ((p + 7) // 8)
    Hsa, Wsa = H + 2 * p, lpad + W + p               # pad_a scratch
    Hsb, Wsb = Hoa + 2 * p, lpad + Woa + p           # pad_b scratch

    NB = _pick_batch_block(N, min(Hoa * Woa, Hbo * Wbo))
    G = N // NB

    # TODO(synk): for large H*W, tile H into halo'd row bands (sized for both convs) so
    # the per-step scratch fits v7x's 64 MiB VMEM and both its TensorCores get grid
    # points even at batch 1-2.
    itemsize = x.dtype.itemsize
    vmem_est = (4 * NB * Cin * (Hsa * Wsa + Hsb * Wsb)          # f32 scratches
                + 2 * NB * H * W * Cin * itemsize               # double-buffered input
                + 2 * NB * Hbo * Wbo * Cout * itemsize          # double-buffered output
                + 2 * k * k * Cin * (Couta + Cout) + 4 * (Couta + Cout))
    vmem_limit = int(min(max(4 * vmem_est, 16 * 2**20), 48 * 2**20))

    kernel = functools.partial(_dual_sepconv_kernel, k=k, d=d, s=s, p=p, lpad=lpad,
                               hoa=Hoa, woa=Woa, hbo=Hbo, wbo=Wbo)
    out2d = pl.pallas_call(
        kernel,
        out_shape=jax.ShapeDtypeStruct((N * Hbo * Wbo, Cout), x.dtype),
        grid_spec=pltpu.PrefetchScalarGridSpec(
            num_scalar_prefetch=0,
            grid=(G,),
            in_specs=[
                pl.BlockSpec((NB, H, W, Cin), lambda g: (g, 0, 0, 0)),
                pl.BlockSpec((k * k, Cin, Couta), lambda g: (0, 0, 0)),
                pl.BlockSpec((1, Couta), lambda g: (0, 0)),
                pl.BlockSpec((k * k, Cin, Cout), lambda g: (0, 0, 0)),
                pl.BlockSpec((1, Cout), lambda g: (0, 0)),
            ],
            out_specs=pl.BlockSpec((NB * Hbo * Wbo, Cout), lambda g: (g, 0)),
            scratch_shapes=[
                pltpu.VMEM((NB, Hsa, Wsa, Cin), jnp.float32),   # padded ReLU(x)
                pltpu.VMEM((NB, Hsb, Wsb, Cin), jnp.float32),   # padded ReLU(op_a out)
            ],
        ),
        compiler_params=pltpu.CompilerParams(
            dimension_semantics=("parallel",),
            vmem_limit_bytes=vmem_limit),
    )(x, wfa, shifta, wfb, shiftb)

    out = out2d.reshape(N, Hbo, Wbo, Cout)           # metadata-only reshape in HBM
    return jnp.transpose(out, (0, 3, 1, 2))          # NHWC -> NCHW


def init_sepconv_params(key, c_in, c_out, kernel_size):
    """Deterministic synthetic parameters for one SepConv block.

    w_dw corresponds to PyTorch depthwise Conv2d weight (C_in,1,k,k) transposed to
    (k,k,C_in); w_pw corresponds to pointwise Conv2d weight (C_out,C_in,1,1)
    transposed to (C_in,C_out). BN params are over the block's output channels.
    """
    k1, k2, k3, k4 = jax.random.split(key, 4)
    w_dw = 0.1 * jax.random.normal(k1, (kernel_size, kernel_size, c_in), jnp.float32)
    w_pw = 0.1 * jax.random.normal(k2, (c_in, c_out), jnp.float32)
    gamma = 1.0 + 0.05 * jax.random.normal(k3, (c_out,), jnp.float32)
    beta = 0.05 * jax.random.normal(k4, (c_out,), jnp.float32)
    run_mean = jnp.zeros((c_out,), jnp.float32)
    run_var = jnp.ones((c_out,), jnp.float32)
    return (w_dw, w_pw, gamma, beta, run_mean, run_var)


def _sepconv_reference(x_nhwc, params, *, k, s, p, d, eps=1e-5):
    """Pure-JAX (XLA conv) reference for one SepConv block, NHWC, f32."""
    w_dw, w_pw, gamma, beta, mean, var = params
    c = x_nhwc.shape[-1]
    y = jnp.maximum(x_nhwc, 0.0)
    y = jax.lax.conv_general_dilated(
        y, w_dw.reshape(k, k, 1, c),
        window_strides=(s, s), padding=((p, p), (p, p)),
        rhs_dilation=(d, d),
        dimension_numbers=("NHWC", "HWIO", "NHWC"),
        feature_group_count=c)
    y = jnp.einsum("nhwc,co->nhwo", y, w_pw)
    scale = gamma / jnp.sqrt(var + eps)
    return y * scale + (beta - mean * scale)


if __name__ == "__main__":
    key = jax.random.PRNGKey(0)
    kx, ka, kb = jax.random.split(key, 3)

    # small shapes consistent with the module
    N, C_in, C_out, H, W = 2, 8, 16, 16, 16
    kernel_size, stride, padding, dilation = 3, 2, 1, 1

    x = jax.random.normal(kx, (N, C_in, H, W), jnp.float32)   # NCHW like PyTorch

    params_a = init_sepconv_params(ka, C_in, C_in, kernel_size)   # op_a
    params_b = init_sepconv_params(kb, C_in, C_out, kernel_size)  # op_b

    y = dual_sep_conv(x, params_a, params_b, kernel_size=kernel_size,
                      stride=stride, padding=padding, dilation=dilation)
    y = jax.block_until_ready(y)

    Hoa = _conv_out(H, kernel_size, stride, padding, dilation)
    Woa = _conv_out(W, kernel_size, stride, padding, dilation)
    Hbo = _conv_out(Hoa, kernel_size, 1, padding, dilation)
    Wbo = _conv_out(Woa, kernel_size, 1, padding, dilation)
    assert y.shape == (N, C_out, Hbo, Wbo), y.shape

    # numerical check against a pure-JAX / XLA conv reference (inference-mode BN)
    x_nhwc = jnp.transpose(x, (0, 2, 3, 1))
    r = _sepconv_reference(x_nhwc, params_a, k=kernel_size, s=stride,
                           p=padding, d=dilation)
    r = _sepconv_reference(r, params_b, k=kernel_size, s=1,
                           p=padding, d=dilation)
    r = jnp.transpose(r, (0, 3, 1, 2))
    err = float(jnp.max(jnp.abs(y - r)))
    # bf16 MXU operands (f32 accumulation) introduce ~1e-4 rounding vs the f32 reference
    assert err < 3e-3, f"max abs error vs reference = {err}"

    print("KERNEL_OK")
</pallas_src>

<mosaic_0001>
module attributes {stable_mosaic.version = 11 : i64} {
  func.func @_dual_sepconv_kernel(%arg0: i32, %arg1: memref<2x16x16x8xf32, #tpu.memory_space<vmem>>, %arg2: memref<9x8x8xbf16, #tpu.memory_space<vmem>>, %arg3: memref<1x8xf32, #tpu.memory_space<vmem>>, %arg4: memref<9x8x16xbf16, #tpu.memory_space<vmem>>, %arg5: memref<1x16xf32, #tpu.memory_space<vmem>>, %arg6: memref<128x16xf32, #tpu.memory_space<vmem>>, %arg7: memref<2x18x25x8xf32, #tpu.memory_space<vmem>>, %arg8: memref<2x10x17x8xf32, #tpu.memory_space<vmem>>) attributes {dimension_semantics = [#tpu.dimension_semantics<parallel>], iteration_bounds = array<i64: 1>, scalar_prefetch = 0 : i64, scratch_operands = 2 : i64, tpu.core_type = #tpu.core_type<tc>, window_params = [{transform_indices = @transform_0, window_bounds = array<i64: 2, 16, 16, 8>}, {pipeline_mode = #tpu.pipeline_mode<synchronous>, transform_indices = @transform_1, window_bounds = array<i64: 9, 8, 8>}, {pipeline_mode = #tpu.pipeline_mode<synchronous>, transform_indices = @transform_2, window_bounds = array<i64: 1, 8>}, {pipeline_mode = #tpu.pipeline_mode<synchronous>, transform_indices = @transform_3, window_bounds = array<i64: 9, 8, 16>}, {pipeline_mode = #tpu.pipeline_mode<synchronous>, transform_indices = @transform_4, window_bounds = array<i64: 1, 16>}, {transform_indices = @transform_5, window_bounds = array<i64: 128, 16>}]} {
    %cst = arith.constant 0.000000e+00 : f32
    %0 = vector.broadcast %cst : f32 to vector<2x1x25x8xf32>
    %c0 = arith.constant 0 : index
    %c0_0 = arith.constant 0 : index
    %c0_1 = arith.constant 0 : index
    %c0_2 = arith.constant 0 : index
    %1 = vector.load %arg7[%c0, %c0_0, %c0_1, %c0_2] : memref<2x18x25x8xf32, #tpu.memory_space<vmem>>, vector<2x1x25x8xf32>
    tpu.vector_store %arg7[%c0, %c0_0, %c0_1, %c0_2], %0 {strides = array<i32>} : memref<2x18x25x8xf32, #tpu.memory_space<vmem>>, vector<2x1x25x8xf32>,
    %cst_3 = arith.constant 0.000000e+00 : f32
    %2 = vector.broadcast %cst_3 : f32 to vector<2x1x25x8xf32>
    %c0_4 = arith.constant 0 : index
    %c17 = arith.constant 17 : index
    %c0_5 = arith.constant 0 : index
    %c0_6 = arith.constant 0 : index
    %3 = vector.load %arg7[%c0_4, %c17, %c0_5, %c0_6] : memref<2x18x25x8xf32, #tpu.memory_space<vmem>>, vector<2x1x25x8xf32>
    tpu.vector_store %arg7[%c0_4, %c17, %c0_5, %c0_6], %2 {strides = array<i32>} : memref<2x18x25x8xf32, #tpu.memory_space<vmem>>, vector<2x1x25x8xf32>,
    %cst_7 = arith.constant 0.000000e+00 : f32
    %4 = vector.broadcast %cst_7 : f32 to vector<2x18x1x8xf32>
    %c0_8 = arith.constant 0 : index
    %c0_9 = arith.constant 0 : index
    %c24 = arith.constant 24 : index
    %c0_10 = arith.constant 0 : index
    %5 = vector.load %arg7[%c0_8, %c0_9, %c24, %c0_10] : memref<2x18x25x8xf32, #tpu.memory_space<vmem>>, vector<2x18x1x8xf32>
    tpu.vector_store %arg7[%c0_8, %c0_9, %c24, %c0_10], %4 {strides = array<i32>} : memref<2x18x25x8xf32, #tpu.memory_space<vmem>>, vector<2x18x1x8xf32>,
    %cst_11 = arith.constant 0.000000e+00 : f32
    %6 = vector.broadcast %cst_11 : f32 to vector<2x18x8x8xf32>
    %c0_12 = arith.constant 0 : index
    %c0_13 = arith.constant 0 : index
    %c0_14 = arith.constant 0 : index
    %c0_15 = arith.constant 0 : index
    %7 = vector.load %arg7[%c0_12, %c0_13, %c0_14, %c0_15] : memref<2x18x25x8xf32, #tpu.memory_space<vmem>>, vector<2x18x8x8xf32>
    tpu.vector_store %arg7[%c0_12, %c0_13, %c0_14, %c0_15], %6 {strides = array<i32>} : memref<2x18x25x8xf32, #tpu.memory_space<vmem>>, vector<2x18x8x8xf32>,
    %c0_16 = arith.constant 0 : index
    %c0_17 = arith.constant 0 : index
    %c0_18 = arith.constant 0 : index
    %c0_19 = arith.constant 0 : index
    %8 = vector.load %arg1[%c0_16, %c0_17, %c0_18, %c0_19] : memref<2x16x16x8xf32, #tpu.memory_space<vmem>>, vector<2x16x16x8xf32>
    %cst_20 = arith.constant 0.000000e+00 : f32
    %9 = vector.broadcast %cst_20 : f32 to vector<2x16x16x8xf32>
    %10 = arith.maximumf %8, %9 : vector<2x16x16x8xf32>
    %c0_21 = arith.constant 0 : index
    %c1 = arith.constant 1 : index
    %c8 = arith.constant 8 : index
    %c0_22 = arith.constant 0 : index
    %11 = vector.load %arg7[%c0_21, %c1, %c8, %c0_22] : memref<2x18x25x8xf32, #tpu.memory_space<vmem>>, vector<2x16x16x8xf32>
    tpu.vector_store %arg7[%c0_21, %c1, %c8, %c0_22], %10 {strides = array<i32>} : memref<2x18x25x8xf32, #tpu.memory_space<vmem>>, vector<2x16x16x8xf32>,
    %c0_23 = arith.constant 0 : index
    %c0_24 = arith.constant 0 : index
    %c7 = arith.constant 7 : index
    %c0_25 = arith.constant 0 : index
    %12 = tpu.strided_load %arg7[%c0_23, %c0_24, %c7, %c0_25] {strides = array<i32: 1, 2, 2, 1>} : memref<2x18x25x8xf32, #tpu.memory_space<vmem>>, vector<2x8x8x8xf32>
    %13 = vector.shape_cast %12 : vector<2x8x8x8xf32> to vector<128x8xf32>
    %14 = arith.truncf %13 : vector<128x8xf32> to vector<128x8xbf16>
    %c0_26 = arith.constant 0 : index
    %c0_27 = arith.constant 0 : index
    %c0_28 = arith.constant 0 : index
    %15 = vector.load %arg2[%c0_26, %c0_27, %c0_28] : memref<9x8x8xbf16, #tpu.memory_space<vmem>>, vector<1x8x8xbf16>
    %16 = vector.shape_cast %15 : vector<1x8x8xbf16> to vector<8x8xbf16>
    %cst_29 = arith.constant dense<0.000000e+00> : vector<128x8xf32>
    %17 = tpu.matmul %14, %16, %cst_29 {dimension_numbers = #tpu.dot_dimension_numbers<[1], [0], [0], [1], [0, 0, 1, 1], [], []>} : vector<128x8xbf16>, vector<8x8xbf16>, vector<128x8xf32> -> vector<128x8xf32>
    %c0_30 = arith.constant 0 : index
    %c0_31 = arith.constant 0 : index
    %c8_32 = arith.constant 8 : index
    %c0_33 = arith.constant 0 : index
    %18 = tpu.strided_load %arg7[%c0_30, %c0_31, %c8_32, %c0_33] {strides = array<i32: 1, 2, 2, 1>} : memref<2x18x25x8xf32, #tpu.memory_space<vmem>>, vector<2x8x8x8xf32>
    %19 = vector.shape_cast %18 : vector<2x8x8x8xf32> to vector<128x8xf32>
    %20 = arith.truncf %19 : vector<128x8xf32> to vector<128x8xbf16>
    %c1_34 = arith.constant 1 : index
    %c0_35 = arith.constant 0 : index
    %c0_36 = arith.constant 0 : index
    %21 = vector.load %arg2[%c1_34, %c0_35, %c0_36] : memref<9x8x8xbf16, #tpu.memory_space<vmem>>, vector<1x8x8xbf16>
    %22 = vector.shape_cast %21 : vector<1x8x8xbf16> to vector<8x8xbf16>
    %cst_37 = arith.constant dense<0.000000e+00> : vector<128x8xf32>
    %23 = tpu.matmul %20, %22, %cst_37 {dimension_numbers = #tpu.dot_dimension_numbers<[1], [0], [0], [1], [0, 0, 1, 1], [], []>} : vector<128x8xbf16>, vector<8x8xbf16>, vector<128x8xf32> -> vector<128x8xf32>
    %24 = arith.addf %17, %23 : vector<128x8xf32>
    %c0_38 = arith.constant 0 : index
    %c0_39 = arith.constant 0 : index
    %c9 = arith.constant 9 : index
    %c0_40 = arith.constant 0 : index
    %25 = tpu.strided_load %arg7[%c0_38, %c0_39, %c9, %c0_40] {strides = array<i32: 1, 2, 2, 1>} : memref<2x18x25x8xf32, #tpu.memory_space<vmem>>, vector<2x8x8x8xf32>
    %26 = vector.shape_cast %25 : vector<2x8x8x8xf32> to vector<128x8xf32>
    %27 = arith.truncf %26 : vector<128x8xf32> to vector<128x8xbf16>
    %c2 = arith.constant 2 : index
    %c0_41 = arith.constant 0 : index
    %c0_42 = arith.constant 0 : index
    %28 = vector.load %arg2[%c2, %c0_41, %c0_42] : memref<9x8x8xbf16, #tpu.memory_space<vmem>>, vector<1x8x8xbf16>
    %29 = vector.shape_cast %28 : vector<1x8x8xbf16> to vector<8x8xbf16>
    %cst_43 = arith.constant dense<0.000000e+00> : vector<128x8xf32>
    %30 = tpu.matmul %27, %29, %cst_43 {dimension_numbers = #tpu.dot_dimension_numbers<[1], [0], [0], [1], [0, 0, 1, 1], [], []>} : vector<128x8xbf16>, vector<8x8xbf16>, vector<128x8xf32> -> vector<128x8xf32>
    %31 = arith.addf %24, %30 : vector<128x8xf32>
    %c0_44 = arith.constant 0 : index
    %c1_45 = arith.constant 1 : index
    %c7_46 = arith.constant 7 : index
    %c0_47 = arith.constant 0 : index
    %32 = tpu.strided_load %arg7[%c0_44, %c1_45, %c7_46, %c0_47] {strides = array<i32: 1, 2, 2, 1>} : memref<2x18x25x8xf32, #tpu.memory_space<vmem>>, vector<2x8x8x8xf32>
    %33 = vector.shape_cast %32 : vector<2x8x8x8xf32> to vector<128x8xf32>
    %34 = arith.truncf %33 : vector<128x8xf32> to vector<128x8xbf16>
    %c3 = arith.constant 3 : index
    %c0_48 = arith.constant 0 : index
    %c0_49 = arith.constant 0 : index
    %35 = vector.load %arg2[%c3, %c0_48, %c0_49] : memref<9x8x8xbf16, #tpu.memory_space<vmem>>, vector<1x8x8xbf16>
    %36 = vector.shape_cast %35 : vector<1x8x8xbf16> to vector<8x8xbf16>
    %cst_50 = arith.constant dense<0.000000e+00> : vector<128x8xf32>
    %37 = tpu.matmul %34, %36, %cst_50 {dimension_numbers = #tpu.dot_dimension_numbers<[1], [0], [0], [1], [0, 0, 1, 1], [], []>} : vector<128x8xbf16>, vector<8x8xbf16>, vector<128x8xf32> -> vector<128x8xf32>
    %38 = arith.addf %31, %37 : vector<128x8xf32>
    %c0_51 = arith.constant 0 : index
    %c1_52 = arith.constant 1 : index
    %c8_53 = arith.constant 8 : index
    %c0_54 = arith.constant 0 : index
    %39 = tpu.strided_load %arg7[%c0_51, %c1_52, %c8_53, %c0_54] {strides = array<i32: 1, 2, 2, 1>} : memref<2x18x25x8xf32, #tpu.memory_space<vmem>>, vector<2x8x8x8xf32>
    %40 = vector.shape_cast %39 : vector<2x8x8x8xf32> to vector<128x8xf32>
    %41 = arith.truncf %40 : vector<128x8xf32> to vector<128x8xbf16>
    %c4 = arith.constant 4 : index
    %c0_55 = arith.constant 0 : index
    %c0_56 = arith.constant 0 : index
    %42 = vector.load %arg2[%c4, %c0_55, %c0_56] : memref<9x8x8xbf16, #tpu.memory_space<vmem>>, vector<1x8x8xbf16>
    %43 = vector.shape_cast %42 : vector<1x8x8xbf16> to vector<8x8xbf16>
    %cst_57 = arith.constant dense<0.000000e+00> : vector<128x8xf32>
    %44 = tpu.matmul %41, %43, %cst_57 {dimension_numbers = #tpu.dot_dimension_numbers<[1], [0], [0], [1], [0, 0, 1, 1], [], []>} : vector<128x8xbf16>, vector<8x8xbf16>, vector<128x8xf32> -> vector<128x8xf32>
    %45 = arith.addf %38, %44 : vector<128x8xf32>
    %c0_58 = arith.constant 0 : index
    %c1_59 = arith.constant 1 : index
    %c9_60 = arith.constant 9 : index
    %c0_61 = arith.constant 0 : index
    %46 = tpu.strided_load %arg7[%c0_58, %c1_59, %c9_60, %c0_61] {strides = array<i32: 1, 2, 2, 1>} : memref<2x18x25x8xf32, #tpu.memory_space<vmem>>, vector<2x8x8x8xf32>
    %47 = vector.shape_cast %46 : vector<2x8x8x8xf32> to vector<128x8xf32>
    %48 = arith.truncf %47 : vector<128x8xf32> to vector<128x8xbf16>
    %c5 = arith.constant 5 : index
    %c0_62 = arith.constant 0 : index
    %c0_63 = arith.constant 0 : index
    %49 = vector.load %arg2[%c5, %c0_62, %c0_63] : memref<9x8x8xbf16, #tpu.memory_space<vmem>>, vector<1x8x8xbf16>
    %50 = vector.shape_cast %49 : vector<1x8x8xbf16> to vector<8x8xbf16>
    %cst_64 = arith.constant dense<0.000000e+00> : vector<128x8xf32>
    %51 = tpu.matmul %48, %50, %cst_64 {dimension_numbers = #tpu.dot_dimension_numbers<[1], [0], [0], [1], [0, 0, 1, 1], [], []>} : vector<128x8xbf16>, vector<8x8xbf16>, vector<128x8xf32> -> vector<128x8xf32>
    %52 = arith.addf %45, %51 : vector<128x8xf32>
    %c0_65 = arith.constant 0 : index
    %c2_66 = arith.constant 2 : index
    %c7_67 = arith.constant 7 : index
    %c0_68 = arith.constant 0 : index
    %53 = tpu.strided_load %arg7[%c0_65, %c2_66, %c7_67, %c0_68] {strides = array<i32: 1, 2, 2, 1>} : memref<2x18x25x8xf32, #tpu.memory_space<vmem>>, vector<2x8x8x8xf32>
    %54 = vector.shape_cast %53 : vector<2x8x8x8xf32> to vector<128x8xf32>
    %55 = arith.truncf %54 : vector<128x8xf32> to vector<128x8xbf16>
    %c6 = arith.constant 6 : index
    %c0_69 = arith.constant 0 : index
    %c0_70 = arith.constant 0 : index
    %56 = vector.load %arg2[%c6, %c0_69, %c0_70] : memref<9x8x8xbf16, #tpu.memory_space<vmem>>, vector<1x8x8xbf16>
    %57 = vector.shape_cast %56 : vector<1x8x8xbf16> to vector<8x8xbf16>
    %cst_71 = arith.constant dense<0.000000e+00> : vector<128x8xf32>
    %58 = tpu.matmul %55, %57, %cst_71 {dimension_numbers = #tpu.dot_dimension_numbers<[1], [0], [0], [1], [0, 0, 1, 1], [], []>} : vector<128x8xbf16>, vector<8x8xbf16>, vector<128x8xf32> -> vector<128x8xf32>
    %59 = arith.addf %52, %58 : vector<128x8xf32>
    %c0_72 = arith.constant 0 : index
    %c2_73 = arith.constant 2 : index
    %c8_74 = arith.constant 8 : index
    %c0_75 = arith.constant 0 : index
    %60 = tpu.strided_load %arg7[%c0_72, %c2_73, %c8_74, %c0_75] {strides = array<i32: 1, 2, 2, 1>} : memref<2x18x25x8xf32, #tpu.memory_space<vmem>>, vector<2x8x8x8xf32>
    %61 = vector.shape_cast %60 : vector<2x8x8x8xf32> to vector<128x8xf32>
    %62 = arith.truncf %61 : vector<128x8xf32> to vector<128x8xbf16>
    %c7_76 = arith.constant 7 : index
    %c0_77 = arith.constant 0 : index
    %c0_78 = arith.constant 0 : index
    %63 = vector.load %arg2[%c7_76, %c0_77, %c0_78] : memref<9x8x8xbf16, #tpu.memory_space<vmem>>, vector<1x8x8xbf16>
    %64 = vector.shape_cast %63 : vector<1x8x8xbf16> to vector<8x8xbf16>
    %cst_79 = arith.constant dense<0.000000e+00> : vector<128x8xf32>
    %65 = tpu.matmul %62, %64, %cst_79 {dimension_numbers = #tpu.dot_dimension_numbers<[1], [0], [0], [1], [0, 0, 1, 1], [], []>} : vector<128x8xbf16>, vector<8x8xbf16>, vector<128x8xf32> -> vector<128x8xf32>
    %66 = arith.addf %59, %65 : vector<128x8xf32>
    %c0_80 = arith.constant 0 : index
    %c2_81 = arith.constant 2 : index
    %c9_82 = arith.constant 9 : index
    %c0_83 = arith.constant 0 : index
    %67 = tpu.strided_load %arg7[%c0_80, %c2_81, %c9_82, %c0_83] {strides = array<i32: 1, 2, 2, 1>} : memref<2x18x25x8xf32, #tpu.memory_space<vmem>>, vector<2x8x8x8xf32>
    %68 = vector.shape_cast %67 : vector<2x8x8x8xf32> to vector<128x8xf32>
    %69 = arith.truncf %68 : vector<128x8xf32> to vector<128x8xbf16>
    %c8_84 = arith.constant 8 : index
    %c0_85 = arith.constant 0 : index
    %c0_86 = arith.constant 0 : index
    %70 = vector.load %arg2[%c8_84, %c0_85, %c0_86] : memref<9x8x8xbf16, #tpu.memory_space<vmem>>, vector<1x8x8xbf16>
    %71 = vector.shape_cast %70 : vector<1x8x8xbf16> to vector<8x8xbf16>
    %cst_87 = arith.constant dense<0.000000e+00> : vector<128x8xf32>
    %72 = tpu.matmul %69, %71, %cst_87 {dimension_numbers = #tpu.dot_dimension_numbers<[1], [0], [0], [1], [0, 0, 1, 1], [], []>} : vector<128x8xbf16>, vector<8x8xbf16>, vector<128x8xf32> -> vector<128x8xf32>
    %73 = arith.addf %66, %72 : vector<128x8xf32>
    %c0_88 = arith.constant 0 : index
    %c0_89 = arith.constant 0 : index
    %74 = vector.load %arg3[%c0_88, %c0_89] : memref<1x8xf32, #tpu.memory_space<vmem>>, vector<1x8xf32>
    %75 = vector.shape_cast %74 : vector<1x8xf32> to vector<8xf32>
    %76 = vector.shape_cast %75 : vector<8xf32> to vector<1x8xf32>
    %77 = vector.broadcast %76 : vector<1x8xf32> to vector<128x8xf32>
    %78 = arith.addf %73, %77 : vector<128x8xf32>
    %cst_90 = arith.constant 0.000000e+00 : f32
    %79 = vector.broadcast %cst_90 : f32 to vector<2x1x17x8xf32>
    %c0_91 = arith.constant 0 : index
    %c0_92 = arith.constant 0 : index
    %c0_93 = arith.constant 0 : index
    %c0_94 = arith.constant 0 : index
    %80 = vector.load %arg8[%c0_91, %c0_92, %c0_93, %c0_94] : memref<2x10x17x8xf32, #tpu.memory_space<vmem>>, vector<2x1x17x8xf32>
    tpu.vector_store %arg8[%c0_91, %c0_92, %c0_93, %c0_94], %79 {strides = array<i32>} : memref<2x10x17x8xf32, #tpu.memory_space<vmem>>, vector<2x1x17x8xf32>,
    %cst_95 = arith.constant 0.000000e+00 : f32
    %81 = vector.broadcast %cst_95 : f32 to vector<2x1x17x8xf32>
    %c0_96 = arith.constant 0 : index
    %c9_97 = arith.constant 9 : index
    %c0_98 = arith.constant 0 : index
    %c0_99 = arith.constant 0 : index
    %82 = vector.load %arg8[%c0_96, %c9_97, %c0_98, %c0_99] : memref<2x10x17x8xf32, #tpu.memory_space<vmem>>, vector<2x1x17x8xf32>
    tpu.vector_store %arg8[%c0_96, %c9_97, %c0_98, %c0_99], %81 {strides = array<i32>} : memref<2x10x17x8xf32, #tpu.memory_space<vmem>>, vector<2x1x17x8xf32>,
    %cst_100 = arith.constant 0.000000e+00 : f32
    %83 = vector.broadcast %cst_100 : f32 to vector<2x10x1x8xf32>
    %c0_101 = arith.constant 0 : index
    %c0_102 = arith.constant 0 : index
    %c16 = arith.constant 16 : index
    %c0_103 = arith.constant 0 : index
    %84 = vector.load %arg8[%c0_101, %c0_102, %c16, %c0_103] : memref<2x10x17x8xf32, #tpu.memory_space<vmem>>, vector<2x10x1x8xf32>
    tpu.vector_store %arg8[%c0_101, %c0_102, %c16, %c0_103], %83 {strides = array<i32>} : memref<2x10x17x8xf32, #tpu.memory_space<vmem>>, vector<2x10x1x8xf32>,
    %cst_104 = arith.constant 0.000000e+00 : f32
    %85 = vector.broadcast %cst_104 : f32 to vector<2x10x8x8xf32>
    %c0_105 = arith.constant 0 : index
    %c0_106 = arith.constant 0 : index
    %c0_107 = arith.constant 0 : index
    %c0_108 = arith.constant 0 : index
    %86 = vector.load %arg8[%c0_105, %c0_106, %c0_107, %c0_108] : memref<2x10x17x8xf32, #tpu.memory_space<vmem>>, vector<2x10x8x8xf32>
    tpu.vector_store %arg8[%c0_105, %c0_106, %c0_107, %c0_108], %85 {strides = array<i32>} : memref<2x10x17x8xf32, #tpu.memory_space<vmem>>, vector<2x10x8x8xf32>,
    %cst_109 = arith.constant 0.000000e+00 : f32
    %87 = vector.broadcast %cst_109 : f32 to vector<128x8xf32>
    %88 = arith.maximumf %78, %87 : vector<128x8xf32>
    %89 = vector.shape_cast %88 : vector<128x8xf32> to vector<2x8x8x8xf32>
    %c0_110 = arith.constant 0 : index
    %c1_111 = arith.constant 1 : index
    %c8_112 = arith.constant 8 : index
    %c0_113 = arith.constant 0 : index
    %90 = vector.load %arg8[%c0_110, %c1_111, %c8_112, %c0_113] : memref<2x10x17x8xf32, #tpu.memory_space<vmem>>, vector<2x8x8x8xf32>
    tpu.vector_store %arg8[%c0_110, %c1_111, %c8_112, %c0_113], %89 {strides = array<i32>} : memref<2x10x17x8xf32, #tpu.memory_space<vmem>>, vector<2x8x8x8xf32>,
    %c0_114 = arith.constant 0 : index
    %c0_115 = arith.constant 0 : index
    %c7_116 = arith.constant 7 : index
    %c0_117 = arith.constant 0 : index
    %91 = vector.load %arg8[%c0_114, %c0_115, %c7_116, %c0_117] : memref<2x10x17x8xf32, #tpu.memory_space<vmem>>, vector<2x8x8x8xf32>
    %92 = vector.shape_cast %91 : vector<2x8x8x8xf32> to vector<128x8xf32>
    %93 = arith.truncf %92 : vector<128x8xf32> to vector<128x8xbf16>
    %c0_118 = arith.constant 0 : index
    %c0_119 = arith.constant 0 : index
    %c0_120 = arith.constant 0 : index
    %94 = vector.load %arg4[%c0_118, %c0_119, %c0_120] : memref<9x8x16xbf16, #tpu.memory_space<vmem>>, vector<1x8x16xbf16>
    %95 = vector.shape_cast %94 : vector<1x8x16xbf16> to vector<8x16xbf16>
    %cst_121 = arith.constant dense<0.000000e+00> : vector<128x16xf32>
    %96 = tpu.matmul %93, %95, %cst_121 {dimension_numbers = #tpu.dot_dimension_numbers<[1], [0], [0], [1], [0, 0, 1, 1], [], []>} : vector<128x8xbf16>, vector<8x16xbf16>, vector<128x16xf32> -> vector<128x16xf32>
    %c0_122 = arith.constant 0 : index
    %c0_123 = arith.constant 0 : index
    %c8_124 = arith.constant 8 : index
    %c0_125 = arith.constant 0 : index
    %97 = vector.load %arg8[%c0_122, %c0_123, %c8_124, %c0_125] : memref<2x10x17x8xf32, #tpu.memory_space<vmem>>, vector<2x8x8x8xf32>
    %98 = vector.shape_cast %97 : vector<2x8x8x8xf32> to vector<128x8xf32>
    %99 = arith.truncf %98 : vector<128x8xf32> to vector<128x8xbf16>
    %c1_126 = arith.constant 1 : index
    %c0_127 = arith.constant 0 : index
    %c0_128 = arith.constant 0 : index
    %100 = vector.load %arg4[%c1_126, %c0_127, %c0_128] : memref<9x8x16xbf16, #tpu.memory_space<vmem>>, vector<1x8x16xbf16>
    %101 = vector.shape_cast %100 : vector<1x8x16xbf16> to vector<8x16xbf16>
    %cst_129 = arith.constant dense<0.000000e+00> : vector<128x16xf32>
    %102 = tpu.matmul %99, %101, %cst_129 {dimension_numbers = #tpu.dot_dimension_numbers<[1], [0], [0], [1], [0, 0, 1, 1], [], []>} : vector<128x8xbf16>, vector<8x16xbf16>, vector<128x16xf32> -> vector<128x16xf32>
    %103 = arith.addf %96, %102 : vector<128x16xf32>
    %c0_130 = arith.constant 0 : index
    %c0_131 = arith.constant 0 : index
    %c9_132 = arith.constant 9 : index
    %c0_133 = arith.constant 0 : index
    %104 = vector.load %arg8[%c0_130, %c0_131, %c9_132, %c0_133] : memref<2x10x17x8xf32, #tpu.memory_space<vmem>>, vector<2x8x8x8xf32>
    %105 = vector.shape_cast %104 : vector<2x8x8x8xf32> to vector<128x8xf32>
    %106 = arith.truncf %105 : vector<128x8xf32> to vector<128x8xbf16>
    %c2_134 = arith.constant 2 : index
    %c0_135 = arith.constant 0 : index
    %c0_136 = arith.constant 0 : index
    %107 = vector.load %arg4[%c2_134, %c0_135, %c0_136] : memref<9x8x16xbf16, #tpu.memory_space<vmem>>, vector<1x8x16xbf16>
    %108 = vector.shape_cast %107 : vector<1x8x16xbf16> to vector<8x16xbf16>
    %cst_137 = arith.constant dense<0.000000e+00> : vector<128x16xf32>
    %109 = tpu.matmul %106, %108, %cst_137 {dimension_numbers = #tpu.dot_dimension_numbers<[1], [0], [0], [1], [0, 0, 1, 1], [], []>} : vector<128x8xbf16>, vector<8x16xbf16>, vector<128x16xf32> -> vector<128x16xf32>
    %110 = arith.addf %103, %109 : vector<128x16xf32>
    %c0_138 = arith.constant 0 : index
    %c1_139 = arith.constant 1 : index
    %c7_140 = arith.constant 7 : index
    %c0_141 = arith.constant 0 : index
    %111 = vector.load %arg8[%c0_138, %c1_139, %c7_140, %c0_141] : memref<2x10x17x8xf32, #tpu.memory_space<vmem>>, vector<2x8x8x8xf32>
    %112 = vector.shape_cast %111 : vector<2x8x8x8xf32> to vector<128x8xf32>
    %113 = arith.truncf %112 : vector<128x8xf32> to vector<128x8xbf16>
    %c3_142 = arith.constant 3 : index
    %c0_143 = arith.constant 0 : index
    %c0_144 = arith.constant 0 : index
    %114 = vector.load %arg4[%c3_142, %c0_143, %c0_144] : memref<9x8x16xbf16, #tpu.memory_space<vmem>>, vector<1x8x16xbf16>
    %115 = vector.shape_cast %114 : vector<1x8x16xbf16> to vector<8x16xbf16>
    %cst_145 = arith.constant dense<0.000000e+00> : vector<128x16xf32>
    %116 = tpu.matmul %113, %115, %cst_145 {dimension_numbers = #tpu.dot_dimension_numbers<[1], [0], [0], [1], [0, 0, 1, 1], [], []>} : vector<128x8xbf16>, vector<8x16xbf16>, vector<128x16xf32> -> vector<128x16xf32>
    %117 = arith.addf %110, %116 : vector<128x16xf32>
    %c0_146 = arith.constant 0 : index
    %c1_147 = arith.constant 1 : index
    %c8_148 = arith.constant 8 : index
    %c0_149 = arith.constant 0 : index
    %118 = vector.load %arg8[%c0_146, %c1_147, %c8_148, %c0_149] : memref<2x10x17x8xf32, #tpu.memory_space<vmem>>, vector<2x8x8x8xf32>
    %119 = vector.shape_cast %118 : vector<2x8x8x8xf32> to vector<128x8xf32>
    %120 = arith.truncf %119 : vector<128x8xf32> to vector<128x8xbf16>
    %c4_150 = arith.constant 4 : index
    %c0_151 = arith.constant 0 : index
    %c0_152 = arith.constant 0 : index
    %121 = vector.load %arg4[%c4_150, %c0_151, %c0_152] : memref<9x8x16xbf16, #tpu.memory_space<vmem>>, vector<1x8x16xbf16>
    %122 = vector.shape_cast %121 : vector<1x8x16xbf16> to vector<8x16xbf16>
    %cst_153 = arith.constant dense<0.000000e+00> : vector<128x16xf32>
    %123 = tpu.matmul %120, %122, %cst_153 {dimension_numbers = #tpu.dot_dimension_numbers<[1], [0], [0], [1], [0, 0, 1, 1], [], []>} : vector<128x8xbf16>, vector<8x16xbf16>, vector<128x16xf32> -> vector<128x16xf32>
    %124 = arith.addf %117, %123 : vector<128x16xf32>
    %c0_154 = arith.constant 0 : index
    %c1_155 = arith.constant 1 : index
    %c9_156 = arith.constant 9 : index
    %c0_157 = arith.constant 0 : index
    %125 = vector.load %arg8[%c0_154, %c1_155, %c9_156, %c0_157] : memref<2x10x17x8xf32, #tpu.memory_space<vmem>>, vector<2x8x8x8xf32>
    %126 = vector.shape_cast %125 : vector<2x8x8x8xf32> to vector<128x8xf32>
    %127 = arith.truncf %126 : vector<128x8xf32> to vector<128x8xbf16>
    %c5_158 = arith.constant 5 : index
    %c0_159 = arith.constant 0 : index
    %c0_160 = arith.constant 0 : index
    %128 = vector.load %arg4[%c5_158, %c0_159, %c0_160] : memref<9x8x16xbf16, #tpu.memory_space<vmem>>, vector<1x8x16xbf16>
    %129 = vector.shape_cast %128 : vector<1x8x16xbf16> to vector<8x16xbf16>
    %cst_161 = arith.constant dense<0.000000e+00> : vector<128x16xf32>
    %130 = tpu.matmul %127, %129, %cst_161 {dimension_numbers = #tpu.dot_dimension_numbers<[1], [0], [0], [1], [0, 0, 1, 1], [], []>} : vector<128x8xbf16>, vector<8x16xbf16>, vector<128x16xf32> -> vector<128x16xf32>
    %131 = arith.addf %124, %130 : vector<128x16xf32>
    %c0_162 = arith.constant 0 : index
    %c2_163 = arith.constant 2 : index
    %c7_164 = arith.constant 7 : index
    %c0_165 = arith.constant 0 : index
    %132 = vector.load %arg8[%c0_162, %c2_163, %c7_164, %c0_165] : memref<2x10x17x8xf32, #tpu.memory_space<vmem>>, vector<2x8x8x8xf32>
    %133 = vector.shape_cast %132 : vector<2x8x8x8xf32> to vector<128x8xf32>
    %134 = arith.truncf %133 : vector<128x8xf32> to vector<128x8xbf16>
    %c6_166 = arith.constant 6 : index
    %c0_167 = arith.constant 0 : index
    %c0_168 = arith.constant 0 : index
    %135 = vector.load %arg4[%c6_166, %c0_167, %c0_168] : memref<9x8x16xbf16, #tpu.memory_space<vmem>>, vector<1x8x16xbf16>
    %136 = vector.shape_cast %135 : vector<1x8x16xbf16> to vector<8x16xbf16>
    %cst_169 = arith.constant dense<0.000000e+00> : vector<128x16xf32>
    %137 = tpu.matmul %134, %136, %cst_169 {dimension_numbers = #tpu.dot_dimension_numbers<[1], [0], [0], [1], [0, 0, 1, 1], [], []>} : vector<128x8xbf16>, vector<8x16xbf16>, vector<128x16xf32> -> vector<128x16xf32>
    %138 = arith.addf %131, %137 : vector<128x16xf32>
    %c0_170 = arith.constant 0 : index
    %c2_171 = arith.constant 2 : index
    %c8_172 = arith.constant 8 : index
    %c0_173 = arith.constant 0 : index
    %139 = vector.load %arg8[%c0_170, %c2_171, %c8_172, %c0_173] : memref<2x10x17x8xf32, #tpu.memory_space<vmem>>, vector<2x8x8x8xf32>
    %140 = vector.shape_cast %139 : vector<2x8x8x8xf32> to vector<128x8xf32>
    %141 = arith.truncf %140 : vector<128x8xf32> to vector<128x8xbf16>
    %c7_174 = arith.constant 7 : index
    %c0_175 = arith.constant 0 : index
    %c0_176 = arith.constant 0 : index
    %142 = vector.load %arg4[%c7_174, %c0_175, %c0_176] : memref<9x8x16xbf16, #tpu.memory_space<vmem>>, vector<1x8x16xbf16>
    %143 = vector.shape_cast %142 : vector<1x8x16xbf16> to vector<8x16xbf16>
    %cst_177 = arith.constant dense<0.000000e+00> : vector<128x16xf32>
    %144 = tpu.matmul %141, %143, %cst_177 {dimension_numbers = #tpu.dot_dimension_numbers<[1], [0], [0], [1], [0, 0, 1, 1], [], []>} : vector<128x8xbf16>, vector<8x16xbf16>, vector<128x16xf32> -> vector<128x16xf32>
    %145 = arith.addf %138, %144 : vector<128x16xf32>
    %c0_178 = arith.constant 0 : index
    %c2_179 = arith.constant 2 : index
    %c9_180 = arith.constant 9 : index
    %c0_181 = arith.constant 0 : index
    %146 = vector.load %arg8[%c0_178, %c2_179, %c9_180, %c0_181] : memref<2x10x17x8xf32, #tpu.memory_space<vmem>>, vector<2x8x8x8xf32>
    %147 = vector.shape_cast %146 : vector<2x8x8x8xf32> to vector<128x8xf32>
    %148 = arith.truncf %147 : vector<128x8xf32> to vector<128x8xbf16>
    %c8_182 = arith.constant 8 : index
    %c0_183 = arith.constant 0 : index
    %c0_184 = arith.constant 0 : index
    %149 = vector.load %arg4[%c8_182, %c0_183, %c0_184] : memref<9x8x16xbf16, #tpu.memory_space<vmem>>, vector<1x8x16xbf16>
    %150 = vector.shape_cast %149 : vector<1x8x16xbf16> to vector<8x16xbf16>
    %cst_185 = arith.constant dense<0.000000e+00> : vector<128x16xf32>
    %151 = tpu.matmul %148, %150, %cst_185 {dimension_numbers = #tpu.dot_dimension_numbers<[1], [0], [0], [1], [0, 0, 1, 1], [], []>} : vector<128x8xbf16>, vector<8x16xbf16>, vector<128x16xf32> -> vector<128x16xf32>
    %152 = arith.addf %145, %151 : vector<128x16xf32>
    %c0_186 = arith.constant 0 : index
    %c0_187 = arith.constant 0 : index
    %153 = vector.load %arg5[%c0_186, %c0_187] : memref<1x16xf32, #tpu.memory_space<vmem>>, vector<1x16xf32>
    %154 = vector.shape_cast %153 : vector<1x16xf32> to vector<16xf32>
    %155 = vector.shape_cast %154 : vector<16xf32> to vector<1x16xf32>
    %156 = vector.broadcast %155 : vector<1x16xf32> to vector<128x16xf32>
    %157 = arith.addf %152, %156 : vector<128x16xf32>
    %c0_188 = arith.constant 0 : index
    %c0_189 = arith.constant 0 : index
    %158 = vector.load %arg6[%c0_188, %c0_189] : memref<128x16xf32, #tpu.memory_space<vmem>>, vector<128x16xf32>
    tpu.vector_store %arg6[%c0_188, %c0_189], %157 {strides = array<i32>} : memref<128x16xf32, #tpu.memory_space<vmem>>, vector<128x16xf32>,
    return
  }
  func.func @transform_0(%arg0: i32) -> (i32, i32, i32, i32) {
    %c0_i32 = arith.constant 0 : i32
    %c0_i32_0 = arith.constant 0 : i32
    %c0_i32_1 = arith.constant 0 : i32
    %c0_i32_2 = arith.constant 0 : i32
    return %arg0, %c0_i32, %c0_i32_0, %c0_i32_1 : i32, i32, i32, i32
  }
  func.func @transform_1(%arg0: i32) -> (i32, i32, i32) {
    %c0_i32 = arith.constant 0 : i32
    %c0_i32_0 = arith.constant 0 : i32
    %c0_i32_1 = arith.constant 0 : i32
    %c0_i32_2 = arith.constant 0 : i32
    return %c0_i32, %c0_i32_0, %c0_i32_1 : i32, i32, i32
  }
  func.func @transform_2(%arg0: i32) -> (i32, i32) {
    %c0_i32 = arith.constant 0 : i32
    %c0_i32_0 = arith.constant 0 : i32
    %c0_i32_1 = arith.constant 0 : i32
    return %c0_i32, %c0_i32_0 : i32, i32
  }
  func.func @transform_3(%arg0: i32) -> (i32, i32, i32) {
    %c0_i32 = arith.constant 0 : i32
    %c0_i32_0 = arith.constant 0 : i32
    %c0_i32_1 = arith.constant 0 : i32
    %c0_i32_2 = arith.constant 0 : i32
    return %c0_i32, %c0_i32_0, %c0_i32_1 : i32, i32, i32
  }
  func.func @transform_4(%arg0: i32) -> (i32, i32) {
    %c0_i32 = arith.constant 0 : i32
    %c0_i32_0 = arith.constant 0 : i32
    %c0_i32_1 = arith.constant 0 : i32
    return %c0_i32, %c0_i32_0 : i32, i32
  }
  func.func @transform_5(%arg0: i32) -> (i32, i32) {
    %c0_i32 = arith.constant 0 : i32
    %c0_i32_0 = arith.constant 0 : i32
    return %arg0, %c0_i32 : i32, i32
  }
}

</mosaic_0001>

<llo_original>
// kernel: tpu_custom_call.1
$region0: #{tpu_custom_call.1}
  #allocation0 [shape = 'u32[]', space=smem, size = 0x4, offset = 0x4, fixed_abs, tag = 'smem constant byte address 0x4 - core index']
  #allocation1 [shape = 'u32[144,128]{1,0:T(1,128)}', space=vmem, size = 0x12000, scoped, tag = 'internal scratch']
  #allocation2 [shape = 'f32[2,18,25,8]{3,2,1,0:T(8,128)}', space=vmem, size = 0x90000, scoped, tag = 'scratch operand']
  #allocation3 [shape = 'f32[2,10,17,8]{3,2,1,0:T(8,128)}', space=vmem, size = 0x3c000, scoped, tag = 'scratch operand']
  %s0 = inlined_call_operand.vmem [shape: f32[2,16,16,8], index: 0, kind: input, shape index: {}]
  %s1 = inlined_call_operand.vmem [shape: bf16[9,8,8], index: 1, kind: input, shape index: {}]
  %s2 = inlined_call_operand.vmem [shape: f32[1,8], index: 2, kind: input, shape index: {}]
  %s3 = inlined_call_operand.vmem [shape: bf16[9,8,16], index: 3, kind: input, shape index: {}]
  %s4 = inlined_call_operand.vmem [shape: f32[1,16], index: 4, kind: input, shape index: {}]
  %s5 = inlined_call_operand.vmem [shape: f32[128,16], index: 5, kind: output, shape index: {}]
  %s6 = sld [smem:[#allocation0]]
  $region30: #{tpu_custom_call.1} parent=0
    _
  %s8 = ssub.s32 1, %s6
  %s9 = scalar_select 0, %s8, %s6
  // Predicated region
  $region2: #{tpu_custom_call.1} parent=0 // pred_check
    _
  $region3: #{tpu_custom_call.1} parent=0 // pred_check_branch
    %11 = sbr.rel (0) target = $region5
  $region4: #{tpu_custom_call.1} parent=0 // pred_region
    _
  $region5: #{tpu_custom_call.1} parent=0 // pred_fallthru
    _
  // Predicated region
  $region6: #{tpu_custom_call.1} parent=0 // pred_check
    _
  $region7: #{tpu_custom_call.1} parent=0 // pred_check_branch
    %13 = sbr.rel (0) target = $region9
  $region8: #{tpu_custom_call.1} parent=0 // pred_region
    _
  $region9: #{tpu_custom_call.1} parent=0 // pred_fallthru
    _
  // Predicated region
  $region10: #{tpu_custom_call.1} parent=0 // pred_check
    _
  $region11: #{tpu_custom_call.1} parent=0 // pred_check_branch
    %15 = sbr.rel (0) target = $region13
  $region12: #{tpu_custom_call.1} parent=0 // pred_region
    _
  $region13: #{tpu_custom_call.1} parent=0 // pred_fallthru
    _
  // Predicated region
  $region14: #{tpu_custom_call.1} parent=0 // pred_check
    _
  $region15: #{tpu_custom_call.1} parent=0 // pred_check_branch
    %17 = sbr.rel (0) target = $region17
  $region16: #{tpu_custom_call.1} parent=0 // pred_region
    _
  $region17: #{tpu_custom_call.1} parent=0 // pred_fallthru
    _
  // Predicated region
  $region18: #{tpu_custom_call.1} parent=0 // pred_check
    _
  $region19: #{tpu_custom_call.1} parent=0 // pred_check_branch
    %19 = sbr.rel (0) target = $region21
  $region20: #{tpu_custom_call.1} parent=0 // pred_region
    _
  $region21: #{tpu_custom_call.1} parent=0 // pred_fallthru
    _
  %vm21 = vcmask 64512
  %22 = vst.msk [vmem:[#allocation2] sm:$0xff] %vm21, 0.0
  %23 = vst.msk [vmem:[#allocation2 + $0x8] sm:$0xff] %vm21, 0.0
  %24 = vst.msk [vmem:[#allocation2 + $0x10] sm:$0xff] %vm21, 0.0
  %vm25 = vcmask 57344
  %26 = vst.msk [vmem:[#allocation2 + $0x18] sm:$0x1] %vm25, 0.0
  %27 = vst.msk [vmem:[#allocation2 + $0x240] sm:$0xff] %vm21, 0.0
  %28 = vst.msk [vmem:[#allocation2 + $0x248] sm:$0xff] %vm21, 0.0
  %29 = vst.msk [vmem:[#allocation2 + $0x250] sm:$0xff] %vm21, 0.0
  %30 = vst.msk [vmem:[#allocation2 + $0x258] sm:$0x1] %vm25, 0.0
  %s31 = scalar_lea.vmem [#allocation2], 544
  %32 = vst.msk [vmem:[%s31] sm:$0xff] %vm21, 0.0
  %33 = vst.msk [vmem:[%s31 + $0x8] sm:$0xff] %vm21, 0.0
  %34 = vst.msk [vmem:[%s31 + $0x10] sm:$0xff] %vm21, 0.0
  %35 = vst.msk [vmem:[%s31 + $0x18] sm:$0x1] %vm25, 0.0
  %36 = vst.msk [vmem:[%s31 + $0x240] sm:$0xff] %vm21, 0.0
  %37 = vst.msk [vmem:[%s31 + $0x248] sm:$0xff] %vm21, 0.0
  %38 = vst.msk [vmem:[%s31 + $0x250] sm:$0xff] %vm21, 0.0
  %39 = vst.msk [vmem:[%s31 + $0x258] sm:$0x1] %vm25, 0.0
  %40 = vst.msk [vmem:[#allocation2 + $0x18] sm:$0x1] %vm25, 0.0
  %41 = vst.msk [vmem:[#allocation2 + $0x38] sm:$0x1] %vm25, 0.0
  %42 = vst.msk [vmem:[#allocation2 + $0x58] sm:$0x1] %vm25, 0.0
  %43 = vst.msk [vmem:[#allocation2 + $0x78] sm:$0x1] %vm25, 0.0
  %44 = vst.msk [vmem:[#allocation2 + $0x98] sm:$0x1] %vm25, 0.0
  %45 = vst.msk [vmem:[#allocation2 + $0xb8] sm:$0x1] %vm25, 0.0
  %46 = vst.msk [vmem:[#allocation2 + $0xd8] sm:$0x1] %vm25, 0.0
  %47 = vst.msk [vmem:[#allocation2 + $0xf8] sm:$0x1] %vm25, 0.0
  %48 = vst.msk [vmem:[#allocation2 + $0x118] sm:$0x1] %vm25, 0.0
  %49 = vst.msk [vmem:[#allocation2 + $0x138] sm:$0x1] %vm25, 0.0
  %50 = vst.msk [vmem:[#allocation2 + $0x158] sm:$0x1] %vm25, 0.0
  %51 = vst.msk [vmem:[#allocation2 + $0x178] sm:$0x1] %vm25, 0.0
  %52 = vst.msk [vmem:[#allocation2 + $0x198] sm:$0x1] %vm25, 0.0
  %53 = vst.msk [vmem:[#allocation2 + $0x1b8] sm:$0x1] %vm25, 0.0
  %54 = vst.msk [vmem:[#allocation2 + $0x1d8] sm:$0x1] %vm25, 0.0
  %55 = vst.msk [vmem:[#allocation2 + $0x1f8] sm:$0x1] %vm25, 0.0
  %56 = vst.msk [vmem:[#allocation2 + $0x218] sm:$0x1] %vm25, 0.0
  %57 = vst.msk [vmem:[#allocation2 + $0x238] sm:$0x1] %vm25, 0.0
  %58 = vst.msk [vmem:[#allocation2 + $0x258] sm:$0x1] %vm25, 0.0
  %59 = vst.msk [vmem:[#allocation2 + $0x278] sm:$0x1] %vm25, 0.0
  %60 = vst.msk [vmem:[#allocation2 + $0x298] sm:$0x1] %vm25, 0.0
  %61 = vst.msk [vmem:[#allocation2 + $0x2b8] sm:$0x1] %vm25, 0.0
  %62 = vst.msk [vmem:[#allocation2 + $0x2d8] sm:$0x1] %vm25, 0.0
  %63 = vst.msk [vmem:[#allocation2 + $0x2f8] sm:$0x1] %vm25, 0.0
  %64 = vst.msk [vmem:[#allocation2 + $0x318] sm:$0x1] %vm25, 0.0
  %65 = vst.msk [vmem:[#allocation2 + $0x338] sm:$0x1] %vm25, 0.0
  %66 = vst.msk [vmem:[#allocation2 + $0x358] sm:$0x1] %vm25, 0.0
  %67 = vst.msk [vmem:[#allocation2 + $0x378] sm:$0x1] %vm25, 0.0
  %68 = vst.msk [vmem:[#allocation2 + $0x398] sm:$0x1] %vm25, 0.0
  %69 = vst.msk [vmem:[#allocation2 + $0x3b8] sm:$0x1] %vm25, 0.0
  %70 = vst.msk [vmem:[#allocation2 + $0x3d8] sm:$0x1] %vm25, 0.0
  %71 = vst.msk [vmem:[#allocation2 + $0x3f8] sm:$0x1] %vm25, 0.0
  %72 = vst.msk [vmem:[#allocation2 + $0x418] sm:$0x1] %vm25, 0.0
  %73 = vst.msk [vmem:[#allocation2 + $0x438] sm:$0x1] %vm25, 0.0
  %74 = vst.msk [vmem:[#allocation2 + $0x458] sm:$0x1] %vm25, 0.0
  %75 = vst.msk [vmem:[#allocation2 + $0x478] sm:$0x1] %vm25, 0.0
  %76 = vst.msk [vmem:[#allocation2] sm:$0xff] %vm21, 0.0
  %77 = vst.msk [vmem:[#allocation2 + $0x20] sm:$0xff] %vm21, 0.0
  %78 = vst.msk [vmem:[#allocation2 + $0x40] sm:$0xff] %vm21, 0.0
  %79 = vst.msk [vmem:[#allocation2 + $0x60] sm:$0xff] %vm21, 0.0
  %80 = vst.msk [vmem:[#allocation2 + $0x80] sm:$0xff] %vm21, 0.0
  %81 = vst.msk [vmem:[#allocation2 + $0xa0] sm:$0xff] %vm21, 0.0
  %82 = vst.msk [vmem:[#allocation2 + $0xc0] sm:$0xff] %vm21, 0.0
  %83 = vst.msk [vmem:[#allocation2 + $0xe0] sm:$0xff] %vm21, 0.0
  %84 = vst.msk [vmem:[#allocation2 + $0x100] sm:$0xff] %vm21, 0.0
  %85 = vst.msk [vmem:[#allocation2 + $0x120] sm:$0xff] %vm21, 0.0
  %86 = vst.msk [vmem:[#allocation2 + $0x140] sm:$0xff] %vm21, 0.0
  %87 = vst.msk [vmem:[#allocation2 + $0x160] sm:$0xff] %vm21, 0.0
  %88 = vst.msk [vmem:[#allocation2 + $0x180] sm:$0xff] %vm21, 0.0
  %89 = vst.msk [vmem:[#allocation2 + $0x1a0] sm:$0xff] %vm21, 0.0
  %90 = vst.msk [vmem:[#allocation2 + $0x1c0] sm:$0xff] %vm21, 0.0
  %91 = vst.msk [vmem:[#allocation2 + $0x1e0] sm:$0xff] %vm21, 0.0
  %92 = vst.msk [vmem:[#allocation2 + $0x200] sm:$0xff] %vm21, 0.0
  %93 = vst.msk [vmem:[#allocation2 + $0x220] sm:$0xff] %vm21, 0.0
  %94 = vst.msk [vmem:[#allocation2 + $0x240] sm:$0xff] %vm21, 0.0
  %95 = vst.msk [vmem:[#allocation2 + $0x260] sm:$0xff] %vm21, 0.0
  %96 = vst.msk [vmem:[#allocation2 + $0x280] sm:$0xff] %vm21, 0.0
  %97 = vst.msk [vmem:[#allocation2 + $0x2a0] sm:$0xff] %vm21, 0.0
  %98 = vst.msk [vmem:[#allocation2 + $0x2c0] sm:$0xff] %vm21, 0.0
  %99 = vst.msk [vmem:[#allocation2 + $0x2e0] sm:$0xff] %vm21, 0.0
  %100 = vst.msk [vmem:[#allocation2 + $0x300] sm:$0xff] %vm21, 0.0
  %101 = vst.msk [vmem:[#allocation2 + $0x320] sm:$0xff] %vm21, 0.0
  %102 = vst.msk [vmem:[#allocation2 + $0x340] sm:$0xff] %vm21, 0.0
  %103 = vst.msk [vmem:[#allocation2 + $0x360] sm:$0xff] %vm21, 0.0
  %104 = vst.msk [vmem:[#allocation2 + $0x380] sm:$0xff] %vm21, 0.0
  %105 = vst.msk [vmem:[#allocation2 + $0x3a0] sm:$0xff] %vm21, 0.0
  %106 = vst.msk [vmem:[#allocation2 + $0x3c0] sm:$0xff] %vm21, 0.0
  %107 = vst.msk [vmem:[#allocation2 + $0x3e0] sm:$0xff] %vm21, 0.0
  %108 = vst.msk [vmem:[#allocation2 + $0x400] sm:$0xff] %vm21, 0.0
  %109 = vst.msk [vmem:[#allocation2 + $0x420] sm:$0xff] %vm21, 0.0
  %110 = vst.msk [vmem:[#allocation2 + $0x440] sm:$0xff] %vm21, 0.0
  %111 = vst.msk [vmem:[#allocation2 + $0x460] sm:$0xff] %vm21, 0.0
  %v112 = vld [vmem:[%s0] sm:$0xff]
  %v113 = vld [vmem:[%s0 + $0x8] sm:$0xff]
  %v114 = vld [vmem:[%s0 + $0x10] sm:$0xff]
  %v115 = vld [vmem:[%s0 + $0x18] sm:$0xff]
  %v116 = vld [vmem:[%s0 + $0x20] sm:$0xff]
  %v117 = vld [vmem:[%s0 + $0x28] sm:$0xff]
  %v118 = vld [vmem:[%s0 + $0x30] sm:$0xff]
  %v119 = vld [vmem:[%s0 + $0x38] sm:$0xff]
  %v120 = vld [vmem:[%s0 + $0x40] sm:$0xff]
  %v121 = vld [vmem:[%s0 + $0x48] sm:$0xff]
  %v122 = vld [vmem:[%s0 + $0x50] sm:$0xff]
  %v123 = vld [vmem:[%s0 + $0x58] sm:$0xff]
  %v124 = vld [vmem:[%s0 + $0x60] sm:$0xff]
  %v125 = vld [vmem:[%s0 + $0x68] sm:$0xff]
  %v126 = vld [vmem:[%s0 + $0x70] sm:$0xff]
  %v127 = vld [vmem:[%s0 + $0x78] sm:$0xff]
  %v128 = vld [vmem:[%s0 + $0x80] sm:$0xff]
  %v129 = vld [vmem:[%s0 + $0x88] sm:$0xff]
  %v130 = vld [vmem:[%s0 + $0x90] sm:$0xff]
  %v131 = vld [vmem:[%s0 + $0x98] sm:$0xff]
  %v132 = vld [vmem:[%s0 + $0xa0] sm:$0xff]
  %v133 = vld [vmem:[%s0 + $0xa8] sm:$0xff]
  %v134 = vld [vmem:[%s0 + $0xb0] sm:$0xff]
  %v135 = vld [vmem:[%s0 + $0xb8] sm:$0xff]
  %v136 = vld [vmem:[%s0 + $0xc0] sm:$0xff]
  %v137 = vld [vmem:[%s0 + $0xc8] sm:$0xff]
  %v138 = vld [vmem:[%s0 + $0xd0] sm:$0xff]
  %v139 = vld [vmem:[%s0 + $0xd8] sm:$0xff]
  %v140 = vld [vmem:[%s0 + $0xe0] sm:$0xff]
  %v141 = vld [vmem:[%s0 + $0xe8] sm:$0xff]
  %v142 = vld [vmem:[%s0 + $0xf0] sm:$0xff]
  %v143 = vld [vmem:[%s0 + $0xf8] sm:$0xff]
  %v144 = vld [vmem:[%s0 + $0x100] sm:$0xff]
  %v145 = vld [vmem:[%s0 + $0x108] sm:$0xff]
  %v146 = vld [vmem:[%s0 + $0x110] sm:$0xff]
  %v147 = vld [vmem:[%s0 + $0x118] sm:$0xff]
  %v148 = vld [vmem:[%s0 + $0x120] sm:$0xff]
  %v149 = vld [vmem:[%s0 + $0x128] sm:$0xff]
  %v150 = vld [vmem:[%s0 + $0x130] sm:$0xff]
  %v151 = vld [vmem:[%s0 + $0x138] sm:$0xff]
  %v152 = vld [vmem:[%s0 + $0x140] sm:$0xff]
  %v153 = vld [vmem:[%s0 + $0x148] sm:$0xff]
  %v154 = vld [vmem:[%s0 + $0x150] sm:$0xff]
  %v155 = vld [vmem:[%s0 + $0x158] sm:$0xff]
  %v156 = vld [vmem:[%s0 + $0x160] sm:$0xff]
  %v157 = vld [vmem:[%s0 + $0x168] sm:$0xff]
  %v158 = vld [vmem:[%s0 + $0x170] sm:$0xff]
  %v159 = vld [vmem:[%s0 + $0x178] sm:$0xff]
  %v160 = vld [vmem:[%s0 + $0x180] sm:$0xff]
  %v161 = vld [vmem:[%s0 + $0x188] sm:$0xff]
  %v162 = vld [vmem:[%s0 + $0x190] sm:$0xff]
  %v163 = vld [vmem:[%s0 + $0x198] sm:$0xff]
  %v164 = vld [vmem:[%s0 + $0x1a0] sm:$0xff]
  %v165 = vld [vmem:[%s0 + $0x1a8] sm:$0xff]
  %v166 = vld [vmem:[%s0 + $0x1b0] sm:$0xff]
  %v167 = vld [vmem:[%s0 + $0x1b8] sm:$0xff]
  %v168 = vld [vmem:[%s0 + $0x1c0] sm:$0xff]
  %v169 = vld [vmem:[%s0 + $0x1c8] sm:$0xff]
  %v170 = vld [vmem:[%s0 + $0x1d0] sm:$0xff]
  %v171 = vld [vmem:[%s0 + $0x1d8] sm:$0xff]
  %v172 = vld [vmem:[%s0 + $0x1e0] sm:$0xff]
  %v173 = vld [vmem:[%s0 + $0x1e8] sm:$0xff]
  %v174 = vld [vmem:[%s0 + $0x1f0] sm:$0xff]
  %v175 = vld [vmem:[%s0 + $0x1f8] sm:$0xff]
  %v176 = vmax.f32 %v112, 0.0
  %v177 = vmax.f32 %v113, 0.0
  %v178 = vmax.f32 %v114, 0.0
  %v179 = vmax.f32 %v115, 0.0
  %v180 = vmax.f32 %v116, 0.0
  %v181 = vmax.f32 %v117, 0.0
  %v182 = vmax.f32 %v118, 0.0
  %v183 = vmax.f32 %v119, 0.0
  %v184 = vmax.f32 %v120, 0.0
  %v185 = vmax.f32 %v121, 0.0
  %v186 = vmax.f32 %v122, 0.0
  %v187 = vmax.f32 %v123, 0.0
  %v188 = vmax.f32 %v124, 0.0
  %v189 = vmax.f32 %v125, 0.0
  %v190 = vmax.f32 %v126, 0.0
  %v191 = vmax.f32 %v127, 0.0
  %v192 = vmax.f32 %v128, 0.0
  %v193 = vmax.f32 %v129, 0.0
  %v194 = vmax.f32 %v130, 0.0
  %v195 = vmax.f32 %v131, 0.0
  %v196 = vmax.f32 %v132, 0.0
  %v197 = vmax.f32 %v133, 0.0
  %v198 = vmax.f32 %v134, 0.0
  %v199 = vmax.f32 %v135, 0.0
  %v200 = vmax.f32 %v136, 0.0
  %v201 = vmax.f32 %v137, 0.0
  %v202 = vmax.f32 %v138, 0.0
  %v203 = vmax.f32 %v139, 0.0
  %v204 = vmax.f32 %v140, 0.0
  %v205 = vmax.f32 %v141, 0.0
  %v206 = vmax.f32 %v142, 0.0
  %v207 = vmax.f32 %v143, 0.0
  %v208 = vmax.f32 %v144, 0.0
  %v209 = vmax.f32 %v145, 0.0
  %v210 = vmax.f32 %v146, 0.0
  %v211 = vmax.f32 %v147, 0.0
  %v212 = vmax.f32 %v148, 0.0
  %v213 = vmax.f32 %v149, 0.0
  %v214 = vmax.f32 %v150, 0.0
  %v215 = vmax.f32 %v151, 0.0
  %v216 = vmax.f32 %v152, 0.0
  %v217 = vmax.f32 %v153, 0.0
  %v218 = vmax.f32 %v154, 0.0
  %v219 = vmax.f32 %v155, 0.0
  %v220 = vmax.f32 %v156, 0.0
  %v221 = vmax.f32 %v157, 0.0
  %v222 = vmax.f32 %v158, 0.0
  %v223 = vmax.f32 %v159, 0.0
  %v224 = vmax.f32 %v160, 0.0
  %v225 = vmax.f32 %v161, 0.0
  %v226 = vmax.f32 %v162, 0.0
  %v227 = vmax.f32 %v163, 0.0
  %v228 = vmax.f32 %v164, 0.0
  %v229 = vmax.f32 %v165, 0.0
  %v230 = vmax.f32 %v166, 0.0
  %v231 = vmax.f32 %v167, 0.0
  %v232 = vmax.f32 %v168, 0.0
  %v233 = vmax.f32 %v169, 0.0
  %v234 = vmax.f32 %v170, 0.0
  %v235 = vmax.f32 %v171, 0.0
  %v236 = vmax.f32 %v172, 0.0
  %v237 = vmax.f32 %v173, 0.0
  %v238 = vmax.f32 %v174, 0.0
  %v239 = vmax.f32 %v175, 0.0
  %s240 = scalar_lea.vmem [#allocation2], 32
  %241 = vst.msk [vmem:[%s240 + $0x8] sm:$0xff] %vm21, %v176
  %242 = vst.msk [vmem:[%s240 + $0x10] sm:$0xff] %vm21, %v177
  %243 = vst.msk [vmem:[%s240 + $0x28] sm:$0xff] %vm21, %v178
  %244 = vst.msk [vmem:[%s240 + $0x30] sm:$0xff] %vm21, %v179
  %245 = vst.msk [vmem:[%s240 + $0x48] sm:$0xff] %vm21, %v180
  %246 = vst.msk [vmem:[%s240 + $0x50] sm:$0xff] %vm21, %v181
  %247 = vst.msk [vmem:[%s240 + $0x68] sm:$0xff] %vm21, %v182
  %248 = vst.msk [vmem:[%s240 + $0x70] sm:$0xff] %vm21, %v183
  %249 = vst.msk [vmem:[%s240 + $0x88] sm:$0xff] %vm21, %v184
  %250 = vst.msk [vmem:[%s240 + $0x90] sm:$0xff] %vm21, %v185
  %251 = vst.msk [vmem:[%s240 + $0xa8] sm:$0xff] %vm21, %v186
  %252 = vst.msk [vmem:[%s240 + $0xb0] sm:$0xff] %vm21, %v187
  %253 = vst.msk [vmem:[%s240 + $0xc8] sm:$0xff] %vm21, %v188
  %254 = vst.msk [vmem:[%s240 + $0xd0] sm:$0xff] %vm21, %v189
  %255 = vst.msk [vmem:[%s240 + $0xe8] sm:$0xff] %vm21, %v190
  %256 = vst.msk [vmem:[%s240 + $0xf0] sm:$0xff] %vm21, %v191
  %257 = vst.msk [vmem:[%s240 + $0x108] sm:$0xff] %vm21, %v192
  %258 = vst.msk [vmem:[%s240 + $0x110] sm:$0xff] %vm21, %v193
  %259 = vst.msk [vmem:[%s240 + $0x128] sm:$0xff] %vm21, %v194
  %260 = vst.msk [vmem:[%s240 + $0x130] sm:$0xff] %vm21, %v195
  %261 = vst.msk [vmem:[%s240 + $0x148] sm:$0xff] %vm21, %v196
  %262 = vst.msk [vmem:[%s240 + $0x150] sm:$0xff] %vm21, %v197
  %263 = vst.msk [vmem:[%s240 + $0x168] sm:$0xff] %vm21, %v198
  %264 = vst.msk [vmem:[%s240 + $0x170] sm:$0xff] %vm21, %v199
  %265 = vst.msk [vmem:[%s240 + $0x188] sm:$0xff] %vm21, %v200
  %266 = vst.msk [vmem:[%s240 + $0x190] sm:$0xff] %vm21, %v201
  %267 = vst.msk [vmem:[%s240 + $0x1a8] sm:$0xff] %vm21, %v202
  %268 = vst.msk [vmem:[%s240 + $0x1b0] sm:$0xff] %vm21, %v203
  %269 = vst.msk [vmem:[%s240 + $0x1c8] sm:$0xff] %vm21, %v204
  %270 = vst.msk [vmem:[%s240 + $0x1d0] sm:$0xff] %vm21, %v205
  %271 = vst.msk [vmem:[%s240 + $0x1e8] sm:$0xff] %vm21, %v206
  %272 = vst.msk [vmem:[%s240 + $0x1f0] sm:$0xff] %vm21, %v207
  %273 = vst.msk [vmem:[%s240 + $0x248] sm:$0xff] %vm21, %v208
  %274 = vst.msk [vmem:[%s240 + $0x250] sm:$0xff] %vm21, %v209
  %275 = vst.msk [vmem:[%s240 + $0x268] sm:$0xff] %vm21, %v210
  %276 = vst.msk [vmem:[%s240 + $0x270] sm:$0xff] %vm21, %v211
  %277 = vst.msk [vmem:[%s240 + $0x288] sm:$0xff] %vm21, %v212
  %278 = vst.msk [vmem:[%s240 + $0x290] sm:$0xff] %vm21, %v213
  %279 = vst.msk [vmem:[%s240 + $0x2a8] sm:$0xff] %vm21, %v214
  %280 = vst.msk [vmem:[%s240 + $0x2b0] sm:$0xff] %vm21, %v215
  %281 = vst.msk [vmem:[%s240 + $0x2c8] sm:$0xff] %vm21, %v216
  %282 = vst.msk [vmem:[%s240 + $0x2d0] sm:$0xff] %vm21, %v217
  %283 = vst.msk [vmem:[%s240 + $0x2e8] sm:$0xff] %vm21, %v218
  %284 = vst.msk [vmem:[%s240 + $0x2f0] sm:$0xff] %vm21, %v219
  %285 = vst.msk [vmem:[%s240 + $0x308] sm:$0xff] %vm21, %v220
  %286 = vst.msk [vmem:[%s240 + $0x310] sm:$0xff] %vm21, %v221
  %287 = vst.msk [vmem:[%s240 + $0x328] sm:$0xff] %vm21, %v222
  %288 = vst.msk [vmem:[%s240 + $0x330] sm:$0xff] %vm21, %v223
  %289 = vst.msk [vmem:[%s240 + $0x348] sm:$0xff] %vm21, %v224
  %290 = vst.msk [vmem:[%s240 + $0x350] sm:$0xff] %vm21, %v225
  %291 = vst.msk [vmem:[%s240 + $0x368] sm:$0xff] %vm21, %v226
  %292 = vst.msk [vmem:[%s240 + $0x370] sm:$0xff] %vm21, %v227
  %293 = vst.msk [vmem:[%s240 + $0x388] sm:$0xff] %vm21, %v228
  %294 = vst.msk [vmem:[%s240 + $0x390] sm:$0xff] %vm21, %v229
  %295 = vst.msk [vmem:[%s240 + $0x3a8] sm:$0xff] %vm21, %v230
  %296 = vst.msk [vmem:[%s240 + $0x3b0] sm:$0xff] %vm21, %v231
  %297 = vst.msk [vmem:[%s240 + $0x3c8] sm:$0xff] %vm21, %v232
  %298 = vst.msk [vmem:[%s240 + $0x3d0] sm:$0xff] %vm21, %v233
  %299 = vst.msk [vmem:[%s240 + $0x3e8] sm:$0xff] %vm21, %v234
  %300 = vst.msk [vmem:[%s240 + $0x3f0] sm:$0xff] %vm21, %v235
  %301 = vst.msk [vmem:[%s240 + $0x408] sm:$0xff] %vm21, %v236
  %302 = vst.msk [vmem:[%s240 + $0x410] sm:$0xff] %vm21, %v237
  %303 = vst.msk [vmem:[%s240 + $0x428] sm:$0xff] %vm21, %v238
  %304 = vst.msk [vmem:[%s240 + $0x430] sm:$0xff] %vm21, %v239
  %s305 = scalar_lea.vmem [#allocation2], 7
  %v306 = vld [vmem:[%s305] ss:$2 sm:$0xff]
  %s307 = scalar_lea.vmem [#allocation2], 71
  %v308 = vld [vmem:[%s307] ss:$2 sm:$0xff]
  %s309 = scalar_lea.vmem [#allocation2], 135
  %v310 = vld [vmem:[%s309] ss:$2 sm:$0xff]
  %s311 = scalar_lea.vmem [#allocation2], 199
  %v312 = vld [vmem:[%s311] ss:$2 sm:$0xff]
  %s313 = scalar_lea.vmem [#allocation2], 263
  %v314 = vld [vmem:[%s313] ss:$2 sm:$0xff]
  %s315 = scalar_lea.vmem [#allocation2], 327
  %v316 = vld [vmem:[%s315] ss:$2 sm:$0xff]
  %s317 = scalar_lea.vmem [#allocation2], 391
  %v318 = vld [vmem:[%s317] ss:$2 sm:$0xff]
  %s319 = scalar_lea.vmem [#allocation2], 455
  %v320 = vld [vmem:[%s319] ss:$2 sm:$0xff]
  %s321 = scalar_lea.vmem [#allocation2], 583
  %v322 = vld [vmem:[%s321] ss:$2 sm:$0xff]
  %s323 = scalar_lea.vmem [#allocation2], 647
  %v324 = vld [vmem:[%s323] ss:$2 sm:$0xff]
  %s325 = scalar_lea.vmem [#allocation2], 711
  %v326 = vld [vmem:[%s325] ss:$2 sm:$0xff]
  %s327 = scalar_lea.vmem [#allocation2], 775
  %v328 = vld [vmem:[%s327] ss:$2 sm:$0xff]
  %s329 = scalar_lea.vmem [#allocation2], 839
  %v330 = vld [vmem:[%s329] ss:$2 sm:$0xff]
  %s331 = scalar_lea.vmem [#allocation2], 903
  %v332 = vld [vmem:[%s331] ss:$2 sm:$0xff]
  %s333 = scalar_lea.vmem [#allocation2], 967
  %v334 = vld [vmem:[%s333] ss:$2 sm:$0xff]
  %s335 = scalar_lea.vmem [#allocation2], 1031
  %v336 = vld [vmem:[%s335] ss:$2 sm:$0xff]
  %v337 = vpack.c.bf16 %v308, %v306
  %v338 = vpack.c.bf16 %v312, %v310
  %v339 = vpack.c.bf16 %v316, %v314
  %v340 = vpack.c.bf16 %v320, %v318
  %v341 = vpack.c.bf16 %v324, %v322
  %v342 = vpack.c.bf16 %v328, %v326
  %v343 = vpack.c.bf16 %v332, %v330
  %v344 = vpack.c.bf16 %v336, %v334
  %v345 = vld [vmem:[%s1] sm:$0xf]
  %s346 = scalar_lea.vmem [#allocation2], 8
  %v347 = vld [vmem:[%s346] ss:$2 sm:$0xff]
  %s348 = scalar_lea.vmem [#allocation2], 72
  %v349 = vld [vmem:[%s348] ss:$2 sm:$0xff]
  %s350 = scalar_lea.vmem [#allocation2], 136
  %v351 = vld [vmem:[%s350] ss:$2 sm:$0xff]
  %s352 = scalar_lea.vmem [#allocation2], 200
  %v353 = vld [vmem:[%s352] ss:$2 sm:$0xff]
  %s354 = scalar_lea.vmem [#allocation2], 264
  %v355 = vld [vmem:[%s354] ss:$2 sm:$0xff]
  %s356 = scalar_lea.vmem [#allocation2], 328
  %v357 = vld [vmem:[%s356] ss:$2 sm:$0xff]
  %s358 = scalar_lea.vmem [#allocation2], 392
  %v359 = vld [vmem:[%s358] ss:$2 sm:$0xff]
  %s360 = scalar_lea.vmem [#allocation2], 456
  %v361 = vld [vmem:[%s360] ss:$2 sm:$0xff]
  %s362 = scalar_lea.vmem [#allocation2], 584
  %v363 = vld [vmem:[%s362] ss:$2 sm:$0xff]
  %s364 = scalar_lea.vmem [#allocation2], 648
  %v365 = vld [vmem:[%s364] ss:$2 sm:$0xff]
  %s366 = scalar_lea.vmem [#allocation2], 712
  %v367 = vld [vmem:[%s366] ss:$2 sm:$0xff]
  %s368 = scalar_lea.vmem [#allocation2], 776
  %v369 = vld [vmem:[%s368] ss:$2 sm:$0xff]
  %s370 = scalar_lea.vmem [#allocation2], 840
  %v371 = vld [vmem:[%s370] ss:$2 sm:$0xff]
  %s372 = scalar_lea.vmem [#allocation2], 904
  %v373 = vld [vmem:[%s372] ss:$2 sm:$0xff]
  %s374 = scalar_lea.vmem [#allocation2], 968
  %v375 = vld [vmem:[%s374] ss:$2 sm:$0xff]
  %s376 = scalar_lea.vmem [#allocation2], 1032
  %v377 = vld [vmem:[%s376] ss:$2 sm:$0xff]
  %v378 = vpack.c.bf16 %v349, %v347
  %v379 = vpack.c.bf16 %v353, %v351
  %v380 = vpack.c.bf16 %v357, %v355
  %v381 = vpack.c.bf16 %v361, %v359
  %v382 = vpack.c.bf16 %v365, %v363
  %v383 = vpack.c.bf16 %v369, %v367
  %v384 = vpack.c.bf16 %v373, %v371
  %v385 = vpack.c.bf16 %v377, %v375
  %s386 = scalar_lea.vmem %s1, 4
  %v387 = vld [vmem:[%s386] sm:$0xf]
  %v389 = vsel %vm21, %v378, 0
  %v392 = vsel %vm21, %v379, 0
  %v395 = vsel %vm21, %v380, 0
  %v398 = vsel %vm21, %v381, 0
  %v401 = vsel %vm21, %v382, 0
  %v404 = vsel %vm21, %v383, 0
  %v407 = vsel %vm21, %v384, 0
  %v410 = vsel %vm21, %v385, 0
  %vm412 = vcmask 1043456
  %v414 = vsel %vm412, %v387, 0
  %416 = vmatprep.subr.bf16.mxu0 0
  %417 = vmatpush1.bf16.msra.mxu0 0
  %418 = vmatprep.subr.bf16.mxu0 0
  %419 = vmatpush1.bf16.msra.mxu0 0
  %420 = vmatprep.subr.bf16.mxu0 0
  %421 = vmatpush1.bf16.msra.mxu0 0
  %422 = vmatprep.subr.bf16.mxu0 0
  %423 = vmatpush1.bf16.msra.mxu0 0
  %424 = vmatprep.subr.bf16.mxu0 0
  %425 = vmatpush1.bf16.msra.mxu0 0
  %426 = vmatprep.subr.bf16.mxu0 0
  %427 = vmatpush1.bf16.msra.mxu0 0
  %428 = vmatprep.subr.bf16.mxu0 0
  %429 = vmatpush1.bf16.msra.mxu0 0
  %430 = vmatprep.subr.bf16.mxu0 0
  %431 = vmatpush1.bf16.msra.mxu0 %v414
  %432 = vmatprep.subr.bf16.mxu0 0
  %433 = vmatpush2.bf16.msra.mxu0 0
  %434 = vmatprep.subr.bf16.mxu0 0
  %435 = vmatpush2.bf16.msra.mxu0 0
  %436 = vmatprep.subr.bf16.mxu0 0
  %437 = vmatpush2.bf16.msra.mxu0 0
  %438 = vmatprep.subr.bf16.mxu0 0
  %439 = vmatpush2.bf16.msra.mxu0 0
  %440 = vmatprep.subr.bf16.mxu0 0
  %441 = vmatpush2.bf16.msra.mxu0 0
  %442 = vmatprep.subr.bf16.mxu0 0
  %443 = vmatpush2.bf16.msra.mxu0 0
  %444 = vmatprep.subr.bf16.mxu0 0
  %445 = vmatpush2.bf16.msra.mxu0 0
  %446 = vmatprep.subr.bf16.mxu0 0
  %447 = vmatpush2.bf16.msra.mxu0 0
  %448 = vmatprep.mubr.bf16.mxu0 0
  %449 = vmatmul.mubr.bf16.gmra.mxu0 %v389
  %v450 = vpop.f32.mrf.mxu0
  %v451 = vadd.f32 0.0, %v450
  %v452 = vpop.f32.mrf.mxu0
  %v453 = vpop.f32.mrf.mxu0
  %v454 = vadd.f32 0.0, %v453
  %v455 = vpop.f32.mrf.mxu0
  %456 = vmatprep.mubr.bf16.mxu0 0
  %457 = vmatmul.mubr.bf16.gmra.mxu0 %v392
  %v458 = vpop.f32.mrf.mxu0
  %v459 = vadd.f32 0.0, %v458
  %v460 = vpop.f32.mrf.mxu0
  %v461 = vpop.f32.mrf.mxu0
  %v462 = vadd.f32 0.0, %v461
  %v463 = vpop.f32.mrf.mxu0
  %464 = vmatprep.mubr.bf16.mxu0 0
  %465 = vmatmul.mubr.bf16.gmra.mxu0 %v395
  %v466 = vpop.f32.mrf.mxu0
  %v467 = vadd.f32 0.0, %v466
  %v468 = vpop.f32.mrf.mxu0
  %v469 = vpop.f32.mrf.mxu0
  %v470 = vadd.f32 0.0, %v469
  %v471 = vpop.f32.mrf.mxu0
  %472 = vmatprep.mubr.bf16.mxu0 0
  %473 = vmatmul.mubr.bf16.gmra.mxu0 %v398
  %v474 = vpop.f32.mrf.mxu0
  %v475 = vadd.f32 0.0, %v474
  %v476 = vpop.f32.mrf.mxu0
  %v477 = vpop.f32.mrf.mxu0
  %v478 = vadd.f32 0.0, %v477
  %v479 = vpop.f32.mrf.mxu0
  %480 = vmatprep.mubr.bf16.mxu0 0
  %481 = vmatmul.mubr.bf16.gmra.mxu0 %v401
  %v482 = vpop.f32.mrf.mxu0
  %v483 = vadd.f32 0.0, %v482
  %v484 = vpop.f32.mrf.mxu0
  %v485 = vpop.f32.mrf.mxu0
  %v486 = vadd.f32 0.0, %v485
  %v487 = vpop.f32.mrf.mxu0
  %488 = vmatprep.mubr.bf16.mxu0 0
  %489 = vmatmul.mubr.bf16.gmra.mxu0 %v404
  %v490 = vpop.f32.mrf.mxu0
  %v491 = vadd.f32 0.0, %v490
  %v492 = vpop.f32.mrf.mxu0
  %v493 = vpop.f32.mrf.mxu0
  %v494 = vadd.f32 0.0, %v493
  %v495 = vpop.f32.mrf.mxu0
  %496 = vmatprep.mubr.bf16.mxu0 0
  %497 = vmatmul.mubr.bf16.gmra.mxu0 %v407
  %v498 = vpop.f32.mrf.mxu0
  %v499 = vadd.f32 0.0, %v498
  %v500 = vpop.f32.mrf.mxu0
  %v501 = vpop.f32.mrf.mxu0
  %v502 = vadd.f32 0.0, %v501
  %v503 = vpop.f32.mrf.mxu0
  %504 = vmatprep.mubr.bf16.mxu0 0
  %505 = vmatmul.mubr.bf16.gmra.mxu0 %v410
  %v506 = vpop.f32.mrf.mxu0
  %v507 = vadd.f32 0.0, %v506
  %v508 = vpop.f32.mrf.mxu0
  %v509 = vpop.f32.mrf.mxu0
  %v510 = vadd.f32 0.0, %v509
  %v511 = vpop.f32.mrf.mxu0
  %512 = vdwg.mxu0
  %v514 = vsel %vm21, %v337, 0
  %v517 = vsel %vm21, %v338, 0
  %v520 = vsel %vm21, %v339, 0
  %v523 = vsel %vm21, %v340, 0
  %v526 = vsel %vm21, %v341, 0
  %v529 = vsel %vm21, %v342, 0
  %v532 = vsel %vm21, %v343, 0
  %v535 = vsel %vm21, %v344, 0
  %v538 = vsel %vm412, %v345, 0
  %540 = vmatprep.subr.bf16.mxu0 0
  %541 = vmatpush1.bf16.msra.mxu0 0
  %542 = vmatprep.subr.bf16.mxu0 0
  %543 = vmatpush1.bf16.msra.mxu0 0
  %544 = vmatprep.subr.bf16.mxu0 0
  %545 = vmatpush1.bf16.msra.mxu0 0
  %546 = vmatprep.subr.bf16.mxu0 0
  %547 = vmatpush1.bf16.msra.mxu0 0
  %548 = vmatprep.subr.bf16.mxu0 0
  %549 = vmatpush1.bf16.msra.mxu0 0
  %550 = vmatprep.subr.bf16.mxu0 0
  %551 = vmatpush1.bf16.msra.mxu0 0
  %552 = vmatprep.subr.bf16.mxu0 0
  %553 = vmatpush1.bf16.msra.mxu0 0
  %554 = vmatprep.subr.bf16.mxu0 0
  %555 = vmatpush1.bf16.msra.mxu0 %v538
  %556 = vmatprep.subr.bf16.mxu0 0
  %557 = vmatpush2.bf16.msra.mxu0 0
  %558 = vmatprep.subr.bf16.mxu0 0
  %559 = vmatpush2.bf16.msra.mxu0 0
  %560 = vmatprep.subr.bf16.mxu0 0
  %561 = vmatpush2.bf16.msra.mxu0 0
  %562 = vmatprep.subr.bf16.mxu0 0
  %563 = vmatpush2.bf16.msra.mxu0 0
  %564 = vmatprep.subr.bf16.mxu0 0
  %565 = vmatpush2.bf16.msra.mxu0 0
  %566 = vmatprep.subr.bf16.mxu0 0
  %567 = vmatpush2.bf16.msra.mxu0 0
  %568 = vmatprep.subr.bf16.mxu0 0
  %569 = vmatpush2.bf16.msra.mxu0 0
  %570 = vmatprep.subr.bf16.mxu0 0
  %571 = vmatpush2.bf16.msra.mxu0 0
  %572 = vmatprep.mubr.bf16.mxu0 0
  %573 = vmatmul.mubr.bf16.gmra.mxu0 %v514
  %v574 = vpop.f32.mrf.mxu0
  %v575 = vadd.f32 %v451, %v574
  %v576 = vpop.f32.mrf.mxu0
  %v577 = vpop.f32.mrf.mxu0
  %v578 = vadd.f32 %v454, %v577
  %v579 = vpop.f32.mrf.mxu0
  %580 = vmatprep.mubr.bf16.mxu0 0
  %581 = vmatmul.mubr.bf16.gmra.mxu0 %v517
  %v582 = vpop.f32.mrf.mxu0
  %v583 = vadd.f32 %v459, %v582
  %v584 = vpop.f32.mrf.mxu0
  %v585 = vpop.f32.mrf.mxu0
  %v586 = vadd.f32 %v462, %v585
  %v587 = vpop.f32.mrf.mxu0
  %588 = vmatprep.mubr.bf16.mxu0 0
  %589 = vmatmul.mubr.bf16.gmra.mxu0 %v520
  %v590 = vpop.f32.mrf.mxu0
  %v591 = vadd.f32 %v467, %v590
  %v592 = vpop.f32.mrf.mxu0
  %v593 = vpop.f32.mrf.mxu0
  %v594 = vadd.f32 %v470, %v593
  %v595 = vpop.f32.mrf.mxu0
  %596 = vmatprep.mubr.bf16.mxu0 0
  %597 = vmatmul.mubr.bf16.gmra.mxu0 %v523
  %v598 = vpop.f32.mrf.mxu0
  %v599 = vadd.f32 %v475, %v598
  %v600 = vpop.f32.mrf.mxu0
  %v601 = vpop.f32.mrf.mxu0
  %v602 = vadd.f32 %v478, %v601
  %v603 = vpop.f32.mrf.mxu0
  %604 = vmatprep.mubr.bf16.mxu0 0
  %605 = vmatmul.mubr.bf16.gmra.mxu0 %v526
  %v606 = vpop.f32.mrf.mxu0
  %v607 = vadd.f32 %v483, %v606
  %v608 = vpop.f32.mrf.mxu0
  %v609 = vpop.f32.mrf.mxu0
  %v610 = vadd.f32 %v486, %v609
  %v611 = vpop.f32.mrf.mxu0
  %612 = vmatprep.mubr.bf16.mxu0 0
  %613 = vmatmul.mubr.bf16.gmra.mxu0 %v529
  %v614 = vpop.f32.mrf.mxu0
  %v615 = vadd.f32 %v491, %v614
  %v616 = vpop.f32.mrf.mxu0
  %v617 = vpop.f32.mrf.mxu0
  %v618 = vadd.f32 %v494, %v617
  %v619 = vpop.f32.mrf.mxu0
  %620 = vmatprep.mubr.bf16.mxu0 0
  %621 = vmatmul.mubr.bf16.gmra.mxu0 %v532
  %v622 = vpop.f32.mrf.mxu0
  %v623 = vadd.f32 %v499, %v622
  %v624 = vpop.f32.mrf.mxu0
  %v625 = vpop.f32.mrf.mxu0
  %v626 = vadd.f32 %v502, %v625
  %v627 = vpop.f32.mrf.mxu0
  %628 = vmatprep.mubr.bf16.mxu0 0
  %629 = vmatmul.mubr.bf16.gmra.mxu0 %v535
  %v630 = vpop.f32.mrf.mxu0
  %v631 = vadd.f32 %v507, %v630
  %v632 = vpop.f32.mrf.mxu0
  %v633 = vpop.f32.mrf.mxu0
  %v634 = vadd.f32 %v510, %v633
  %v635 = vpop.f32.mrf.mxu0
  %636 = vdwg.mxu0
  %s637 = scalar_lea.vmem [#allocation2], 9
  %v638 = vld [vmem:[%s637] ss:$2 sm:$0xff]
  %s639 = scalar_lea.vmem [#allocation2], 73
  %v640 = vld [vmem:[%s639] ss:$2 sm:$0xff]
  %s641 = scalar_lea.vmem [#allocation2], 137
  %v642 = vld [vmem:[%s641] ss:$2 sm:$0xff]
  %s643 = scalar_lea.vmem [#allocation2], 201
  %v644 = vld [vmem:[%s643] ss:$2 sm:$0xff]
  %s645 = scalar_lea.vmem [#allocation2], 265
  %v646 = vld [vmem:[%s645] ss:$2 sm:$0xff]
  %s647 = scalar_lea.vmem [#allocation2], 329
  %v648 = vld [vmem:[%s647] ss:$2 sm:$0xff]
  %s649 = scalar_lea.vmem [#allocation2], 393
  %v650 = vld [vmem:[%s649] ss:$2 sm:$0xff]
  %s651 = scalar_lea.vmem [#allocation2], 457
  %v652 = vld [vmem:[%s651] ss:$2 sm:$0xff]
  %s653 = scalar_lea.vmem [#allocation2], 585
  %v654 = vld [vmem:[%s653] ss:$2 sm:$0xff]
  %s655 = scalar_lea.vmem [#allocation2], 649
  %v656 = vld [vmem:[%s655] ss:$2 sm:$0xff]
  %s657 = scalar_lea.vmem [#allocation2], 713
  %v658 = vld [vmem:[%s657] ss:$2 sm:$0xff]
  %s659 = scalar_lea.vmem [#allocation2], 777
  %v660 = vld [vmem:[%s659] ss:$2 sm:$0xff]
  %s661 = scalar_lea.vmem [#allocation2], 841
  %v662 = vld [vmem:[%s661] ss:$2 sm:$0xff]
  %s663 = scalar_lea.vmem [#allocation2], 905
  %v664 = vld [vmem:[%s663] ss:$2 sm:$0xff]
  %s665 = scalar_lea.vmem [#allocation2], 969
  %v666 = vld [vmem:[%s665] ss:$2 sm:$0xff]
  %s667 = scalar_lea.vmem [#allocation2], 1033
  %v668 = vld [vmem:[%s667] ss:$2 sm:$0xff]
  %v669 = vpack.c.bf16 %v640, %v638
  %v670 = vpack.c.bf16 %v644, %v642
  %v671 = vpack.c.bf16 %v648, %v646
  %v672 = vpack.c.bf16 %v652, %v650
  %v673 = vpack.c.bf16 %v656, %v654
  %v674 = vpack.c.bf16 %v660, %v658
  %v675 = vpack.c.bf16 %v664, %v662
  %v676 = vpack.c.bf16 %v668, %v666
  %s677 = scalar_lea.vmem %s1, 8
  %v678 = vld [vmem:[%s677] sm:$0xf]
  %v680 = vsel %vm21, %v669, 0
  %v683 = vsel %vm21, %v670, 0
  %v686 = vsel %vm21, %v671, 0
  %v689 = vsel %vm21, %v672, 0
  %v692 = vsel %vm21, %v673, 0
  %v695 = vsel %vm21, %v674, 0
  %v698 = vsel %vm21, %v675, 0
  %v701 = vsel %vm21, %v676, 0
  %v704 = vsel %vm412, %v678, 0
  %706 = vmatprep.subr.bf16.mxu0 0
  %707 = vmatpush1.bf16.msra.mxu0 0
  %708 = vmatprep.subr.bf16.mxu0 0
  %709 = vmatpush1.bf16.msra.mxu0 0
  %710 = vmatprep.subr.bf16.mxu0 0
  %711 = vmatpush1.bf16.msra.mxu0 0
  %712 = vmatprep.subr.bf16.mxu0 0
  %713 = vmatpush1.bf16.msra.mxu0 0
  %714 = vmatprep.subr.bf16.mxu0 0
  %715 = vmatpush1.bf16.msra.mxu0 0
  %716 = vmatprep.subr.bf16.mxu0 0
  %717 = vmatpush1.bf16.msra.mxu0 0
  %718 = vmatprep.subr.bf16.mxu0 0
  %719 = vmatpush1.bf16.msra.mxu0 0
  %720 = vmatprep.subr.bf16.mxu0 0
  %721 = vmatpush1.bf16.msra.mxu0 %v704
  %722 = vmatprep.subr.bf16.mxu0 0
  %723 = vmatpush2.bf16.msra.mxu0 0
  %724 = vmatprep.subr.bf16.mxu0 0
  %725 = vmatpush2.bf16.msra.mxu0 0
  %726 = vmatprep.subr.bf16.mxu0 0
  %727 = vmatpush2.bf16.msra.mxu0 0
  %728 = vmatprep.subr.bf16.mxu0 0
  %729 = vmatpush2.bf16.msra.mxu0 0
  %730 = vmatprep.subr.bf16.mxu0 0
  %731 = vmatpush2.bf16.msra.mxu0 0
  %732 = vmatprep.subr.bf16.mxu0 0
  %733 = vmatpush2.bf16.msra.mxu0 0
  %734 = vmatprep.subr.bf16.mxu0 0
  %735 = vmatpush2.bf16.msra.mxu0 0
  %736 = vmatprep.subr.bf16.mxu0 0
  %737 = vmatpush2.bf16.msra.mxu0 0
  %738 = vmatprep.mubr.bf16.mxu0 0
  %739 = vmatmul.mubr.bf16.gmra.mxu0 %v680
  %v740 = vpop.f32.mrf.mxu0
  %v741 = vadd.f32 0.0, %v740
  %v742 = vpop.f32.mrf.mxu0
  %v743 = vpop.f32.mrf.mxu0
  %v744 = vadd.f32 0.0, %v743
  %v745 = vpop.f32.mrf.mxu0
  %746 = vmatprep.mubr.bf16.mxu0 0
  %747 = vmatmul.mubr.bf16.gmra.mxu0 %v683
  %v748 = vpop.f32.mrf.mxu0
  %v749 = vadd.f32 0.0, %v748
  %v750 = vpop.f32.mrf.mxu0
  %v751 = vpop.f32.mrf.mxu0
  %v752 = vadd.f32 0.0, %v751
  %v753 = vpop.f32.mrf.mxu0
  %754 = vmatprep.mubr.bf16.mxu0 0
  %755 = vmatmul.mubr.bf16.gmra.mxu0 %v686
  %v756 = vpop.f32.mrf.mxu0
  %v757 = vadd.f32 0.0, %v756
  %v758 = vpop.f32.mrf.mxu0
  %v759 = vpop.f32.mrf.mxu0
  %v760 = vadd.f32 0.0, %v759
  %v761 = vpop.f32.mrf.mxu0
  %762 = vmatprep.mubr.bf16.mxu0 0
  %763 = vmatmul.mubr.bf16.gmra.mxu0 %v689
  %v764 = vpop.f32.mrf.mxu0
  %v765 = vadd.f32 0.0, %v764
  %v766 = vpop.f32.mrf.mxu0
  %v767 = vpop.f32.mrf.mxu0
  %v768 = vadd.f32 0.0, %v767
  %v769 = vpop.f32.mrf.mxu0
  %770 = vmatprep.mubr.bf16.mxu0 0
  %771 = vmatmul.mubr.bf16.gmra.mxu0 %v692
  %v772 = vpop.f32.mrf.mxu0
  %v773 = vadd.f32 0.0, %v772
  %v774 = vpop.f32.mrf.mxu0
  %v775 = vpop.f32.mrf.mxu0
  %v776 = vadd.f32 0.0, %v775
  %v777 = vpop.f32.mrf.mxu0
  %778 = vmatprep.mubr.bf16.mxu0 0
  %779 = vmatmul.mubr.bf16.gmra.mxu0 %v695
  %v780 = vpop.f32.mrf.mxu0
  %v781 = vadd.f32 0.0, %v780
  %v782 = vpop.f32.mrf.mxu0
  %v783 = vpop.f32.mrf.mxu0
  %v784 = vadd.f32 0.0, %v783
  %v785 = vpop.f32.mrf.mxu0
  %786 = vmatprep.mubr.bf16.mxu0 0
  %787 = vmatmul.mubr.bf16.gmra.mxu0 %v698
  %v788 = vpop.f32.mrf.mxu0
  %v789 = vadd.f32 0.0, %v788
  %v790 = vpop.f32.mrf.mxu0
  %v791 = vpop.f32.mrf.mxu0
  %v792 = vadd.f32 0.0, %v791
  %v793 = vpop.f32.mrf.mxu0
  %794 = vmatprep.mubr.bf16.mxu0 0
  %795 = vmatmul.mubr.bf16.gmra.mxu0 %v701
  %v796 = vpop.f32.mrf.mxu0
  %v797 = vadd.f32 0.0, %v796
  %v798 = vpop.f32.mrf.mxu0
  %v799 = vpop.f32.mrf.mxu0
  %v800 = vadd.f32 0.0, %v799
  %v801 = vpop.f32.mrf.mxu0
  %802 = vdwg.mxu0
  %v803 = vadd.f32 %v575, %v741
  %v804 = vadd.f32 %v578, %v744
  %v805 = vadd.f32 %v583, %v749
  %v806 = vadd.f32 %v586, %v752
  %v807 = vadd.f32 %v591, %v757
  %v808 = vadd.f32 %v594, %v760
  %v809 = vadd.f32 %v599, %v765
  %v810 = vadd.f32 %v602, %v768
  %v811 = vadd.f32 %v607, %v773
  %v812 = vadd.f32 %v610, %v776
  %v813 = vadd.f32 %v615, %v781
  %v814 = vadd.f32 %v618, %v784
  %v815 = vadd.f32 %v623, %v789
  %v816 = vadd.f32 %v626, %v792
  %v817 = vadd.f32 %v631, %v797
  %v818 = vadd.f32 %v634, %v800
  %s819 = scalar_lea.vmem %s240, 7 [#allocation2]
  %v820 = vld [vmem:[%s819] ss:$2 sm:$0xff]
  %s821 = scalar_lea.vmem %s240, 71 [#allocation2]
  %v822 = vld [vmem:[%s821] ss:$2 sm:$0xff]
  %s823 = scalar_lea.vmem %s240, 135 [#allocation2]
  %v824 = vld [vmem:[%s823] ss:$2 sm:$0xff]
  %s825 = scalar_lea.vmem %s240, 199 [#allocation2]
  %v826 = vld [vmem:[%s825] ss:$2 sm:$0xff]
  %s827 = scalar_lea.vmem %s240, 263 [#allocation2]
  %v828 = vld [vmem:[%s827] ss:$2 sm:$0xff]
  %s829 = scalar_lea.vmem %s240, 327 [#allocation2]
  %v830 = vld [vmem:[%s829] ss:$2 sm:$0xff]
  %s831 = scalar_lea.vmem %s240, 391 [#allocation2]
  %v832 = vld [vmem:[%s831] ss:$2 sm:$0xff]
  %s833 = scalar_lea.vmem %s240, 455 [#allocation2]
  %v834 = vld [vmem:[%s833] ss:$2 sm:$0xff]
  %s835 = scalar_lea.vmem %s240, 583 [#allocation2]
  %v836 = vld [vmem:[%s835] ss:$2 sm:$0xff]
  %s837 = scalar_lea.vmem %s240, 647 [#allocation2]
  %v838 = vld [vmem:[%s837] ss:$2 sm:$0xff]
  %s839 = scalar_lea.vmem %s240, 711 [#allocation2]
  %v840 = vld [vmem:[%s839] ss:$2 sm:$0xff]
  %s841 = scalar_lea.vmem %s240, 775 [#allocation2]
  %v842 = vld [vmem:[%s841] ss:$2 sm:$0xff]
  %s843 = scalar_lea.vmem %s240, 839 [#allocation2]
  %v844 = vld [vmem:[%s843] ss:$2 sm:$0xff]
  %s845 = scalar_lea.vmem %s240, 903 [#allocation2]
  %v846 = vld [vmem:[%s845] ss:$2 sm:$0xff]
  %s847 = scalar_lea.vmem %s240, 967 [#allocation2]
  %v848 = vld [vmem:[%s847] ss:$2 sm:$0xff]
  %s849 = scalar_lea.vmem %s240, 1031 [#allocation2]
  %v850 = vld [vmem:[%s849] ss:$2 sm:$0xff]
  %v851 = vpack.c.bf16 %v822, %v820
  %v852 = vpack.c.bf16 %v826, %v824
  %v853 = vpack.c.bf16 %v830, %v828
  %v854 = vpack.c.bf16 %v834, %v832
  %v855 = vpack.c.bf16 %v838, %v836
  %v856 = vpack.c.bf16 %v842, %v840
  %v857 = vpack.c.bf16 %v846, %v844
  %v858 = vpack.c.bf16 %v850, %v848
  %s859 = scalar_lea.vmem %s1, 12
  %v860 = vld [vmem:[%s859] sm:$0xf]
  %v862 = vsel %vm21, %v851, 0
  %v865 = vsel %vm21, %v852, 0
  %v868 = vsel %vm21, %v853, 0
  %v871 = vsel %vm21, %v854, 0
  %v874 = vsel %vm21, %v855, 0
  %v877 = vsel %vm21, %v856, 0
  %v880 = vsel %vm21, %v857, 0
  %v883 = vsel %vm21, %v858, 0
  %v886 = vsel %vm412, %v860, 0
  %888 = vmatprep.subr.bf16.mxu0 0
  %889 = vmatpush1.bf16.msra.mxu0 0
  %890 = vmatprep.subr.bf16.mxu0 0
  %891 = vmatpush1.bf16.msra.mxu0 0
  %892 = vmatprep.subr.bf16.mxu0 0
  %893 = vmatpush1.bf16.msra.mxu0 0
  %894 = vmatprep.subr.bf16.mxu0 0
  %895 = vmatpush1.bf16.msra.mxu0 0
  %896 = vmatprep.subr.bf16.mxu0 0
  %897 = vmatpush1.bf16.msra.mxu0 0
  %898 = vmatprep.subr.bf16.mxu0 0
  %899 = vmatpush1.bf16.msra.mxu0 0
  %900 = vmatprep.subr.bf16.mxu0 0
  %901 = vmatpush1.bf16.msra.mxu0 0
  %902 = vmatprep.subr.bf16.mxu0 0
  %903 = vmatpush1.bf16.msra.mxu0 %v886
  %904 = vmatprep.subr.bf16.mxu0 0
  %905 = vmatpush2.bf16.msra.mxu0 0
  %906 = vmatprep.subr.bf16.mxu0 0
  %907 = vmatpush2.bf16.msra.mxu0 0
  %908 = vmatprep.subr.bf16.mxu0 0
  %909 = vmatpush2.bf16.msra.mxu0 0
  %910 = vmatprep.subr.bf16.mxu0 0
  %911 = vmatpush2.bf16.msra.mxu0 0
  %912 = vmatprep.subr.bf16.mxu0 0
  %913 = vmatpush2.bf16.msra.mxu0 0
  %914 = vmatprep.subr.bf16.mxu0 0
  %915 = vmatpush2.bf16.msra.mxu0 0
  %916 = vmatprep.subr.bf16.mxu0 0
  %917 = vmatpush2.bf16.msra.mxu0 0
  %918 = vmatprep.subr.bf16.mxu0 0
  %919 = vmatpush2.bf16.msra.mxu0 0
  %920 = vmatprep.mubr.bf16.mxu0 0
  %921 = vmatmul.mubr.bf16.gmra.mxu0 %v862
  %v922 = vpop.f32.mrf.mxu0
  %v923 = vadd.f32 0.0, %v922
  %v924 = vpop.f32.mrf.mxu0
  %v925 = vpop.f32.mrf.mxu0
  %v926 = vadd.f32 0.0, %v925
  %v927 = vpop.f32.mrf.mxu0
  %928 = vmatprep.mubr.bf16.mxu0 0
  %929 = vmatmul.mubr.bf16.gmra.mxu0 %v865
  %v930 = vpop.f32.mrf.mxu0
  %v931 = vadd.f32 0.0, %v930
  %v932 = vpop.f32.mrf.mxu0
  %v933 = vpop.f32.mrf.mxu0
  %v934 = vadd.f32 0.0, %v933
  %v935 = vpop.f32.mrf.mxu0
  %936 = vmatprep.mubr.bf16.mxu0 0
  %937 = vmatmul.mubr.bf16.gmra.mxu0 %v868
  %v938 = vpop.f32.mrf.mxu0
  %v939 = vadd.f32 0.0, %v938
  %v940 = vpop.f32.mrf.mxu0
  %v941 = vpop.f32.mrf.mxu0
  %v942 = vadd.f32 0.0, %v941
  %v943 = vpop.f32.mrf.mxu0
  %944 = vmatprep.mubr.bf16.mxu0 0
  %945 = vmatmul.mubr.bf16.gmra.mxu0 %v871
  %v946 = vpop.f32.mrf.mxu0
  %v947 = vadd.f32 0.0, %v946
  %v948 = vpop.f32.mrf.mxu0
  %v949 = vpop.f32.mrf.mxu0
  %v950 = vadd.f32 0.0, %v949
  %v951 = vpop.f32.mrf.mxu0
  %952 = vmatprep.mubr.bf16.mxu0 0
  %953 = vmatmul.mubr.bf16.gmra.mxu0 %v874
  %v954 = vpop.f32.mrf.mxu0
  %v955 = vadd.f32 0.0, %v954
  %v956 = vpop.f32.mrf.mxu0
  %v957 = vpop.f32.mrf.mxu0
  %v958 = vadd.f32 0.0, %v957
  %v959 = vpop.f32.mrf.mxu0
  %960 = vmatprep.mubr.bf16.mxu0 0
  %961 = vmatmul.mubr.bf16.gmra.mxu0 %v877
  %v962 = vpop.f32.mrf.mxu0
  %v963 = vadd.f32 0.0, %v962
  %v964 = vpop.f32.mrf.mxu0
  %v965 = vpop.f32.mrf.mxu0
  %v966 = vadd.f32 0.0, %v965
  %v967 = vpop.f32.mrf.mxu0
  %968 = vmatprep.mubr.bf16.mxu0 0
  %969 = vmatmul.mubr.bf16.gmra.mxu0 %v880
  %v970 = vpop.f32.mrf.mxu0
  %v971 = vadd.f32 0.0, %v970
  %v972 = vpop.f32.mrf.mxu0
  %v973 = vpop.f32.mrf.mxu0
  %v974 = vadd.f32 0.0, %v973
  %v975 = vpop.f32.mrf.mxu0
  %976 = vmatprep.mubr.bf16.mxu0 0
  %977 = vmatmul.mubr.bf16.gmra.mxu0 %v883
  %v978 = vpop.f32.mrf.mxu0
  %v979 = vadd.f32 0.0, %v978
  %v980 = vpop.f32.mrf.mxu0
  %v981 = vpop.f32.mrf.mxu0
  %v982 = vadd.f32 0.0, %v981
  %v983 = vpop.f32.mrf.mxu0
  %984 = vdwg.mxu0
  %v985 = vadd.f32 %v803, %v923
  %v986 = vadd.f32 %v804, %v926
  %v987 = vadd.f32 %v805, %v931
  %v988 = vadd.f32 %v806, %v934
  %v989 = vadd.f32 %v807, %v939
  %v990 = vadd.f32 %v808, %v942
  %v991 = vadd.f32 %v809, %v947
  %v992 = vadd.f32 %v810, %v950
  %v993 = vadd.f32 %v811, %v955
  %v994 = vadd.f32 %v812, %v958
  %v995 = vadd.f32 %v813, %v963
  %v996 = vadd.f32 %v814, %v966
  %v997 = vadd.f32 %v815, %v971
  %v998 = vadd.f32 %v816, %v974
  %v999 = vadd.f32 %v817, %v979
  %v1000 = vadd.f32 %v818, %v982
  %s1001 = scalar_lea.vmem %s240, 8 [#allocation2]
  %v1002 = vld [vmem:[%s1001] ss:$2 sm:$0xff]
  %s1003 = scalar_lea.vmem %s240, 72 [#allocation2]
  %v1004 = vld [vmem:[%s1003] ss:$2 sm:$0xff]
  %s1005 = scalar_lea.vmem %s240, 136 [#allocation2]
  %v1006 = vld [vmem:[%s1005] ss:$2 sm:$0xff]
  %s1007 = scalar_lea.vmem %s240, 200 [#allocation2]
  %v1008 = vld [vmem:[%s1007] ss:$2 sm:$0xff]
  %s1009 = scalar_lea.vmem %s240, 264 [#allocation2]
  %v1010 = vld [vmem:[%s1009] ss:$2 sm:$0xff]
  %s1011 = scalar_lea.vmem %s240, 328 [#allocation2]
  %v1012 = vld [vmem:[%s1011] ss:$2 sm:$0xff]
  %s1013 = scalar_lea.vmem %s240, 392 [#allocation2]
  %v1014 = vld [vmem:[%s1013] ss:$2 sm:$0xff]
  %s1015 = scalar_lea.vmem %s240, 456 [#allocation2]
  %v1016 = vld [vmem:[%s1015] ss:$2 sm:$0xff]
  %s1017 = scalar_lea.vmem %s240, 584 [#allocation2]
  %v1018 = vld [vmem:[%s1017] ss:$2 sm:$0xff]
  %s1019 = scalar_lea.vmem %s240, 648 [#allocation2]
  %v1020 = vld [vmem:[%s1019] ss:$2 sm:$0xff]
  %s1021 = scalar_lea.vmem %s240, 712 [#allocation2]
  %v1022 = vld [vmem:[%s1021] ss:$2 sm:$0xff]
  %s1023 = scalar_lea.vmem %s240, 776 [#allocation2]
  %v1024 = vld [vmem:[%s1023] ss:$2 sm:$0xff]
  %s1025 = scalar_lea.vmem %s240, 840 [#allocation2]
  %v1026 = vld [vmem:[%s1025] ss:$2 sm:$0xff]
  %s1027 = scalar_lea.vmem %s240, 904 [#allocation2]
  %v1028 = vld [vmem:[%s1027] ss:$2 sm:$0xff]
  %s1029 = scalar_lea.vmem %s240, 968 [#allocation2]
  %v1030 = vld [vmem:[%s1029] ss:$2 sm:$0xff]
  %s1031 = scalar_lea.vmem %s240, 1032 [#allocation2]
  %v1032 = vld [vmem:[%s1031] ss:$2 sm:$0xff]
  %v1033 = vpack.c.bf16 %v1004, %v1002
  %v1034 = vpack.c.bf16 %v1008, %v1006
  %v1035 = vpack.c.bf16 %v1012, %v1010
  %v1036 = vpack.c.bf16 %v1016, %v1014
  %v1037 = vpack.c.bf16 %v1020, %v1018
  %v1038 = vpack.c.bf16 %v1024, %v1022
  %v1039 = vpack.c.bf16 %v1028, %v1026
  %v1040 = vpack.c.bf16 %v1032, %v1030
  %s1041 = scalar_lea.vmem %s1, 16
  %v1042 = vld [vmem:[%s1041] sm:$0xf]
  %v1044 = vsel %vm21, %v1033, 0
  %v1047 = vsel %vm21, %v1034, 0
  %v1050 = vsel %vm21, %v1035, 0
  %v1053 = vsel %vm21, %v1036, 0
  %v1056 = vsel %vm21, %v1037, 0
  %v1059 = vsel %vm21, %v1038, 0
  %v1062 = vsel %vm21, %v1039, 0
  %v1065 = vsel %vm21, %v1040, 0
  %v1068 = vsel %vm412, %v1042, 0
  %1070 = vmatprep.subr.bf16.mxu0 0
  %1071 = vmatpush1.bf16.msra.mxu0 0
  %1072 = vmatprep.subr.bf16.mxu0 0
  %1073 = vmatpush1.bf16.msra.mxu0 0
  %1074 = vmatprep.subr.bf16.mxu0 0
  %1075 = vmatpush1.bf16.msra.mxu0 0
  %1076 = vmatprep.subr.bf16.mxu0 0
  %1077 = vmatpush1.bf16.msra.mxu0 0
  %1078 = vmatprep.subr.bf16.mxu0 0
  %1079 = vmatpush1.bf16.msra.mxu0 0
  %1080 = vmatprep.subr.bf16.mxu0 0
  %1081 = vmatpush1.bf16.msra.mxu0 0
  %1082 = vmatprep.subr.bf16.mxu0 0
  %1083 = vmatpush1.bf16.msra.mxu0 0
  %1084 = vmatprep.subr.bf16.mxu0 0
  %1085 = vmatpush1.bf16.msra.mxu0 %v1068
  %1086 = vmatprep.subr.bf16.mxu0 0
  %1087 = vmatpush2.bf16.msra.mxu0 0
  %1088 = vmatprep.subr.bf16.mxu0 0
  %1089 = vmatpush2.bf16.msra.mxu0 0
  %1090 = vmatprep.subr.bf16.mxu0 0
  %1091 = vmatpush2.bf16.msra.mxu0 0
  %1092 = vmatprep.subr.bf16.mxu0 0
  %1093 = vmatpush2.bf16.msra.mxu0 0
  %1094 = vmatprep.subr.bf16.mxu0 0
  %1095 = vmatpush2.bf16.msra.mxu0 0
  %1096 = vmatprep.subr.bf16.mxu0 0
  %1097 = vmatpush2.bf16.msra.mxu0 0
  %1098 = vmatprep.subr.bf16.mxu0 0
  %1099 = vmatpush2.bf16.msra.mxu0 0
  %1100 = vmatprep.subr.bf16.mxu0 0
  %1101 = vmatpush2.bf16.msra.mxu0 0
  %1102 = vmatprep.mubr.bf16.mxu0 0
  %1103 = vmatmul.mubr.bf16.gmra.mxu0 %v1044
  %v1104 = vpop.f32.mrf.mxu0
  %v1105 = vadd.f32 0.0, %v1104
  %v1106 = vpop.f32.mrf.mxu0
  %v1107 = vpop.f32.mrf.mxu0
  %v1108 = vadd.f32 0.0, %v1107
  %v1109 = vpop.f32.mrf.mxu0
  %1110 = vmatprep.mubr.bf16.mxu0 0
  %1111 = vmatmul.mubr.bf16.gmra.mxu0 %v1047
  %v1112 = vpop.f32.mrf.mxu0
  %v1113 = vadd.f32 0.0, %v1112
  %v1114 = vpop.f32.mrf.mxu0
  %v1115 = vpop.f32.mrf.mxu0
  %v1116 = vadd.f32 0.0, %v1115
  %v1117 = vpop.f32.mrf.mxu0
  %1118 = vmatprep.mubr.bf16.mxu0 0
  %1119 = vmatmul.mubr.bf16.gmra.mxu0 %v1050
  %v1120 = vpop.f32.mrf.mxu0
  %v1121 = vadd.f32 0.0, %v1120
  %v1122 = vpop.f32.mrf.mxu0
  %v1123 = vpop.f32.mrf.mxu0
  %v1124 = vadd.f32 0.0, %v1123
  %v1125 = vpop.f32.mrf.mxu0
  %1126 = vmatprep.mubr.bf16.mxu0 0
  %1127 = vmatmul.mubr.bf16.gmra.mxu0 %v1053
  %v1128 = vpop.f32.mrf.mxu0
  %v1129 = vadd.f32 0.0, %v1128
  %v1130 = vpop.f32.mrf.mxu0
  %v1131 = vpop.f32.mrf.mxu0
  %v1132 = vadd.f32 0.0, %v1131
  %v1133 = vpop.f32.mrf.mxu0
  %1134 = vmatprep.mubr.bf16.mxu0 0
  %1135 = vmatmul.mubr.bf16.gmra.mxu0 %v1056
  %v1136 = vpop.f32.mrf.mxu0
  %v1137 = vadd.f32 0.0, %v1136
  %v1138 = vpop.f32.mrf.mxu0
  %v1139 = vpop.f32.mrf.mxu0
  %v1140 = vadd.f32 0.0, %v1139
  %v1141 = vpop.f32.mrf.mxu0
  %1142 = vmatprep.mubr.bf16.mxu0 0
  %1143 = vmatmul.mubr.bf16.gmra.mxu0 %v1059
  %v1144 = vpop.f32.mrf.mxu0
  %v1145 = vadd.f32 0.0, %v1144
  %v1146 = vpop.f32.mrf.mxu0
  %v1147 = vpop.f32.mrf.mxu0
  %v1148 = vadd.f32 0.0, %v1147
  %v1149 = vpop.f32.mrf.mxu0
  %1150 = vmatprep.mubr.bf16.mxu0 0
  %1151 = vmatmul.mubr.bf16.gmra.mxu0 %v1062
  %v1152 = vpop.f32.mrf.mxu0
  %v1153 = vadd.f32 0.0, %v1152
  %v1154 = vpop.f32.mrf.mxu0
  %v1155 = vpop.f32.mrf.mxu0
  %v1156 = vadd.f32 0.0, %v1155
  %v1157 = vpop.f32.mrf.mxu0
  %1158 = vmatprep.mubr.bf16.mxu0 0
  %1159 = vmatmul.mubr.bf16.gmra.mxu0 %v1065
  %v1160 = vpop.f32.mrf.mxu0
  %v1161 = vadd.f32 0.0, %v1160
  %v1162 = vpop.f32.mrf.mxu0
  %v1163 = vpop.f32.mrf.mxu0
  %v1164 = vadd.f32 0.0, %v1163
  %v1165 = vpop.f32.mrf.mxu0
  %1166 = vdwg.mxu0
  %v1167 = vadd.f32 %v985, %v1105
  %v1168 = vadd.f32 %v986, %v1108
  %v1169 = vadd.f32 %v987, %v1113
  %v1170 = vadd.f32 %v988, %v1116
  %v1171 = vadd.f32 %v989, %v1121
  %v1172 = vadd.f32 %v990, %v1124
  %v1173 = vadd.f32 %v991, %v1129
  %v1174 = vadd.f32 %v992, %v1132
  %v1175 = vadd.f32 %v993, %v1137
  %v1176 = vadd.f32 %v994, %v1140
  %v1177 = vadd.f32 %v995, %v1145
  %v1178 = vadd.f32 %v996, %v1148
  %v1179 = vadd.f32 %v997, %v1153
  %v1180 = vadd.f32 %v998, %v1156
  %v1181 = vadd.f32 %v999, %v1161
  %v1182 = vadd.f32 %v1000, %v1164
  %s1183 = scalar_lea.vmem %s240, 9 [#allocation2]
  %v1184 = vld [vmem:[%s1183] ss:$2 sm:$0xff]
  %s1185 = scalar_lea.vmem %s240, 73 [#allocation2]
  %v1186 = vld [vmem:[%s1185] ss:$2 sm:$0xff]
  %s1187 = scalar_lea.vmem %s240, 137 [#allocation2]
  %v1188 = vld [vmem:[%s1187] ss:$2 sm:$0xff]
  %s1189 = scalar_lea.vmem %s240, 201 [#allocation2]
  %v1190 = vld [vmem:[%s1189] ss:$2 sm:$0xff]
  %s1191 = scalar_lea.vmem %s240, 265 [#allocation2]
  %v1192 = vld [vmem:[%s1191] ss:$2 sm:$0xff]
  %s1193 = scalar_lea.vmem %s240, 329 [#allocation2]
  %v1194 = vld [vmem:[%s1193] ss:$2 sm:$0xff]
  %s1195 = scalar_lea.vmem %s240, 393 [#allocation2]
  %v1196 = vld [vmem:[%s1195] ss:$2 sm:$0xff]
  %s1197 = scalar_lea.vmem %s240, 457 [#allocation2]
  %v1198 = vld [vmem:[%s1197] ss:$2 sm:$0xff]
  %s1199 = scalar_lea.vmem %s240, 585 [#allocation2]
  %v1200 = vld [vmem:[%s1199] ss:$2 sm:$0xff]
  %s1201 = scalar_lea.vmem %s240, 649 [#allocation2]
  %v1202 = vld [vmem:[%s1201] ss:$2 sm:$0xff]
  %s1203 = scalar_lea.vmem %s240, 713 [#allocation2]
  %v1204 = vld [vmem:[%s1203] ss:$2 sm:$0xff]
  %s1205 = scalar_lea.vmem %s240, 777 [#allocation2]
  %v1206 = vld [vmem:[%s1205] ss:$2 sm:$0xff]
  %s1207 = scalar_lea.vmem %s240, 841 [#allocation2]
  %v1208 = vld [vmem:[%s1207] ss:$2 sm:$0xff]
  %s1209 = scalar_lea.vmem %s240, 905 [#allocation2]
  %v1210 = vld [vmem:[%s1209] ss:$2 sm:$0xff]
  %s1211 = scalar_lea.vmem %s240, 969 [#allocation2]
  %v1212 = vld [vmem:[%s1211] ss:$2 sm:$0xff]
  %s1213 = scalar_lea.vmem %s240, 1033 [#allocation2]
  %v1214 = vld [vmem:[%s1213] ss:$2 sm:$0xff]
  %v1215 = vpack.c.bf16 %v1186, %v1184
  %v1216 = vpack.c.bf16 %v1190, %v1188
  %v1217 = vpack.c.bf16 %v1194, %v1192
  %v1218 = vpack.c.bf16 %v1198, %v1196
  %v1219 = vpack.c.bf16 %v1202, %v1200
  %v1220 = vpack.c.bf16 %v1206, %v1204
  %v1221 = vpack.c.bf16 %v1210, %v1208
  %v1222 = vpack.c.bf16 %v1214, %v1212
  %s1223 = scalar_lea.vmem %s1, 20
  %v1224 = vld [vmem:[%s1223] sm:$0xf]
  %v1226 = vsel %vm21, %v1215, 0
  %v1229 = vsel %vm21, %v1216, 0
  %v1232 = vsel %vm21, %v1217, 0
  %v1235 = vsel %vm21, %v1218, 0
  %v1238 = vsel %vm21, %v1219, 0
  %v1241 = vsel %vm21, %v1220, 0
  %v1244 = vsel %vm21, %v1221, 0
  %v1247 = vsel %vm21, %v1222, 0
  %v1250 = vsel %vm412, %v1224, 0
  %1252 = vmatprep.subr.bf16.mxu0 0
  %1253 = vmatpush1.bf16.msra.mxu0 0
  %1254 = vmatprep.subr.bf16.mxu0 0
  %1255 = vmatpush1.bf16.msra.mxu0 0
  %1256 = vmatprep.subr.bf16.mxu0 0
  %1257 = vmatpush1.bf16.msra.mxu0 0
  %1258 = vmatprep.subr.bf16.mxu0 0
  %1259 = vmatpush1.bf16.msra.mxu0 0
  %1260 = vmatprep.subr.bf16.mxu0 0
  %1261 = vmatpush1.bf16.msra.mxu0 0
  %1262 = vmatprep.subr.bf16.mxu0 0
  %1263 = vmatpush1.bf16.msra.mxu0 0
  %1264 = vmatprep.subr.bf16.mxu0 0
  %1265 = vmatpush1.bf16.msra.mxu0 0
  %1266 = vmatprep.subr.bf16.mxu0 0
  %1267 = vmatpush1.bf16.msra.mxu0 %v1250
  %1268 = vmatprep.subr.bf16.mxu0 0
  %1269 = vmatpush2.bf16.msra.mxu0 0
  %1270 = vmatprep.subr.bf16.mxu0 0
  %1271 = vmatpush2.bf16.msra.mxu0 0
  %1272 = vmatprep.subr.bf16.mxu0 0
  %1273 = vmatpush2.bf16.msra.mxu0 0
  %1274 = vmatprep.subr.bf16.mxu0 0
  %1275 = vmatpush2.bf16.msra.mxu0 0
  %1276 = vmatprep.subr.bf16.mxu0 0
  %1277 = vmatpush2.bf16.msra.mxu0 0
  %1278 = vmatprep.subr.bf16.mxu0 0
  %1279 = vmatpush2.bf16.msra.mxu0 0
  %1280 = vmatprep.subr.bf16.mxu0 0
  %1281 = vmatpush2.bf16.msra.mxu0 0
  %1282 = vmatprep.subr.bf16.mxu0 0
  %1283 = vmatpush2.bf16.msra.mxu0 0
  %1284 = vmatprep.mubr.bf16.mxu0 0
  %1285 = vmatmul.mubr.bf16.gmra.mxu0 %v1226
  %v1286 = vpop.f32.mrf.mxu0
  %v1287 = vadd.f32 0.0, %v1286
  %v1288 = vpop.f32.mrf.mxu0
  %v1289 = vpop.f32.mrf.mxu0
  %v1290 = vadd.f32 0.0, %v1289
  %v1291 = vpop.f32.mrf.mxu0
  %1292 = vmatprep.mubr.bf16.mxu0 0
  %1293 = vmatmul.mubr.bf16.gmra.mxu0 %v1229
  %v1294 = vpop.f32.mrf.mxu0
  %v1295 = vadd.f32 0.0, %v1294
  %v1296 = vpop.f32.mrf.mxu0
  %v1297 = vpop.f32.mrf.mxu0
  %v1298 = vadd.f32 0.0, %v1297
  %v1299 = vpop.f32.mrf.mxu0
  %1300 = vmatprep.mubr.bf16.mxu0 0
  %1301 = vmatmul.mubr.bf16.gmra.mxu0 %v1232
  %v1302 = vpop.f32.mrf.mxu0
  %v1303 = vadd.f32 0.0, %v1302
  %v1304 = vpop.f32.mrf.mxu0
  %v1305 = vpop.f32.mrf.mxu0
  %v1306 = vadd.f32 0.0, %v1305
  %v1307 = vpop.f32.mrf.mxu0
  %1308 = vmatprep.mubr.bf16.mxu0 0
  %1309 = vmatmul.mubr.bf16.gmra.mxu0 %v1235
  %v1310 = vpop.f32.mrf.mxu0
  %v1311 = vadd.f32 0.0, %v1310
  %v1312 = vpop.f32.mrf.mxu0
  %v1313 = vpop.f32.mrf.mxu0
  %v1314 = vadd.f32 0.0, %v1313
  %v1315 = vpop.f32.mrf.mxu0
  %1316 = vmatprep.mubr.bf16.mxu0 0
  %1317 = vmatmul.mubr.bf16.gmra.mxu0 %v1238
  %v1318 = vpop.f32.mrf.mxu0
  %v1319 = vadd.f32 0.0, %v1318
  %v1320 = vpop.f32.mrf.mxu0
  %v1321 = vpop.f32.mrf.mxu0
  %v1322 = vadd.f32 0.0, %v1321
  %v1323 = vpop.f32.mrf.mxu0
  %1324 = vmatprep.mubr.bf16.mxu0 0
  %1325 = vmatmul.mubr.bf16.gmra.mxu0 %v1241
  %v1326 = vpop.f32.mrf.mxu0
  %v1327 = vadd.f32 0.0, %v1326
  %v1328 = vpop.f32.mrf.mxu0
  %v1329 = vpop.f32.mrf.mxu0
  %v1330 = vadd.f32 0.0, %v1329
  %v1331 = vpop.f32.mrf.mxu0
  %1332 = vmatprep.mubr.bf16.mxu0 0
  %1333 = vmatmul.mubr.bf16.gmra.mxu0 %v1244
  %v1334 = vpop.f32.mrf.mxu0
  %v1335 = vadd.f32 0.0, %v1334
  %v1336 = vpop.f32.mrf.mxu0
  %v1337 = vpop.f32.mrf.mxu0
  %v1338 = vadd.f32 0.0, %v1337
  %v1339 = vpop.f32.mrf.mxu0
  %1340 = vmatprep.mubr.bf16.mxu0 0
  %1341 = vmatmul.mubr.bf16.gmra.mxu0 %v1247
  %v1342 = vpop.f32.mrf.mxu0
  %v1343 = vadd.f32 0.0, %v1342
  %v1344 = vpop.f32.mrf.mxu0
  %v1345 = vpop.f32.mrf.mxu0
  %v1346 = vadd.f32 0.0, %v1345
  %v1347 = vpop.f32.mrf.mxu0
  %1348 = vdwg.mxu0
  %v1349 = vadd.f32 %v1167, %v1287
  %v1350 = vadd.f32 %v1168, %v1290
  %v1351 = vadd.f32 %v1169, %v1295
  %v1352 = vadd.f32 %v1170, %v1298
  %v1353 = vadd.f32 %v1171, %v1303
  %v1354 = vadd.f32 %v1172, %v1306
  %v1355 = vadd.f32 %v1173, %v1311
  %v1356 = vadd.f32 %v1174, %v1314
  %v1357 = vadd.f32 %v1175, %v1319
  %v1358 = vadd.f32 %v1176, %v1322
  %v1359 = vadd.f32 %v1177, %v1327
  %v1360 = vadd.f32 %v1178, %v1330
  %v1361 = vadd.f32 %v1179, %v1335
  %v1362 = vadd.f32 %v1180, %v1338
  %v1363 = vadd.f32 %v1181, %v1343
  %v1364 = vadd.f32 %v1182, %v1346
  %s1365 = scalar_lea.vmem [#allocation2], 64
  %s1366 = scalar_lea.vmem %s1365, 7 [#allocation2]
  %v1367 = vld [vmem:[%s1366] ss:$2 sm:$0xff]
  %s1368 = scalar_lea.vmem %s1365, 71 [#allocation2]
  %v1369 = vld [vmem:[%s1368] ss:$2 sm:$0xff]
  %s1370 = scalar_lea.vmem %s1365, 135 [#allocation2]
  %v1371 = vld [vmem:[%s1370] ss:$2 sm:$0xff]
  %s1372 = scalar_lea.vmem %s1365, 199 [#allocation2]
  %v1373 = vld [vmem:[%s1372] ss:$2 sm:$0xff]
  %s1374 = scalar_lea.vmem %s1365, 263 [#allocation2]
  %v1375 = vld [vmem:[%s1374] ss:$2 sm:$0xff]
  %s1376 = scalar_lea.vmem %s1365, 327 [#allocation2]
  %v1377 = vld [vmem:[%s1376] ss:$2 sm:$0xff]
  %s1378 = scalar_lea.vmem %s1365, 391 [#allocation2]
  %v1379 = vld [vmem:[%s1378] ss:$2 sm:$0xff]
  %s1380 = scalar_lea.vmem %s1365, 455 [#allocation2]
  %v1381 = vld [vmem:[%s1380] ss:$2 sm:$0xff]
  %s1382 = scalar_lea.vmem %s1365, 583 [#allocation2]
  %v1383 = vld [vmem:[%s1382] ss:$2 sm:$0xff]
  %s1384 = scalar_lea.vmem %s1365, 647 [#allocation2]
  %v1385 = vld [vmem:[%s1384] ss:$2 sm:$0xff]
  %s1386 = scalar_lea.vmem %s1365, 711 [#allocation2]
  %v1387 = vld [vmem:[%s1386] ss:$2 sm:$0xff]
  %s1388 = scalar_lea.vmem %s1365, 775 [#allocation2]
  %v1389 = vld [vmem:[%s1388] ss:$2 sm:$0xff]
  %s1390 = scalar_lea.vmem %s1365, 839 [#allocation2]
  %v1391 = vld [vmem:[%s1390] ss:$2 sm:$0xff]
  %s1392 = scalar_lea.vmem %s1365, 903 [#allocation2]
  %v1393 = vld [vmem:[%s1392] ss:$2 sm:$0xff]
  %s1394 = scalar_lea.vmem %s1365, 967 [#allocation2]
  %v1395 = vld [vmem:[%s1394] ss:$2 sm:$0xff]
  %s1396 = scalar_lea.vmem %s1365, 1031 [#allocation2]
  %v1397 = vld [vmem:[%s1396] ss:$2 sm:$0xff]
  %v1398 = vpack.c.bf16 %v1369, %v1367
  %v1399 = vpack.c.bf16 %v1373, %v1371
  %v1400 = vpack.c.bf16 %v1377, %v1375
  %v1401 = vpack.c.bf16 %v1381, %v1379
  %v1402 = vpack.c.bf16 %v1385, %v1383
  %v1403 = vpack.c.bf16 %v1389, %v1387
  %v1404 = vpack.c.bf16 %v1393, %v1391
  %v1405 = vpack.c.bf16 %v1397, %v1395
  %s1406 = scalar_lea.vmem %s1, 24
  %v1407 = vld [vmem:[%s1406] sm:$0xf]
  %v1409 = vsel %vm21, %v1398, 0
  %v1412 = vsel %vm21, %v1399, 0
  %v1415 = vsel %vm21, %v1400, 0
  %v1418 = vsel %vm21, %v1401, 0
  %v1421 = vsel %vm21, %v1402, 0
  %v1424 = vsel %vm21, %v1403, 0
  %v1427 = vsel %vm21, %v1404, 0
  %v1430 = vsel %vm21, %v1405, 0
  %v1433 = vsel %vm412, %v1407, 0
  %1435 = vmatprep.subr.bf16.mxu0 0
  %1436 = vmatpush1.bf16.msra.mxu0 0
  %1437 = vmatprep.subr.bf16.mxu0 0
  %1438 = vmatpush1.bf16.msra.mxu0 0
  %1439 = vmatprep.subr.bf16.mxu0 0
  %1440 = vmatpush1.bf16.msra.mxu0 0
  %1441 = vmatprep.subr.bf16.mxu0 0
  %1442 = vmatpush1.bf16.msra.mxu0 0
  %1443 = vmatprep.subr.bf16.mxu0 0
  %1444 = vmatpush1.bf16.msra.mxu0 0
  %1445 = vmatprep.subr.bf16.mxu0 0
  %1446 = vmatpush1.bf16.msra.mxu0 0
  %1447 = vmatprep.subr.bf16.mxu0 0
  %1448 = vmatpush1.bf16.msra.mxu0 0
  %1449 = vmatprep.subr.bf16.mxu0 0
  %1450 = vmatpush1.bf16.msra.mxu0 %v1433
  %1451 = vmatprep.subr.bf16.mxu0 0
  %1452 = vmatpush2.bf16.msra.mxu0 0
  %1453 = vmatprep.subr.bf16.mxu0 0
  %1454 = vmatpush2.bf16.msra.mxu0 0
  %1455 = vmatprep.subr.bf16.mxu0 0
  %1456 = vmatpush2.bf16.msra.mxu0 0
  %1457 = vmatprep.subr.bf16.mxu0 0
  %1458 = vmatpush2.bf16.msra.mxu0 0
  %1459 = vmatprep.subr.bf16.mxu0 0
  %1460 = vmatpush2.bf16.msra.mxu0 0
  %1461 = vmatprep.subr.bf16.mxu0 0
  %1462 = vmatpush2.bf16.msra.mxu0 0
  %1463 = vmatprep.subr.bf16.mxu0 0
  %1464 = vmatpush2.bf16.msra.mxu0 0
  %1465 = vmatprep.subr.bf16.mxu0 0
  %1466 = vmatpush2.bf16.msra.mxu0 0
  %1467 = vmatprep.mubr.bf16.mxu0 0
  %1468 = vmatmul.mubr.bf16.gmra.mxu0 %v1409
  %v1469 = vpop.f32.mrf.mxu0
  %v1470 = vadd.f32 0.0, %v1469
  %v1471 = vpop.f32.mrf.mxu0
  %v1472 = vpop.f32.mrf.mxu0
  %v1473 = vadd.f32 0.0, %v1472
  %v1474 = vpop.f32.mrf.mxu0
  %1475 = vmatprep.mubr.bf16.mxu0 0
  %1476 = vmatmul.mubr.bf16.gmra.mxu0 %v1412
  %v1477 = vpop.f32.mrf.mxu0
  %v1478 = vadd.f32 0.0, %v1477
  %v1479 = vpop.f32.mrf.mxu0
  %v1480 = vpop.f32.mrf.mxu0
  %v1481 = vadd.f32 0.0, %v1480
  %v1482 = vpop.f32.mrf.mxu0
  %1483 = vmatprep.mubr.bf16.mxu0 0
  %1484 = vmatmul.mubr.bf16.gmra.mxu0 %v1415
  %v1485 = vpop.f32.mrf.mxu0
  %v1486 = vadd.f32 0.0, %v1485
  %v1487 = vpop.f32.mrf.mxu0
  %v1488 = vpop.f32.mrf.mxu0
  %v1489 = vadd.f32 0.0, %v1488
  %v1490 = vpop.f32.mrf.mxu0
  %1491 = vmatprep.mubr.bf16.mxu0 0
  %1492 = vmatmul.mubr.bf16.gmra.mxu0 %v1418
  %v1493 = vpop.f32.mrf.mxu0
  %v1494 = vadd.f32 0.0, %v1493
  %v1495 = vpop.f32.mrf.mxu0
  %v1496 = vpop.f32.mrf.mxu0
  %v1497 = vadd.f32 0.0, %v1496
  %v1498 = vpop.f32.mrf.mxu0
  %1499 = vmatprep.mubr.bf16.mxu0 0
  %1500 = vmatmul.mubr.bf16.gmra.mxu0 %v1421
  %v1501 = vpop.f32.mrf.mxu0
  %v1502 = vadd.f32 0.0, %v1501
  %v1503 = vpop.f32.mrf.mxu0
  %v1504 = vpop.f32.mrf.mxu0
  %v1505 = vadd.f32 0.0, %v1504
  %v1506 = vpop.f32.mrf.mxu0
  %1507 = vmatprep.mubr.bf16.mxu0 0
  %1508 = vmatmul.mubr.bf16.gmra.mxu0 %v1424
  %v1509 = vpop.f32.mrf.mxu0
  %v1510 = vadd.f32 0.0, %v1509
  %v1511 = vpop.f32.mrf.mxu0
  %v1512 = vpop.f32.mrf.mxu0
  %v1513 = vadd.f32 0.0, %v1512
  %v1514 = vpop.f32.mrf.mxu0
  %1515 = vmatprep.mubr.bf16.mxu0 0
  %1516 = vmatmul.mubr.bf16.gmra.mxu0 %v1427
  %v1517 = vpop.f32.mrf.mxu0
  %v1518 = vadd.f32 0.0, %v1517
  %v1519 = vpop.f32.mrf.mxu0
  %v1520 = vpop.f32.mrf.mxu0
  %v1521 = vadd.f32 0.0, %v1520
  %v1522 = vpop.f32.mrf.mxu0
  %1523 = vmatprep.mubr.bf16.mxu0 0
  %1524 = vmatmul.mubr.bf16.gmra.mxu0 %v1430
  %v1525 = vpop.f32.mrf.mxu0
  %v1526 = vadd.f32 0.0, %v1525
  %v1527 = vpop.f32.mrf.mxu0
  %v1528 = vpop.f32.mrf.mxu0
  %v1529 = vadd.f32 0.0, %v1528
  %v1530 = vpop.f32.mrf.mxu0
  %1531 = vdwg.mxu0
  %v1532 = vadd.f32 %v1349, %v1470
  %v1533 = vadd.f32 %v1350, %v1473
  %v1534 = vadd.f32 %v1351, %v1478
  %v1535 = vadd.f32 %v1352, %v1481
  %v1536 = vadd.f32 %v1353, %v1486
  %v1537 = vadd.f32 %v1354, %v1489
  %v1538 = vadd.f32 %v1355, %v1494
  %v1539 = vadd.f32 %v1356, %v1497
  %v1540 = vadd.f32 %v1357, %v1502
  %v1541 = vadd.f32 %v1358, %v1505
  %v1542 = vadd.f32 %v1359, %v1510
  %v1543 = vadd.f32 %v1360, %v1513
  %v1544 = vadd.f32 %v1361, %v1518
  %v1545 = vadd.f32 %v1362, %v1521
  %v1546 = vadd.f32 %v1363, %v1526
  %v1547 = vadd.f32 %v1364, %v1529
  %s1548 = scalar_lea.vmem %s1365, 8 [#allocation2]
  %v1549 = vld [vmem:[%s1548] ss:$2 sm:$0xff]
  %s1550 = scalar_lea.vmem %s1365, 72 [#allocation2]
  %v1551 = vld [vmem:[%s1550] ss:$2 sm:$0xff]
  %s1552 = scalar_lea.vmem %s1365, 136 [#allocation2]
  %v1553 = vld [vmem:[%s1552] ss:$2 sm:$0xff]
  %s1554 = scalar_lea.vmem %s1365, 200 [#allocation2]
  %v1555 = vld [vmem:[%s1554] ss:$2 sm:$0xff]
  %s1556 = scalar_lea.vmem %s1365, 264 [#allocation2]
  %v1557 = vld [vmem:[%s1556] ss:$2 sm:$0xff]
  %s1558 = scalar_lea.vmem %s1365, 328 [#allocation2]
  %v1559 = vld [vmem:[%s1558] ss:$2 sm:$0xff]
  %s1560 = scalar_lea.vmem %s1365, 392 [#allocation2]
  %v1561 = vld [vmem:[%s1560] ss:$2 sm:$0xff]
  %s1562 = scalar_lea.vmem %s1365, 456 [#allocation2]
  %v1563 = vld [vmem:[%s1562] ss:$2 sm:$0xff]
  %s1564 = scalar_lea.vmem %s1365, 584 [#allocation2]
  %v1565 = vld [vmem:[%s1564] ss:$2 sm:$0xff]
  %s1566 = scalar_lea.vmem %s1365, 648 [#allocation2]
  %v1567 = vld [vmem:[%s1566] ss:$2 sm:$0xff]
  %s1568 = scalar_lea.vmem %s1365, 712 [#allocation2]
  %v1569 = vld [vmem:[%s1568] ss:$2 sm:$0xff]
  %s1570 = scalar_lea.vmem %s1365, 776 [#allocation2]
  %v1571 = vld [vmem:[%s1570] ss:$2 sm:$0xff]
  %s1572 = scalar_lea.vmem %s1365, 840 [#allocation2]
  %v1573 = vld [vmem:[%s1572] ss:$2 sm:$0xff]
  %s1574 = scalar_lea.vmem %s1365, 904 [#allocation2]
  %v1575 = vld [vmem:[%s1574] ss:$2 sm:$0xff]
  %s1576 = scalar_lea.vmem %s1365, 968 [#allocation2]
  %v1577 = vld [vmem:[%s1576] ss:$2 sm:$0xff]
  %s1578 = scalar_lea.vmem %s1365, 1032 [#allocation2]
  %v1579 = vld [vmem:[%s1578] ss:$2 sm:$0xff]
  %v1580 = vpack.c.bf16 %v1551, %v1549
  %v1581 = vpack.c.bf16 %v1555, %v1553
  %v1582 = vpack.c.bf16 %v1559, %v1557
  %v1583 = vpack.c.bf16 %v1563, %v1561
  %v1584 = vpack.c.bf16 %v1567, %v1565
  %v1585 = vpack.c.bf16 %v1571, %v1569
  %v1586 = vpack.c.bf16 %v1575, %v1573
  %v1587 = vpack.c.bf16 %v1579, %v1577
  %s1588 = scalar_lea.vmem %s1, 28
  %v1589 = vld [vmem:[%s1588] sm:$0xf]
  %v1591 = vsel %vm21, %v1580, 0
  %v1594 = vsel %vm21, %v1581, 0
  %v1597 = vsel %vm21, %v1582, 0
  %v1600 = vsel %vm21, %v1583, 0
  %v1603 = vsel %vm21, %v1584, 0
  %v1606 = vsel %vm21, %v1585, 0
  %v1609 = vsel %vm21, %v1586, 0
  %v1612 = vsel %vm21, %v1587, 0
  %v1615 = vsel %vm412, %v1589, 0
  %1617 = vmatprep.subr.bf16.mxu0 0
  %1618 = vmatpush1.bf16.msra.mxu0 0
  %1619 = vmatprep.subr.bf16.mxu0 0
  %1620 = vmatpush1.bf16.msra.mxu0 0
  %1621 = vmatprep.subr.bf16.mxu0 0
  %1622 = vmatpush1.bf16.msra.mxu0 0
  %1623 = vmatprep.subr.bf16.mxu0 0
  %1624 = vmatpush1.bf16.msra.mxu0 0
  %1625 = vmatprep.subr.bf16.mxu0 0
  %1626 = vmatpush1.bf16.msra.mxu0 0
  %1627 = vmatprep.subr.bf16.mxu0 0
  %1628 = vmatpush1.bf16.msra.mxu0 0
  %1629 = vmatprep.subr.bf16.mxu0 0
  %1630 = vmatpush1.bf16.msra.mxu0 0
  %1631 = vmatprep.subr.bf16.mxu0 0
  %1632 = vmatpush1.bf16.msra.mxu0 %v1615
  %1633 = vmatprep.subr.bf16.mxu0 0
  %1634 = vmatpush2.bf16.msra.mxu0 0
  %1635 = vmatprep.subr.bf16.mxu0 0
  %1636 = vmatpush2.bf16.msra.mxu0 0
  %1637 = vmatprep.subr.bf16.mxu0 0
  %1638 = vmatpush2.bf16.msra.mxu0 0
  %1639 = vmatprep.subr.bf16.mxu0 0
  %1640 = vmatpush2.bf16.msra.mxu0 0
  %1641 = vmatprep.subr.bf16.mxu0 0
  %1642 = vmatpush2.bf16.msra.mxu0 0
  %1643 = vmatprep.subr.bf16.mxu0 0
  %1644 = vmatpush2.bf16.msra.mxu0 0
  %1645 = vmatprep.subr.bf16.mxu0 0
  %1646 = vmatpush2.bf16.msra.mxu0 0
  %1647 = vmatprep.subr.bf16.mxu0 0
  %1648 = vmatpush2.bf16.msra.mxu0 0
  %1649 = vmatprep.mubr.bf16.mxu0 0
  %1650 = vmatmul.mubr.bf16.gmra.mxu0 %v1591
  %v1651 = vpop.f32.mrf.mxu0
  %v1652 = vadd.f32 0.0, %v1651
  %v1653 = vpop.f32.mrf.mxu0
  %v1654 = vpop.f32.mrf.mxu0
  %v1655 = vadd.f32 0.0, %v1654
  %v1656 = vpop.f32.mrf.mxu0
  %1657 = vmatprep.mubr.bf16.mxu0 0
  %1658 = vmatmul.mubr.bf16.gmra.mxu0 %v1594
  %v1659 = vpop.f32.mrf.mxu0
  %v1660 = vadd.f32 0.0, %v1659
  %v1661 = vpop.f32.mrf.mxu0
  %v1662 = vpop.f32.mrf.mxu0
  %v1663 = vadd.f32 0.0, %v1662
  %v1664 = vpop.f32.mrf.mxu0
  %1665 = vmatprep.mubr.bf16.mxu0 0
  %1666 = vmatmul.mubr.bf16.gmra.mxu0 %v1597
  %v1667 = vpop.f32.mrf.mxu0
  %v1668 = vadd.f32 0.0, %v1667
  %v1669 = vpop.f32.mrf.mxu0
  %v1670 = vpop.f32.mrf.mxu0
  %v1671 = vadd.f32 0.0, %v1670
  %v1672 = vpop.f32.mrf.mxu0
  %1673 = vmatprep.mubr.bf16.mxu0 0
  %1674 = vmatmul.mubr.bf16.gmra.mxu0 %v1600
  %v1675 = vpop.f32.mrf.mxu0
  %v1676 = vadd.f32 0.0, %v1675
  %v1677 = vpop.f32.mrf.mxu0
  %v1678 = vpop.f32.mrf.mxu0
  %v1679 = vadd.f32 0.0, %v1678
  %v1680 = vpop.f32.mrf.mxu0
  %1681 = vmatprep.mubr.bf16.mxu0 0
  %1682 = vmatmul.mubr.bf16.gmra.mxu0 %v1603
  %v1683 = vpop.f32.mrf.mxu0
  %v1684 = vadd.f32 0.0, %v1683
  %v1685 = vpop.f32.mrf.mxu0
  %v1686 = vpop.f32.mrf.mxu0
  %v1687 = vadd.f32 0.0, %v1686
  %v1688 = vpop.f32.mrf.mxu0
  %1689 = vmatprep.mubr.bf16.mxu0 0
  %1690 = vmatmul.mubr.bf16.gmra.mxu0 %v1606
  %v1691 = vpop.f32.mrf.mxu0
  %v1692 = vadd.f32 0.0, %v1691
  %v1693 = vpop.f32.mrf.mxu0
  %v1694 = vpop.f32.mrf.mxu0
  %v1695 = vadd.f32 0.0, %v1694
  %v1696 = vpop.f32.mrf.mxu0
  %1697 = vmatprep.mubr.bf16.mxu0 0
  %1698 = vmatmul.mubr.bf16.gmra.mxu0 %v1609
  %v1699 = vpop.f32.mrf.mxu0
  %v1700 = vadd.f32 0.0, %v1699
  %v1701 = vpop.f32.mrf.mxu0
  %v1702 = vpop.f32.mrf.mxu0
  %v1703 = vadd.f32 0.0, %v1702
  %v1704 = vpop.f32.mrf.mxu0
  %1705 = vmatprep.mubr.bf16.mxu0 0
  %1706 = vmatmul.mubr.bf16.gmra.mxu0 %v1612
  %v1707 = vpop.f32.mrf.mxu0
  %v1708 = vadd.f32 0.0, %v1707
  %v1709 = vpop.f32.mrf.mxu0
  %v1710 = vpop.f32.mrf.mxu0
  %v1711 = vadd.f32 0.0, %v1710
  %v1712 = vpop.f32.mrf.mxu0
  %1713 = vdwg.mxu0
  %v1714 = vadd.f32 %v1532, %v1652
  %v1715 = vadd.f32 %v1533, %v1655
  %v1716 = vadd.f32 %v1534, %v1660
  %v1717 = vadd.f32 %v1535, %v1663
  %v1718 = vadd.f32 %v1536, %v1668
  %v1719 = vadd.f32 %v1537, %v1671
  %v1720 = vadd.f32 %v1538, %v1676
  %v1721 = vadd.f32 %v1539, %v1679
  %v1722 = vadd.f32 %v1540, %v1684
  %v1723 = vadd.f32 %v1541, %v1687
  %v1724 = vadd.f32 %v1542, %v1692
  %v1725 = vadd.f32 %v1543, %v1695
  %v1726 = vadd.f32 %v1544, %v1700
  %v1727 = vadd.f32 %v1545, %v1703
  %v1728 = vadd.f32 %v1546, %v1708
  %v1729 = vadd.f32 %v1547, %v1711
  %s1730 = scalar_lea.vmem %s1365, 9 [#allocation2]
  %v1731 = vld [vmem:[%s1730] ss:$2 sm:$0xff]
  %s1732 = scalar_lea.vmem %s1365, 73 [#allocation2]
  %v1733 = vld [vmem:[%s1732] ss:$2 sm:$0xff]
  %s1734 = scalar_lea.vmem %s1365, 137 [#allocation2]
  %v1735 = vld [vmem:[%s1734] ss:$2 sm:$0xff]
  %s1736 = scalar_lea.vmem %s1365, 201 [#allocation2]
  %v1737 = vld [vmem:[%s1736] ss:$2 sm:$0xff]
  %s1738 = scalar_lea.vmem %s1365, 265 [#allocation2]
  %v1739 = vld [vmem:[%s1738] ss:$2 sm:$0xff]
  %s1740 = scalar_lea.vmem %s1365, 329 [#allocation2]
  %v1741 = vld [vmem:[%s1740] ss:$2 sm:$0xff]
  %s1742 = scalar_lea.vmem %s1365, 393 [#allocation2]
  %v1743 = vld [vmem:[%s1742] ss:$2 sm:$0xff]
  %s1744 = scalar_lea.vmem %s1365, 457 [#allocation2]
  %v1745 = vld [vmem:[%s1744] ss:$2 sm:$0xff]
  %s1746 = scalar_lea.vmem %s1365, 585 [#allocation2]
  %v1747 = vld [vmem:[%s1746] ss:$2 sm:$0xff]
  %s1748 = scalar_lea.vmem %s1365, 649 [#allocation2]
  %v1749 = vld [vmem:[%s1748] ss:$2 sm:$0xff]
  %s1750 = scalar_lea.vmem %s1365, 713 [#allocation2]
  %v1751 = vld [vmem:[%s1750] ss:$2 sm:$0xff]
  %s1752 = scalar_lea.vmem %s1365, 777 [#allocation2]
  %v1753 = vld [vmem:[%s1752] ss:$2 sm:$0xff]
  %s1754 = scalar_lea.vmem %s1365, 841 [#allocation2]
  %v1755 = vld [vmem:[%s1754] ss:$2 sm:$0xff]
  %s1756 = scalar_lea.vmem %s1365, 905 [#allocation2]
  %v1757 = vld [vmem:[%s1756] ss:$2 sm:$0xff]
  %s1758 = scalar_lea.vmem %s1365, 969 [#allocation2]
  %v1759 = vld [vmem:[%s1758] ss:$2 sm:$0xff]
  %s1760 = scalar_lea.vmem %s1365, 1033 [#allocation2]
  %v1761 = vld [vmem:[%s1760] ss:$2 sm:$0xff]
  %v1762 = vpack.c.bf16 %v1733, %v1731
  %v1763 = vpack.c.bf16 %v1737, %v1735
  %v1764 = vpack.c.bf16 %v1741, %v1739
  %v1765 = vpack.c.bf16 %v1745, %v1743
  %v1766 = vpack.c.bf16 %v1749, %v1747
  %v1767 = vpack.c.bf16 %v1753, %v1751
  %v1768 = vpack.c.bf16 %v1757, %v1755
  %v1769 = vpack.c.bf16 %v1761, %v1759
  %s1770 = scalar_lea.vmem %s1, 32
  %v1771 = vld [vmem:[%s1770] sm:$0xf]
  %v1773 = vsel %vm21, %v1762, 0
  %v1776 = vsel %vm21, %v1763, 0
  %v1779 = vsel %vm21, %v1764, 0
  %v1782 = vsel %vm21, %v1765, 0
  %v1785 = vsel %vm21, %v1766, 0
  %v1788 = vsel %vm21, %v1767, 0
  %v1791 = vsel %vm21, %v1768, 0
  %v1794 = vsel %vm21, %v1769, 0
  %v1797 = vsel %vm412, %v1771, 0
  %1799 = vmatprep.subr.bf16.mxu0 0
  %1800 = vmatpush1.bf16.msra.mxu0 0
  %1801 = vmatprep.subr.bf16.mxu0 0
  %1802 = vmatpush1.bf16.msra.mxu0 0
  %1803 = vmatprep.subr.bf16.mxu0 0
  %1804 = vmatpush1.bf16.msra.mxu0 0
  %1805 = vmatprep.subr.bf16.mxu0 0
  %1806 = vmatpush1.bf16.msra.mxu0 0
  %1807 = vmatprep.subr.bf16.mxu0 0
  %1808 = vmatpush1.bf16.msra.mxu0 0
  %1809 = vmatprep.subr.bf16.mxu0 0
  %1810 = vmatpush1.bf16.msra.mxu0 0
  %1811 = vmatprep.subr.bf16.mxu0 0
  %1812 = vmatpush1.bf16.msra.mxu0 0
  %1813 = vmatprep.subr.bf16.mxu0 0
  %1814 = vmatpush1.bf16.msra.mxu0 %v1797
  %1815 = vmatprep.subr.bf16.mxu0 0
  %1816 = vmatpush2.bf16.msra.mxu0 0
  %1817 = vmatprep.subr.bf16.mxu0 0
  %1818 = vmatpush2.bf16.msra.mxu0 0
  %1819 = vmatprep.subr.bf16.mxu0 0
  %1820 = vmatpush2.bf16.msra.mxu0 0
  %1821 = vmatprep.subr.bf16.mxu0 0
  %1822 = vmatpush2.bf16.msra.mxu0 0
  %1823 = vmatprep.subr.bf16.mxu0 0
  %1824 = vmatpush2.bf16.msra.mxu0 0
  %1825 = vmatprep.subr.bf16.mxu0 0
  %1826 = vmatpush2.bf16.msra.mxu0 0
  %1827 = vmatprep.subr.bf16.mxu0 0
  %1828 = vmatpush2.bf16.msra.mxu0 0
  %1829 = vmatprep.subr.bf16.mxu0 0
  %1830 = vmatpush2.bf16.msra.mxu0 0
  %1831 = vmatprep.mubr.bf16.mxu0 0
  %1832 = vmatmul.mubr.bf16.gmra.mxu0 %v1773
  %v1833 = vpop.f32.mrf.mxu0
  %v1834 = vadd.f32 0.0, %v1833
  %v1835 = vpop.f32.mrf.mxu0
  %v1836 = vpop.f32.mrf.mxu0
  %v1837 = vadd.f32 0.0, %v1836
  %v1838 = vpop.f32.mrf.mxu0
  %1839 = vmatprep.mubr.bf16.mxu0 0
  %1840 = vmatmul.mubr.bf16.gmra.mxu0 %v1776
  %v1841 = vpop.f32.mrf.mxu0
  %v1842 = vadd.f32 0.0, %v1841
  %v1843 = vpop.f32.mrf.mxu0
  %v1844 = vpop.f32.mrf.mxu0
  %v1845 = vadd.f32 0.0, %v1844
  %v1846 = vpop.f32.mrf.mxu0
  %1847 = vmatprep.mubr.bf16.mxu0 0
  %1848 = vmatmul.mubr.bf16.gmra.mxu0 %v1779
  %v1849 = vpop.f32.mrf.mxu0
  %v1850 = vadd.f32 0.0, %v1849
  %v1851 = vpop.f32.mrf.mxu0
  %v1852 = vpop.f32.mrf.mxu0
  %v1853 = vadd.f32 0.0, %v1852
  %v1854 = vpop.f32.mrf.mxu0
  %1855 = vmatprep.mubr.bf16.mxu0 0
  %1856 = vmatmul.mubr.bf16.gmra.mxu0 %v1782
  %v1857 = vpop.f32.mrf.mxu0
  %v1858 = vadd.f32 0.0, %v1857
  %v1859 = vpop.f32.mrf.mxu0
  %v1860 = vpop.f32.mrf.mxu0
  %v1861 = vadd.f32 0.0, %v1860
  %v1862 = vpop.f32.mrf.mxu0
  %1863 = vmatprep.mubr.bf16.mxu0 0
  %1864 = vmatmul.mubr.bf16.gmra.mxu0 %v1785
  %v1865 = vpop.f32.mrf.mxu0
  %v1866 = vadd.f32 0.0, %v1865
  %v1867 = vpop.f32.mrf.mxu0
  %v1868 = vpop.f32.mrf.mxu0
  %v1869 = vadd.f32 0.0, %v1868
  %v1870 = vpop.f32.mrf.mxu0
  %1871 = vmatprep.mubr.bf16.mxu0 0
  %1872 = vmatmul.mubr.bf16.gmra.mxu0 %v1788
  %v1873 = vpop.f32.mrf.mxu0
  %v1874 = vadd.f32 0.0, %v1873
  %v1875 = vpop.f32.mrf.mxu0
  %v1876 = vpop.f32.mrf.mxu0
  %v1877 = vadd.f32 0.0, %v1876
  %v1878 = vpop.f32.mrf.mxu0
  %1879 = vmatprep.mubr.bf16.mxu0 0
  %1880 = vmatmul.mubr.bf16.gmra.mxu0 %v1791
  %v1881 = vpop.f32.mrf.mxu0
  %v1882 = vadd.f32 0.0, %v1881
  %v1883 = vpop.f32.mrf.mxu0
  %v1884 = vpop.f32.mrf.mxu0
  %v1885 = vadd.f32 0.0, %v1884
  %v1886 = vpop.f32.mrf.mxu0
  %1887 = vmatprep.mubr.bf16.mxu0 0
  %1888 = vmatmul.mubr.bf16.gmra.mxu0 %v1794
  %v1889 = vpop.f32.mrf.mxu0
  %v1890 = vadd.f32 0.0, %v1889
  %v1891 = vpop.f32.mrf.mxu0
  %v1892 = vpop.f32.mrf.mxu0
  %v1893 = vadd.f32 0.0, %v1892
  %v1894 = vpop.f32.mrf.mxu0
  %1895 = vdwg.mxu0
  %v1896 = vadd.f32 %v1714, %v1834
  %v1897 = vadd.f32 %v1715, %v1837
  %v1898 = vadd.f32 %v1716, %v1842
  %v1899 = vadd.f32 %v1717, %v1845
  %v1900 = vadd.f32 %v1718, %v1850
  %v1901 = vadd.f32 %v1719, %v1853
  %v1902 = vadd.f32 %v1720, %v1858
  %v1903 = vadd.f32 %v1721, %v1861
  %v1904 = vadd.f32 %v1722, %v1866
  %v1905 = vadd.f32 %v1723, %v1869
  %v1906 = vadd.f32 %v1724, %v1874
  %v1907 = vadd.f32 %v1725, %v1877
  %v1908 = vadd.f32 %v1726, %v1882
  %v1909 = vadd.f32 %v1727, %v1885
  %v1910 = vadd.f32 %v1728, %v1890
  %v1911 = vadd.f32 %v1729, %v1893
  %v1912 = vld [vmem:[%s2] sm:$0x1]
  %v1914 = vlaneseq
  %v1915 = vshrl.u32 %v1914, 7
  %v1916 = vsub.s32 0, %v1915
  %v1917 = vrot.slane %v1912, %v1916
  %v1919 = vadd.f32 %v1896, %v1917
  %v1920 = vadd.f32 %v1897, %v1917
  %v1921 = vadd.f32 %v1898, %v1917
  %v1922 = vadd.f32 %v1899, %v1917
  %v1923 = vadd.f32 %v1900, %v1917
  %v1924 = vadd.f32 %v1901, %v1917
  %v1925 = vadd.f32 %v1902, %v1917
  %v1926 = vadd.f32 %v1903, %v1917
  %v1927 = vadd.f32 %v1904, %v1917
  %v1928 = vadd.f32 %v1905, %v1917
  %v1929 = vadd.f32 %v1906, %v1917
  %v1930 = vadd.f32 %v1907, %v1917
  %v1931 = vadd.f32 %v1908, %v1917
  %v1932 = vadd.f32 %v1909, %v1917
  %v1933 = vadd.f32 %v1910, %v1917
  %v1934 = vadd.f32 %v1911, %v1917
  %1935 = vst.msk [vmem:[#allocation3] sm:$0xff] %vm21, 0.0
  %1936 = vst.msk [vmem:[#allocation3 + $0x8] sm:$0xff] %vm21, 0.0
  %1937 = vst.msk [vmem:[#allocation3 + $0x10] sm:$0x1] %vm25, 0.0
  %1938 = vst.msk [vmem:[#allocation3 + $0xf0] sm:$0xff] %vm21, 0.0
  %1939 = vst.msk [vmem:[#allocation3 + $0xf8] sm:$0xff] %vm21, 0.0
  %1940 = vst.msk [vmem:[#allocation3 + $0x100] sm:$0x1] %vm25, 0.0
  %s1941 = scalar_lea.vmem [#allocation3], 216
  %1942 = vst.msk [vmem:[%s1941] sm:$0xff] %vm21, 0.0
  %1943 = vst.msk [vmem:[%s1941 + $0x8] sm:$0xff] %vm21, 0.0
  %1944 = vst.msk [vmem:[%s1941 + $0x10] sm:$0x1] %vm25, 0.0
  %1945 = vst.msk [vmem:[%s1941 + $0xf0] sm:$0xff] %vm21, 0.0
  %1946 = vst.msk [vmem:[%s1941 + $0xf8] sm:$0xff] %vm21, 0.0
  %1947 = vst.msk [vmem:[%s1941 + $0x100] sm:$0x1] %vm25, 0.0
  %1948 = vst.msk [vmem:[#allocation3 + $0x10] sm:$0x1] %vm25, 0.0
  %1949 = vst.msk [vmem:[#allocation3 + $0x28] sm:$0x1] %vm25, 0.0
  %1950 = vst.msk [vmem:[#allocation3 + $0x40] sm:$0x1] %vm25, 0.0
  %1951 = vst.msk [vmem:[#allocation3 + $0x58] sm:$0x1] %vm25, 0.0
  %1952 = vst.msk [vmem:[#allocation3 + $0x70] sm:$0x1] %vm25, 0.0
  %1953 = vst.msk [vmem:[#allocation3 + $0x88] sm:$0x1] %vm25, 0.0
  %1954 = vst.msk [vmem:[#allocation3 + $0xa0] sm:$0x1] %vm25, 0.0
  %1955 = vst.msk [vmem:[#allocation3 + $0xb8] sm:$0x1] %vm25, 0.0
  %1956 = vst.msk [vmem:[#allocation3 + $0xd0] sm:$0x1] %vm25, 0.0
  %1957 = vst.msk [vmem:[#allocation3 + $0xe8] sm:$0x1] %vm25, 0.0
  %1958 = vst.msk [vmem:[#allocation3 + $0x100] sm:$0x1] %vm25, 0.0
  %1959 = vst.msk [vmem:[#allocation3 + $0x118] sm:$0x1] %vm25, 0.0
  %1960 = vst.msk [vmem:[#allocation3 + $0x130] sm:$0x1] %vm25, 0.0
  %1961 = vst.msk [vmem:[#allocation3 + $0x148] sm:$0x1] %vm25, 0.0
  %1962 = vst.msk [vmem:[#allocation3 + $0x160] sm:$0x1] %vm25, 0.0
  %1963 = vst.msk [vmem:[#allocation3 + $0x178] sm:$0x1] %vm25, 0.0
  %1964 = vst.msk [vmem:[#allocation3 + $0x190] sm:$0x1] %vm25, 0.0
  %1965 = vst.msk [vmem:[#allocation3 + $0x1a8] sm:$0x1] %vm25, 0.0
  %1966 = vst.msk [vmem:[#allocation3 + $0x1c0] sm:$0x1] %vm25, 0.0
  %1967 = vst.msk [vmem:[#allocation3 + $0x1d8] sm:$0x1] %vm25, 0.0
  %1968 = vst.msk [vmem:[#allocation3] sm:$0xff] %vm21, 0.0
  %1969 = vst.msk [vmem:[#allocation3 + $0x18] sm:$0xff] %vm21, 0.0
  %1970 = vst.msk [vmem:[#allocation3 + $0x30] sm:$0xff] %vm21, 0.0
  %1971 = vst.msk [vmem:[#allocation3 + $0x48] sm:$0xff] %vm21, 0.0
  %1972 = vst.msk [vmem:[#allocation3 + $0x60] sm:$0xff] %vm21, 0.0
  %1973 = vst.msk [vmem:[#allocation3 + $0x78] sm:$0xff] %vm21, 0.0
  %1974 = vst.msk [vmem:[#allocation3 + $0x90] sm:$0xff] %vm21, 0.0
  %1975 = vst.msk [vmem:[#allocation3 + $0xa8] sm:$0xff] %vm21, 0.0
  %1976 = vst.msk [vmem:[#allocation3 + $0xc0] sm:$0xff] %vm21, 0.0
  %1977 = vst.msk [vmem:[#allocation3 + $0xd8] sm:$0xff] %vm21, 0.0
  %1978 = vst.msk [vmem:[#allocation3 + $0xf0] sm:$0xff] %vm21, 0.0
  %1979 = vst.msk [vmem:[#allocation3 + $0x108] sm:$0xff] %vm21, 0.0
  %1980 = vst.msk [vmem:[#allocation3 + $0x120] sm:$0xff] %vm21, 0.0
  %1981 = vst.msk [vmem:[#allocation3 + $0x138] sm:$0xff] %vm21, 0.0
  %1982 = vst.msk [vmem:[#allocation3 + $0x150] sm:$0xff] %vm21, 0.0
  %1983 = vst.msk [vmem:[#allocation3 + $0x168] sm:$0xff] %vm21, 0.0
  %1984 = vst.msk [vmem:[#allocation3 + $0x180] sm:$0xff] %vm21, 0.0
  %1985 = vst.msk [vmem:[#allocation3 + $0x198] sm:$0xff] %vm21, 0.0
  %1986 = vst.msk [vmem:[#allocation3 + $0x1b0] sm:$0xff] %vm21, 0.0
  %1987 = vst.msk [vmem:[#allocation3 + $0x1c8] sm:$0xff] %vm21, 0.0
  %v1988 = vmax.f32 %v1919, 0.0
  %v1989 = vmax.f32 %v1920, 0.0
  %v1990 = vmax.f32 %v1921, 0.0
  %v1991 = vmax.f32 %v1922, 0.0
  %v1992 = vmax.f32 %v1923, 0.0
  %v1993 = vmax.f32 %v1924, 0.0
  %v1994 = vmax.f32 %v1925, 0.0
  %v1995 = vmax.f32 %v1926, 0.0
  %v1996 = vmax.f32 %v1927, 0.0
  %v1997 = vmax.f32 %v1928, 0.0
  %v1998 = vmax.f32 %v1929, 0.0
  %v1999 = vmax.f32 %v1930, 0.0
  %v2000 = vmax.f32 %v1931, 0.0
  %v2001 = vmax.f32 %v1932, 0.0
  %v2002 = vmax.f32 %v1933, 0.0
  %v2003 = vmax.f32 %v1934, 0.0
  %s2004 = scalar_lea.vmem [#allocation3], 24
  %2005 = vst.msk [vmem:[%s2004 + $0x8] sm:$0xff] %vm21, %v1988
  %2006 = vst.msk [vmem:[%s2004 + $0x20] sm:$0xff] %vm21, %v1989
  %2007 = vst.msk [vmem:[%s2004 + $0x38] sm:$0xff] %vm21, %v1990
  %2008 = vst.msk [vmem:[%s2004 + $0x50] sm:$0xff] %vm21, %v1991
  %2009 = vst.msk [vmem:[%s2004 + $0x68] sm:$0xff] %vm21, %v1992
  %2010 = vst.msk [vmem:[%s2004 + $0x80] sm:$0xff] %vm21, %v1993
  %2011 = vst.msk [vmem:[%s2004 + $0x98] sm:$0xff] %vm21, %v1994
  %2012 = vst.msk [vmem:[%s2004 + $0xb0] sm:$0xff] %vm21, %v1995
  %2013 = vst.msk [vmem:[%s2004 + $0xf8] sm:$0xff] %vm21, %v1996
  %2014 = vst.msk [vmem:[%s2004 + $0x110] sm:$0xff] %vm21, %v1997
  %2015 = vst.msk [vmem:[%s2004 + $0x128] sm:$0xff] %vm21, %v1998
  %2016 = vst.msk [vmem:[%s2004 + $0x140] sm:$0xff] %vm21, %v1999
  %2017 = vst.msk [vmem:[%s2004 + $0x158] sm:$0xff] %vm21, %v2000
  %2018 = vst.msk [vmem:[%s2004 + $0x170] sm:$0xff] %vm21, %v2001
  %2019 = vst.msk [vmem:[%s2004 + $0x188] sm:$0xff] %vm21, %v2002
  %2020 = vst.msk [vmem:[%s2004 + $0x1a0] sm:$0xff] %vm21, %v2003
  %v2021 = vld [vmem:[#allocation3 + $0x7] sm:$0xff]
  %v2022 = vld [vmem:[#allocation3 + $0x1f] sm:$0xff]
  %v2023 = vld [vmem:[#allocation3 + $0x37] sm:$0xff]
  %v2024 = vld [vmem:[#allocation3 + $0x4f] sm:$0xff]
  %v2025 = vld [vmem:[#allocation3 + $0x67] sm:$0xff]
  %v2026 = vld [vmem:[#allocation3 + $0x7f] sm:$0xff]
  %v2027 = vld [vmem:[#allocation3 + $0x97] sm:$0xff]
  %v2028 = vld [vmem:[#allocation3 + $0xaf] sm:$0xff]
  %v2029 = vld [vmem:[#allocation3 + $0xf7] sm:$0xff]
  %v2030 = vld [vmem:[#allocation3 + $0x10f] sm:$0xff]
  %v2031 = vld [vmem:[#allocation3 + $0x127] sm:$0xff]
  %v2032 = vld [vmem:[#allocation3 + $0x13f] sm:$0xff]
  %v2033 = vld [vmem:[#allocation3 + $0x157] sm:$0xff]
  %v2034 = vld [vmem:[#allocation3 + $0x16f] sm:$0xff]
  %v2035 = vld [vmem:[#allocation3 + $0x187] sm:$0xff]
  %v2036 = vld [vmem:[#allocation3 + $0x19f] sm:$0xff]
  %v2037 = vpack.c.bf16 %v2022, %v2021
  %v2038 = vpack.c.bf16 %v2024, %v2023
  %v2039 = vpack.c.bf16 %v2026, %v2025
  %v2040 = vpack.c.bf16 %v2028, %v2027
  %v2041 = vpack.c.bf16 %v2030, %v2029
  %v2042 = vpack.c.bf16 %v2032, %v2031
  %v2043 = vpack.c.bf16 %v2034, %v2033
  %v2044 = vpack.c.bf16 %v2036, %v2035
  %v2045 = vld [vmem:[%s3] sm:$0xf]
  %v2046 = vld [vmem:[#allocation3 + $0x8] sm:$0xff]
  %v2047 = vld [vmem:[#allocation3 + $0x20] sm:$0xff]
  %v2048 = vld [vmem:[#allocation3 + $0x38] sm:$0xff]
  %v2049 = vld [vmem:[#allocation3 + $0x50] sm:$0xff]
  %v2050 = vld [vmem:[#allocation3 + $0x68] sm:$0xff]
  %v2051 = vld [vmem:[#allocation3 + $0x80] sm:$0xff]
  %v2052 = vld [vmem:[#allocation3 + $0x98] sm:$0xff]
  %v2053 = vld [vmem:[#allocation3 + $0xb0] sm:$0xff]
  %v2054 = vld [vmem:[#allocation3 + $0xf8] sm:$0xff]
  %v2055 = vld [vmem:[#allocation3 + $0x110] sm:$0xff]
  %v2056 = vld [vmem:[#allocation3 + $0x128] sm:$0xff]
  %v2057 = vld [vmem:[#allocation3 + $0x140] sm:$0xff]
  %v2058 = vld [vmem:[#allocation3 + $0x158] sm:$0xff]
  %v2059 = vld [vmem:[#allocation3 + $0x170] sm:$0xff]
  %v2060 = vld [vmem:[#allocation3 + $0x188] sm:$0xff]
  %v2061 = vld [vmem:[#allocation3 + $0x1a0] sm:$0xff]
  %v2062 = vpack.c.bf16 %v2047, %v2046
  %v2063 = vpack.c.bf16 %v2049, %v2048
  %v2064 = vpack.c.bf16 %v2051, %v2050
  %v2065 = vpack.c.bf16 %v2053, %v2052
  %v2066 = vpack.c.bf16 %v2055, %v2054
  %v2067 = vpack.c.bf16 %v2057, %v2056
  %v2068 = vpack.c.bf16 %v2059, %v2058
  %v2069 = vpack.c.bf16 %v2061, %v2060
  %s2070 = scalar_lea.vmem %s3, 4
  %v2071 = vld [vmem:[%s2070] sm:$0xf]
  %v2073 = vsel %vm21, %v2062, 0
  %v2076 = vsel %vm21, %v2063, 0
  %v2079 = vsel %vm21, %v2064, 0
  %v2082 = vsel %vm21, %v2065, 0
  %v2085 = vsel %vm21, %v2066, 0
  %v2088 = vsel %vm21, %v2067, 0
  %v2091 = vsel %vm21, %v2068, 0
  %v2094 = vsel %vm21, %v2069, 0
  %v2097 = vsel %vm412, %v2071, 0
  %2099 = vmatprep.subr.bf16.mxu0 0
  %2100 = vmatpush1.bf16.msra.mxu0 0
  %2101 = vmatprep.subr.bf16.mxu0 0
  %2102 = vmatpush1.bf16.msra.mxu0 0
  %2103 = vmatprep.subr.bf16.mxu0 0
  %2104 = vmatpush1.bf16.msra.mxu0 0
  %2105 = vmatprep.subr.bf16.mxu0 0
  %2106 = vmatpush1.bf16.msra.mxu0 0
  %2107 = vmatprep.subr.bf16.mxu0 0
  %2108 = vmatpush1.bf16.msra.mxu0 0
  %2109 = vmatprep.subr.bf16.mxu0 0
  %2110 = vmatpush1.bf16.msra.mxu0 0
  %2111 = vmatprep.subr.bf16.mxu0 0
  %2112 = vmatpush1.bf16.msra.mxu0 0
  %2113 = vmatprep.subr.bf16.mxu0 0
  %2114 = vmatpush1.bf16.msra.mxu0 %v2097
  %2115 = vmatprep.subr.bf16.mxu0 0
  %2116 = vmatpush2.bf16.msra.mxu0 0
  %2117 = vmatprep.subr.bf16.mxu0 0
  %2118 = vmatpush2.bf16.msra.mxu0 0
  %2119 = vmatprep.subr.bf16.mxu0 0
  %2120 = vmatpush2.bf16.msra.mxu0 0
  %2121 = vmatprep.subr.bf16.mxu0 0
  %2122 = vmatpush2.bf16.msra.mxu0 0
  %2123 = vmatprep.subr.bf16.mxu0 0
  %2124 = vmatpush2.bf16.msra.mxu0 0
  %2125 = vmatprep.subr.bf16.mxu0 0
  %2126 = vmatpush2.bf16.msra.mxu0 0
  %2127 = vmatprep.subr.bf16.mxu0 0
  %2128 = vmatpush2.bf16.msra.mxu0 0
  %2129 = vmatprep.subr.bf16.mxu0 0
  %2130 = vmatpush2.bf16.msra.mxu0 0
  %2131 = vmatprep.mubr.bf16.mxu0 0
  %2132 = vmatmul.mubr.bf16.gmra.mxu0 %v2073
  %v2133 = vpop.f32.mrf.mxu0
  %v2134 = vadd.f32 0.0, %v2133
  %v2135 = vpop.f32.mrf.mxu0
  %v2136 = vpop.f32.mrf.mxu0
  %v2137 = vadd.f32 0.0, %v2136
  %v2138 = vpop.f32.mrf.mxu0
  %2139 = vmatprep.mubr.bf16.mxu0 0
  %2140 = vmatmul.mubr.bf16.gmra.mxu0 %v2076
  %v2141 = vpop.f32.mrf.mxu0
  %v2142 = vadd.f32 0.0, %v2141
  %v2143 = vpop.f32.mrf.mxu0
  %v2144 = vpop.f32.mrf.mxu0
  %v2145 = vadd.f32 0.0, %v2144
  %v2146 = vpop.f32.mrf.mxu0
  %2147 = vmatprep.mubr.bf16.mxu0 0
  %2148 = vmatmul.mubr.bf16.gmra.mxu0 %v2079
  %v2149 = vpop.f32.mrf.mxu0
  %v2150 = vadd.f32 0.0, %v2149
  %v2151 = vpop.f32.mrf.mxu0
  %v2152 = vpop.f32.mrf.mxu0
  %v2153 = vadd.f32 0.0, %v2152
  %v2154 = vpop.f32.mrf.mxu0
  %2155 = vmatprep.mubr.bf16.mxu0 0
  %2156 = vmatmul.mubr.bf16.gmra.mxu0 %v2082
  %v2157 = vpop.f32.mrf.mxu0
  %v2158 = vadd.f32 0.0, %v2157
  %v2159 = vpop.f32.mrf.mxu0
  %v2160 = vpop.f32.mrf.mxu0
  %v2161 = vadd.f32 0.0, %v2160
  %v2162 = vpop.f32.mrf.mxu0
  %2163 = vmatprep.mubr.bf16.mxu0 0
  %2164 = vmatmul.mubr.bf16.gmra.mxu0 %v2085
  %v2165 = vpop.f32.mrf.mxu0
  %v2166 = vadd.f32 0.0, %v2165
  %v2167 = vpop.f32.mrf.mxu0
  %v2168 = vpop.f32.mrf.mxu0
  %v2169 = vadd.f32 0.0, %v2168
  %v2170 = vpop.f32.mrf.mxu0
  %2171 = vmatprep.mubr.bf16.mxu0 0
  %2172 = vmatmul.mubr.bf16.gmra.mxu0 %v2088
  %v2173 = vpop.f32.mrf.mxu0
  %v2174 = vadd.f32 0.0, %v2173
  %v2175 = vpop.f32.mrf.mxu0
  %v2176 = vpop.f32.mrf.mxu0
  %v2177 = vadd.f32 0.0, %v2176
  %v2178 = vpop.f32.mrf.mxu0
  %2179 = vmatprep.mubr.bf16.mxu0 0
  %2180 = vmatmul.mubr.bf16.gmra.mxu0 %v2091
  %v2181 = vpop.f32.mrf.mxu0
  %v2182 = vadd.f32 0.0, %v2181
  %v2183 = vpop.f32.mrf.mxu0
  %v2184 = vpop.f32.mrf.mxu0
  %v2185 = vadd.f32 0.0, %v2184
  %v2186 = vpop.f32.mrf.mxu0
  %2187 = vmatprep.mubr.bf16.mxu0 0
  %2188 = vmatmul.mubr.bf16.gmra.mxu0 %v2094
  %v2189 = vpop.f32.mrf.mxu0
  %v2190 = vadd.f32 0.0, %v2189
  %v2191 = vpop.f32.mrf.mxu0
  %v2192 = vpop.f32.mrf.mxu0
  %v2193 = vadd.f32 0.0, %v2192
  %v2194 = vpop.f32.mrf.mxu0
  %2195 = vdwg.mxu0
  %v2197 = vsel %vm21, %v2037, 0
  %v2200 = vsel %vm21, %v2038, 0
  %v2203 = vsel %vm21, %v2039, 0
  %v2206 = vsel %vm21, %v2040, 0
  %v2209 = vsel %vm21, %v2041, 0
  %v2212 = vsel %vm21, %v2042, 0
  %v2215 = vsel %vm21, %v2043, 0
  %v2218 = vsel %vm21, %v2044, 0
  %v2221 = vsel %vm412, %v2045, 0
  %2223 = vmatprep.subr.bf16.mxu0 0
  %2224 = vmatpush1.bf16.msra.mxu0 0
  %2225 = vmatprep.subr.bf16.mxu0 0
  %2226 = vmatpush1.bf16.msra.mxu0 0
  %2227 = vmatprep.subr.bf16.mxu0 0
  %2228 = vmatpush1.bf16.msra.mxu0 0
  %2229 = vmatprep.subr.bf16.mxu0 0
  %2230 = vmatpush1.bf16.msra.mxu0 0
  %2231 = vmatprep.subr.bf16.mxu0 0
  %2232 = vmatpush1.bf16.msra.mxu0 0
  %2233 = vmatprep.subr.bf16.mxu0 0
  %2234 = vmatpush1.bf16.msra.mxu0 0
  %2235 = vmatprep.subr.bf16.mxu0 0
  %2236 = vmatpush1.bf16.msra.mxu0 0
  %2237 = vmatprep.subr.bf16.mxu0 0
  %2238 = vmatpush1.bf16.msra.mxu0 %v2221
  %2239 = vmatprep.subr.bf16.mxu0 0
  %2240 = vmatpush2.bf16.msra.mxu0 0
  %2241 = vmatprep.subr.bf16.mxu0 0
  %2242 = vmatpush2.bf16.msra.mxu0 0
  %2243 = vmatprep.subr.bf16.mxu0 0
  %2244 = vmatpush2.bf16.msra.mxu0 0
  %2245 = vmatprep.subr.bf16.mxu0 0
  %2246 = vmatpush2.bf16.msra.mxu0 0
  %2247 = vmatprep.subr.bf16.mxu0 0
  %2248 = vmatpush2.bf16.msra.mxu0 0
  %2249 = vmatprep.subr.bf16.mxu0 0
  %2250 = vmatpush2.bf16.msra.mxu0 0
  %2251 = vmatprep.subr.bf16.mxu0 0
  %2252 = vmatpush2.bf16.msra.mxu0 0
  %2253 = vmatprep.subr.bf16.mxu0 0
  %2254 = vmatpush2.bf16.msra.mxu0 0
  %2255 = vmatprep.mubr.bf16.mxu0 0
  %2256 = vmatmul.mubr.bf16.gmra.mxu0 %v2197
  %v2257 = vpop.f32.mrf.mxu0
  %v2258 = vadd.f32 %v2134, %v2257
  %v2259 = vpop.f32.mrf.mxu0
  %v2260 = vpop.f32.mrf.mxu0
  %v2261 = vadd.f32 %v2137, %v2260
  %v2262 = vpop.f32.mrf.mxu0
  %2263 = vmatprep.mubr.bf16.mxu0 0
  %2264 = vmatmul.mubr.bf16.gmra.mxu0 %v2200
  %v2265 = vpop.f32.mrf.mxu0
  %v2266 = vadd.f32 %v2142, %v2265
  %v2267 = vpop.f32.mrf.mxu0
  %v2268 = vpop.f32.mrf.mxu0
  %v2269 = vadd.f32 %v2145, %v2268
  %v2270 = vpop.f32.mrf.mxu0
  %2271 = vmatprep.mubr.bf16.mxu0 0
  %2272 = vmatmul.mubr.bf16.gmra.mxu0 %v2203
  %v2273 = vpop.f32.mrf.mxu0
  %v2274 = vadd.f32 %v2150, %v2273
  %v2275 = vpop.f32.mrf.mxu0
  %v2276 = vpop.f32.mrf.mxu0
  %v2277 = vadd.f32 %v2153, %v2276
  %v2278 = vpop.f32.mrf.mxu0
  %2279 = vmatprep.mubr.bf16.mxu0 0
  %2280 = vmatmul.mubr.bf16.gmra.mxu0 %v2206
  %v2281 = vpop.f32.mrf.mxu0
  %v2282 = vadd.f32 %v2158, %v2281
  %v2283 = vpop.f32.mrf.mxu0
  %v2284 = vpop.f32.mrf.mxu0
  %v2285 = vadd.f32 %v2161, %v2284
  %v2286 = vpop.f32.mrf.mxu0
  %2287 = vmatprep.mubr.bf16.mxu0 0
  %2288 = vmatmul.mubr.bf16.gmra.mxu0 %v2209
  %v2289 = vpop.f32.mrf.mxu0
  %v2290 = vadd.f32 %v2166, %v2289
  %v2291 = vpop.f32.mrf.mxu0
  %v2292 = vpop.f32.mrf.mxu0
  %v2293 = vadd.f32 %v2169, %v2292
  %v2294 = vpop.f32.mrf.mxu0
  %2295 = vmatprep.mubr.bf16.mxu0 0
  %2296 = vmatmul.mubr.bf16.gmra.mxu0 %v2212
  %v2297 = vpop.f32.mrf.mxu0
  %v2298 = vadd.f32 %v2174, %v2297
  %v2299 = vpop.f32.mrf.mxu0
  %v2300 = vpop.f32.mrf.mxu0
  %v2301 = vadd.f32 %v2177, %v2300
  %v2302 = vpop.f32.mrf.mxu0
  %2303 = vmatprep.mubr.bf16.mxu0 0
  %2304 = vmatmul.mubr.bf16.gmra.mxu0 %v2215
  %v2305 = vpop.f32.mrf.mxu0
  %v2306 = vadd.f32 %v2182, %v2305
  %v2307 = vpop.f32.mrf.mxu0
  %v2308 = vpop.f32.mrf.mxu0
  %v2309 = vadd.f32 %v2185, %v2308
  %v2310 = vpop.f32.mrf.mxu0
  %2311 = vmatprep.mubr.bf16.mxu0 0
  %2312 = vmatmul.mubr.bf16.gmra.mxu0 %v2218
  %v2313 = vpop.f32.mrf.mxu0
  %v2314 = vadd.f32 %v2190, %v2313
  %v2315 = vpop.f32.mrf.mxu0
  %v2316 = vpop.f32.mrf.mxu0
  %v2317 = vadd.f32 %v2193, %v2316
  %v2318 = vpop.f32.mrf.mxu0
  %2319 = vdwg.mxu0
  %v2320 = vld [vmem:[#allocation3 + $0x9] sm:$0xff]
  %v2321 = vld [vmem:[#allocation3 + $0x21] sm:$0xff]
  %v2322 = vld [vmem:[#allocation3 + $0x39] sm:$0xff]
  %v2323 = vld [vmem:[#allocation3 + $0x51] sm:$0xff]
  %v2324 = vld [vmem:[#allocation3 + $0x69] sm:$0xff]
  %v2325 = vld [vmem:[#allocation3 + $0x81] sm:$0xff]
  %v2326 = vld [vmem:[#allocation3 + $0x99] sm:$0xff]
  %v2327 = vld [vmem:[#allocation3 + $0xb1] sm:$0xff]
  %v2328 = vld [vmem:[#allocation3 + $0xf9] sm:$0xff]
  %v2329 = vld [vmem:[#allocation3 + $0x111] sm:$0xff]
  %v2330 = vld [vmem:[#allocation3 + $0x129] sm:$0xff]
  %v2331 = vld [vmem:[#allocation3 + $0x141] sm:$0xff]
  %v2332 = vld [vmem:[#allocation3 + $0x159] sm:$0xff]
  %v2333 = vld [vmem:[#allocation3 + $0x171] sm:$0xff]
  %v2334 = vld [vmem:[#allocation3 + $0x189] sm:$0xff]
  %v2335 = vld [vmem:[#allocation3 + $0x1a1] sm:$0xff]
  %v2336 = vpack.c.bf16 %v2321, %v2320
  %v2337 = vpack.c.bf16 %v2323, %v2322
  %v2338 = vpack.c.bf16 %v2325, %v2324
  %v2339 = vpack.c.bf16 %v2327, %v2326
  %v2340 = vpack.c.bf16 %v2329, %v2328
  %v2341 = vpack.c.bf16 %v2331, %v2330
  %v2342 = vpack.c.bf16 %v2333, %v2332
  %v2343 = vpack.c.bf16 %v2335, %v2334
  %s2344 = scalar_lea.vmem %s3, 8
  %v2345 = vld [vmem:[%s2344] sm:$0xf]
  %v2347 = vsel %vm21, %v2336, 0
  %v2350 = vsel %vm21, %v2337, 0
  %v2353 = vsel %vm21, %v2338, 0
  %v2356 = vsel %vm21, %v2339, 0
  %v2359 = vsel %vm21, %v2340, 0
  %v2362 = vsel %vm21, %v2341, 0
  %v2365 = vsel %vm21, %v2342, 0
  %v2368 = vsel %vm21, %v2343, 0
  %v2371 = vsel %vm412, %v2345, 0
  %2373 = vmatprep.subr.bf16.mxu0 0
  %2374 = vmatpush1.bf16.msra.mxu0 0
  %2375 = vmatprep.subr.bf16.mxu0 0
  %2376 = vmatpush1.bf16.msra.mxu0 0
  %2377 = vmatprep.subr.bf16.mxu0 0
  %2378 = vmatpush1.bf16.msra.mxu0 0
  %2379 = vmatprep.subr.bf16.mxu0 0
  %2380 = vmatpush1.bf16.msra.mxu0 0
  %2381 = vmatprep.subr.bf16.mxu0 0
  %2382 = vmatpush1.bf16.msra.mxu0 0
  %2383 = vmatprep.subr.bf16.mxu0 0
  %2384 = vmatpush1.bf16.msra.mxu0 0
  %2385 = vmatprep.subr.bf16.mxu0 0
  %2386 = vmatpush1.bf16.msra.mxu0 0
  %2387 = vmatprep.subr.bf16.mxu0 0
  %2388 = vmatpush1.bf16.msra.mxu0 %v2371
  %2389 = vmatprep.subr.bf16.mxu0 0
  %2390 = vmatpush2.bf16.msra.mxu0 0
  %2391 = vmatprep.subr.bf16.mxu0 0
  %2392 = vmatpush2.bf16.msra.mxu0 0
  %2393 = vmatprep.subr.bf16.mxu0 0
  %2394 = vmatpush2.bf16.msra.mxu0 0
  %2395 = vmatprep.subr.bf16.mxu0 0
  %2396 = vmatpush2.bf16.msra.mxu0 0
  %2397 = vmatprep.subr.bf16.mxu0 0
  %2398 = vmatpush2.bf16.msra.mxu0 0
  %2399 = vmatprep.subr.bf16.mxu0 0
  %2400 = vmatpush2.bf16.msra.mxu0 0
  %2401 = vmatprep.subr.bf16.mxu0 0
  %2402 = vmatpush2.bf16.msra.mxu0 0
  %2403 = vmatprep.subr.bf16.mxu0 0
  %2404 = vmatpush2.bf16.msra.mxu0 0
  %2405 = vmatprep.mubr.bf16.mxu0 0
  %2406 = vmatmul.mubr.bf16.gmra.mxu0 %v2347
  %v2407 = vpop.f32.mrf.mxu0
  %v2408 = vadd.f32 0.0, %v2407
  %v2409 = vpop.f32.mrf.mxu0
  %v2410 = vpop.f32.mrf.mxu0
  %v2411 = vadd.f32 0.0, %v2410
  %v2412 = vpop.f32.mrf.mxu0
  %2413 = vmatprep.mubr.bf16.mxu0 0
  %2414 = vmatmul.mubr.bf16.gmra.mxu0 %v2350
  %v2415 = vpop.f32.mrf.mxu0
  %v2416 = vadd.f32 0.0, %v2415
  %v2417 = vpop.f32.mrf.mxu0
  %v2418 = vpop.f32.mrf.mxu0
  %v2419 = vadd.f32 0.0, %v2418
  %v2420 = vpop.f32.mrf.mxu0
  %2421 = vmatprep.mubr.bf16.mxu0 0
  %2422 = vmatmul.mubr.bf16.gmra.mxu0 %v2353
  %v2423 = vpop.f32.mrf.mxu0
  %v2424 = vadd.f32 0.0, %v2423
  %v2425 = vpop.f32.mrf.mxu0
  %v2426 = vpop.f32.mrf.mxu0
  %v2427 = vadd.f32 0.0, %v2426
  %v2428 = vpop.f32.mrf.mxu0
  %2429 = vmatprep.mubr.bf16.mxu0 0
  %2430 = vmatmul.mubr.bf16.gmra.mxu0 %v2356
  %v2431 = vpop.f32.mrf.mxu0
  %v2432 = vadd.f32 0.0, %v2431
  %v2433 = vpop.f32.mrf.mxu0
  %v2434 = vpop.f32.mrf.mxu0
  %v2435 = vadd.f32 0.0, %v2434
  %v2436 = vpop.f32.mrf.mxu0
  %2437 = vmatprep.mubr.bf16.mxu0 0
  %2438 = vmatmul.mubr.bf16.gmra.mxu0 %v2359
  %v2439 = vpop.f32.mrf.mxu0
  %v2440 = vadd.f32 0.0, %v2439
  %v2441 = vpop.f32.mrf.mxu0
  %v2442 = vpop.f32.mrf.mxu0
  %v2443 = vadd.f32 0.0, %v2442
  %v2444 = vpop.f32.mrf.mxu0
  %2445 = vmatprep.mubr.bf16.mxu0 0
  %2446 = vmatmul.mubr.bf16.gmra.mxu0 %v2362
  %v2447 = vpop.f32.mrf.mxu0
  %v2448 = vadd.f32 0.0, %v2447
  %v2449 = vpop.f32.mrf.mxu0
  %v2450 = vpop.f32.mrf.mxu0
  %v2451 = vadd.f32 0.0, %v2450
  %v2452 = vpop.f32.mrf.mxu0
  %2453 = vmatprep.mubr.bf16.mxu0 0
  %2454 = vmatmul.mubr.bf16.gmra.mxu0 %v2365
  %v2455 = vpop.f32.mrf.mxu0
  %v2456 = vadd.f32 0.0, %v2455
  %v2457 = vpop.f32.mrf.mxu0
  %v2458 = vpop.f32.mrf.mxu0
  %v2459 = vadd.f32 0.0, %v2458
  %v2460 = vpop.f32.mrf.mxu0
  %2461 = vmatprep.mubr.bf16.mxu0 0
  %2462 = vmatmul.mubr.bf16.gmra.mxu0 %v2368
  %v2463 = vpop.f32.mrf.mxu0
  %v2464 = vadd.f32 0.0, %v2463
  %v2465 = vpop.f32.mrf.mxu0
  %v2466 = vpop.f32.mrf.mxu0
  %v2467 = vadd.f32 0.0, %v2466
  %v2468 = vpop.f32.mrf.mxu0
  %2469 = vdwg.mxu0
  %v2470 = vadd.f32 %v2258, %v2408
  %v2471 = vadd.f32 %v2261, %v2411
  %v2472 = vadd.f32 %v2266, %v2416
  %v2473 = vadd.f32 %v2269, %v2419
  %v2474 = vadd.f32 %v2274, %v2424
  %v2475 = vadd.f32 %v2277, %v2427
  %v2476 = vadd.f32 %v2282, %v2432
  %v2477 = vadd.f32 %v2285, %v2435
  %v2478 = vadd.f32 %v2290, %v2440
  %v2479 = vadd.f32 %v2293, %v2443
  %v2480 = vadd.f32 %v2298, %v2448
  %v2481 = vadd.f32 %v2301, %v2451
  %v2482 = vadd.f32 %v2306, %v2456
  %v2483 = vadd.f32 %v2309, %v2459
  %v2484 = vadd.f32 %v2314, %v2464
  %v2485 = vadd.f32 %v2317, %v2467
  %v2486 = vld [vmem:[%s2004 + $0x7] sm:$0xff]
  %v2487 = vld [vmem:[%s2004 + $0x1f] sm:$0xff]
  %v2488 = vld [vmem:[%s2004 + $0x37] sm:$0xff]
  %v2489 = vld [vmem:[%s2004 + $0x4f] sm:$0xff]
  %v2490 = vld [vmem:[%s2004 + $0x67] sm:$0xff]
  %v2491 = vld [vmem:[%s2004 + $0x7f] sm:$0xff]
  %v2492 = vld [vmem:[%s2004 + $0x97] sm:$0xff]
  %v2493 = vld [vmem:[%s2004 + $0xaf] sm:$0xff]
  %v2494 = vld [vmem:[%s2004 + $0xf7] sm:$0xff]
  %v2495 = vld [vmem:[%s2004 + $0x10f] sm:$0xff]
  %v2496 = vld [vmem:[%s2004 + $0x127] sm:$0xff]
  %v2497 = vld [vmem:[%s2004 + $0x13f] sm:$0xff]
  %v2498 = vld [vmem:[%s2004 + $0x157] sm:$0xff]
  %v2499 = vld [vmem:[%s2004 + $0x16f] sm:$0xff]
  %v2500 = vld [vmem:[%s2004 + $0x187] sm:$0xff]
  %v2501 = vld [vmem:[%s2004 + $0x19f] sm:$0xff]
  %v2502 = vpack.c.bf16 %v2487, %v2486
  %v2503 = vpack.c.bf16 %v2489, %v2488
  %v2504 = vpack.c.bf16 %v2491, %v2490
  %v2505 = vpack.c.bf16 %v2493, %v2492
  %v2506 = vpack.c.bf16 %v2495, %v2494
  %v2507 = vpack.c.bf16 %v2497, %v2496
  %v2508 = vpack.c.bf16 %v2499, %v2498
  %v2509 = vpack.c.bf16 %v2501, %v2500
  %s2510 = scalar_lea.vmem %s3, 12
  %v2511 = vld [vmem:[%s2510] sm:$0xf]
  %v2513 = vsel %vm21, %v2502, 0
  %v2516 = vsel %vm21, %v2503, 0
  %v2519 = vsel %vm21, %v2504, 0
  %v2522 = vsel %vm21, %v2505, 0
  %v2525 = vsel %vm21, %v2506, 0
  %v2528 = vsel %vm21, %v2507, 0
  %v2531 = vsel %vm21, %v2508, 0
  %v2534 = vsel %vm21, %v2509, 0
  %v2537 = vsel %vm412, %v2511, 0
  %2539 = vmatprep.subr.bf16.mxu0 0
  %2540 = vmatpush1.bf16.msra.mxu0 0
  %2541 = vmatprep.subr.bf16.mxu0 0
  %2542 = vmatpush1.bf16.msra.mxu0 0
  %2543 = vmatprep.subr.bf16.mxu0 0
  %2544 = vmatpush1.bf16.msra.mxu0 0
  %2545 = vmatprep.subr.bf16.mxu0 0
  %2546 = vmatpush1.bf16.msra.mxu0 0
  %2547 = vmatprep.subr.bf16.mxu0 0
  %2548 = vmatpush1.bf16.msra.mxu0 0
  %2549 = vmatprep.subr.bf16.mxu0 0
  %2550 = vmatpush1.bf16.msra.mxu0 0
  %2551 = vmatprep.subr.bf16.mxu0 0
  %2552 = vmatpush1.bf16.msra.mxu0 0
  %2553 = vmatprep.subr.bf16.mxu0 0
  %2554 = vmatpush1.bf16.msra.mxu0 %v2537
  %2555 = vmatprep.subr.bf16.mxu0 0
  %2556 = vmatpush2.bf16.msra.mxu0 0
  %2557 = vmatprep.subr.bf16.mxu0 0
  %2558 = vmatpush2.bf16.msra.mxu0 0
  %2559 = vmatprep.subr.bf16.mxu0 0
  %2560 = vmatpush2.bf16.msra.mxu0 0
  %2561 = vmatprep.subr.bf16.mxu0 0
  %2562 = vmatpush2.bf16.msra.mxu0 0
  %2563 = vmatprep.subr.bf16.mxu0 0
  %2564 = vmatpush2.bf16.msra.mxu0 0
  %2565 = vmatprep.subr.bf16.mxu0 0
  %2566 = vmatpush2.bf16.msra.mxu0 0
  %2567 = vmatprep.subr.bf16.mxu0 0
  %2568 = vmatpush2.bf16.msra.mxu0 0
  %2569 = vmatprep.subr.bf16.mxu0 0
  %2570 = vmatpush2.bf16.msra.mxu0 0
  %2571 = vmatprep.mubr.bf16.mxu0 0
  %2572 = vmatmul.mubr.bf16.gmra.mxu0 %v2513
  %v2573 = vpop.f32.mrf.mxu0
  %v2574 = vadd.f32 0.0, %v2573
  %v2575 = vpop.f32.mrf.mxu0
  %v2576 = vpop.f32.mrf.mxu0
  %v2577 = vadd.f32 0.0, %v2576
  %v2578 = vpop.f32.mrf.mxu0
  %2579 = vmatprep.mubr.bf16.mxu0 0
  %2580 = vmatmul.mubr.bf16.gmra.mxu0 %v2516
  %v2581 = vpop.f32.mrf.mxu0
  %v2582 = vadd.f32 0.0, %v2581
  %v2583 = vpop.f32.mrf.mxu0
  %v2584 = vpop.f32.mrf.mxu0
  %v2585 = vadd.f32 0.0, %v2584
  %v2586 = vpop.f32.mrf.mxu0
  %2587 = vmatprep.mubr.bf16.mxu0 0
  %2588 = vmatmul.mubr.bf16.gmra.mxu0 %v2519
  %v2589 = vpop.f32.mrf.mxu0
  %v2590 = vadd.f32 0.0, %v2589
  %v2591 = vpop.f32.mrf.mxu0
  %v2592 = vpop.f32.mrf.mxu0
  %v2593 = vadd.f32 0.0, %v2592
  %v2594 = vpop.f32.mrf.mxu0
  %2595 = vmatprep.mubr.bf16.mxu0 0
  %2596 = vmatmul.mubr.bf16.gmra.mxu0 %v2522
  %v2597 = vpop.f32.mrf.mxu0
  %v2598 = vadd.f32 0.0, %v2597
  %v2599 = vpop.f32.mrf.mxu0
  %v2600 = vpop.f32.mrf.mxu0
  %v2601 = vadd.f32 0.0, %v2600
  %v2602 = vpop.f32.mrf.mxu0
  %2603 = vmatprep.mubr.bf16.mxu0 0
  %2604 = vmatmul.mubr.bf16.gmra.mxu0 %v2525
  %v2605 = vpop.f32.mrf.mxu0
  %v2606 = vadd.f32 0.0, %v2605
  %v2607 = vpop.f32.mrf.mxu0
  %v2608 = vpop.f32.mrf.mxu0
  %v2609 = vadd.f32 0.0, %v2608
  %v2610 = vpop.f32.mrf.mxu0
  %2611 = vmatprep.mubr.bf16.mxu0 0
  %2612 = vmatmul.mubr.bf16.gmra.mxu0 %v2528
  %v2613 = vpop.f32.mrf.mxu0
  %v2614 = vadd.f32 0.0, %v2613
  %v2615 = vpop.f32.mrf.mxu0
  %v2616 = vpop.f32.mrf.mxu0
  %v2617 = vadd.f32 0.0, %v2616
  %v2618 = vpop.f32.mrf.mxu0
  %2619 = vmatprep.mubr.bf16.mxu0 0
  %2620 = vmatmul.mubr.bf16.gmra.mxu0 %v2531
  %v2621 = vpop.f32.mrf.mxu0
  %v2622 = vadd.f32 0.0, %v2621
  %v2623 = vpop.f32.mrf.mxu0
  %v2624 = vpop.f32.mrf.mxu0
  %v2625 = vadd.f32 0.0, %v2624
  %v2626 = vpop.f32.mrf.mxu0
  %2627 = vmatprep.mubr.bf16.mxu0 0
  %2628 = vmatmul.mubr.bf16.gmra.mxu0 %v2534
  %v2629 = vpop.f32.mrf.mxu0
  %v2630 = vadd.f32 0.0, %v2629
  %v2631 = vpop.f32.mrf.mxu0
  %v2632 = vpop.f32.mrf.mxu0
  %v2633 = vadd.f32 0.0, %v2632
  %v2634 = vpop.f32.mrf.mxu0
  %2635 = vdwg.mxu0
  %v2636 = vadd.f32 %v2470, %v2574
  %v2637 = vadd.f32 %v2471, %v2577
  %v2638 = vadd.f32 %v2472, %v2582
  %v2639 = vadd.f32 %v2473, %v2585
  %v2640 = vadd.f32 %v2474, %v2590
  %v2641 = vadd.f32 %v2475, %v2593
  %v2642 = vadd.f32 %v2476, %v2598
  %v2643 = vadd.f32 %v2477, %v2601
  %v2644 = vadd.f32 %v2478, %v2606
  %v2645 = vadd.f32 %v2479, %v2609
  %v2646 = vadd.f32 %v2480, %v2614
  %v2647 = vadd.f32 %v2481, %v2617
  %v2648 = vadd.f32 %v2482, %v2622
  %v2649 = vadd.f32 %v2483, %v2625
  %v2650 = vadd.f32 %v2484, %v2630
  %v2651 = vadd.f32 %v2485, %v2633
  %v2652 = vld [vmem:[%s2004 + $0x8] sm:$0xff]
  %v2653 = vld [vmem:[%s2004 + $0x20] sm:$0xff]
  %v2654 = vld [vmem:[%s2004 + $0x38] sm:$0xff]
  %v2655 = vld [vmem:[%s2004 + $0x50] sm:$0xff]
  %v2656 = vld [vmem:[%s2004 + $0x68] sm:$0xff]
  %v2657 = vld [vmem:[%s2004 + $0x80] sm:$0xff]
  %v2658 = vld [vmem:[%s2004 + $0x98] sm:$0xff]
  %v2659 = vld [vmem:[%s2004 + $0xb0] sm:$0xff]
  %v2660 = vld [vmem:[%s2004 + $0xf8] sm:$0xff]
  %v2661 = vld [vmem:[%s2004 + $0x110] sm:$0xff]
  %v2662 = vld [vmem:[%s2004 + $0x128] sm:$0xff]
  %v2663 = vld [vmem:[%s2004 + $0x140] sm:$0xff]
  %v2664 = vld [vmem:[%s2004 + $0x158] sm:$0xff]
  %v2665 = vld [vmem:[%s2004 + $0x170] sm:$0xff]
  %v2666 = vld [vmem:[%s2004 + $0x188] sm:$0xff]
  %v2667 = vld [vmem:[%s2004 + $0x1a0] sm:$0xff]
  %v2668 = vpack.c.bf16 %v2653, %v2652
  %v2669 = vpack.c.bf16 %v2655, %v2654
  %v2670 = vpack.c.bf16 %v2657, %v2656
  %v2671 = vpack.c.bf16 %v2659, %v2658
  %v2672 = vpack.c.bf16 %v2661, %v2660
  %v2673 = vpack.c.bf16 %v2663, %v2662
  %v2674 = vpack.c.bf16 %v2665, %v2664
  %v2675 = vpack.c.bf16 %v2667, %v2666
  %s2676 = scalar_lea.vmem %s3, 16
  %v2677 = vld [vmem:[%s2676] sm:$0xf]
  %v2679 = vsel %vm21, %v2668, 0
  %v2682 = vsel %vm21, %v2669, 0
  %v2685 = vsel %vm21, %v2670, 0
  %v2688 = vsel %vm21, %v2671, 0
  %v2691 = vsel %vm21, %v2672, 0
  %v2694 = vsel %vm21, %v2673, 0
  %v2697 = vsel %vm21, %v2674, 0
  %v2700 = vsel %vm21, %v2675, 0
  %v2703 = vsel %vm412, %v2677, 0
  %2705 = vmatprep.subr.bf16.mxu0 0
  %2706 = vmatpush1.bf16.msra.mxu0 0
  %2707 = vmatprep.subr.bf16.mxu0 0
  %2708 = vmatpush1.bf16.msra.mxu0 0
  %2709 = vmatprep.subr.bf16.mxu0 0
  %2710 = vmatpush1.bf16.msra.mxu0 0
  %2711 = vmatprep.subr.bf16.mxu0 0
  %2712 = vmatpush1.bf16.msra.mxu0 0
  %2713 = vmatprep.subr.bf16.mxu0 0
  %2714 = vmatpush1.bf16.msra.mxu0 0
  %2715 = vmatprep.subr.bf16.mxu0 0
  %2716 = vmatpush1.bf16.msra.mxu0 0
  %2717 = vmatprep.subr.bf16.mxu0 0
  %2718 = vmatpush1.bf16.msra.mxu0 0
  %2719 = vmatprep.subr.bf16.mxu0 0
  %2720 = vmatpush1.bf16.msra.mxu0 %v2703
  %2721 = vmatprep.subr.bf16.mxu0 0
  %2722 = vmatpush2.bf16.msra.mxu0 0
  %2723 = vmatprep.subr.bf16.mxu0 0
  %2724 = vmatpush2.bf16.msra.mxu0 0
  %2725 = vmatprep.subr.bf16.mxu0 0
  %2726 = vmatpush2.bf16.msra.mxu0 0
  %2727 = vmatprep.subr.bf16.mxu0 0
  %2728 = vmatpush2.bf16.msra.mxu0 0
  %2729 = vmatprep.subr.bf16.mxu0 0
  %2730 = vmatpush2.bf16.msra.mxu0 0
  %2731 = vmatprep.subr.bf16.mxu0 0
  %2732 = vmatpush2.bf16.msra.mxu0 0
  %2733 = vmatprep.subr.bf16.mxu0 0
  %2734 = vmatpush2.bf16.msra.mxu0 0
  %2735 = vmatprep.subr.bf16.mxu0 0
  %2736 = vmatpush2.bf16.msra.mxu0 0
  %2737 = vmatprep.mubr.bf16.mxu0 0
  %2738 = vmatmul.mubr.bf16.gmra.mxu0 %v2679
  %v2739 = vpop.f32.mrf.mxu0
  %v2740 = vadd.f32 0.0, %v2739
  %v2741 = vpop.f32.mrf.mxu0
  %v2742 = vpop.f32.mrf.mxu0
  %v2743 = vadd.f32 0.0, %v2742
  %v2744 = vpop.f32.mrf.mxu0
  %2745 = vmatprep.mubr.bf16.mxu0 0
  %2746 = vmatmul.mubr.bf16.gmra.mxu0 %v2682
  %v2747 = vpop.f32.mrf.mxu0
  %v2748 = vadd.f32 0.0, %v2747
  %v2749 = vpop.f32.mrf.mxu0
  %v2750 = vpop.f32.mrf.mxu0
  %v2751 = vadd.f32 0.0, %v2750
  %v2752 = vpop.f32.mrf.mxu0
  %2753 = vmatprep.mubr.bf16.mxu0 0
  %2754 = vmatmul.mubr.bf16.gmra.mxu0 %v2685
  %v2755 = vpop.f32.mrf.mxu0
  %v2756 = vadd.f32 0.0, %v2755
  %v2757 = vpop.f32.mrf.mxu0
  %v2758 = vpop.f32.mrf.mxu0
  %v2759 = vadd.f32 0.0, %v2758
  %v2760 = vpop.f32.mrf.mxu0
  %2761 = vmatprep.mubr.bf16.mxu0 0
  %2762 = vmatmul.mubr.bf16.gmra.mxu0 %v2688
  %v2763 = vpop.f32.mrf.mxu0
  %v2764 = vadd.f32 0.0, %v2763
  %v2765 = vpop.f32.mrf.mxu0
  %v2766 = vpop.f32.mrf.mxu0
  %v2767 = vadd.f32 0.0, %v2766
  %v2768 = vpop.f32.mrf.mxu0
  %2769 = vmatprep.mubr.bf16.mxu0 0
  %2770 = vmatmul.mubr.bf16.gmra.mxu0 %v2691
  %v2771 = vpop.f32.mrf.mxu0
  %v2772 = vadd.f32 0.0, %v2771
  %v2773 = vpop.f32.mrf.mxu0
  %v2774 = vpop.f32.mrf.mxu0
  %v2775 = vadd.f32 0.0, %v2774
  %v2776 = vpop.f32.mrf.mxu0
  %2777 = vmatprep.mubr.bf16.mxu0 0
  %2778 = vmatmul.mubr.bf16.gmra.mxu0 %v2694
  %v2779 = vpop.f32.mrf.mxu0
  %v2780 = vadd.f32 0.0, %v2779
  %v2781 = vpop.f32.mrf.mxu0
  %v2782 = vpop.f32.mrf.mxu0
  %v2783 = vadd.f32 0.0, %v2782
  %v2784 = vpop.f32.mrf.mxu0
  %2785 = vmatprep.mubr.bf16.mxu0 0
  %2786 = vmatmul.mubr.bf16.gmra.mxu0 %v2697
  %v2787 = vpop.f32.mrf.mxu0
  %v2788 = vadd.f32 0.0, %v2787
  %v2789 = vpop.f32.mrf.mxu0
  %v2790 = vpop.f32.mrf.mxu0
  %v2791 = vadd.f32 0.0, %v2790
  %v2792 = vpop.f32.mrf.mxu0
  %2793 = vmatprep.mubr.bf16.mxu0 0
  %2794 = vmatmul.mubr.bf16.gmra.mxu0 %v2700
  %v2795 = vpop.f32.mrf.mxu0
  %v2796 = vadd.f32 0.0, %v2795
  %v2797 = vpop.f32.mrf.mxu0
  %v2798 = vpop.f32.mrf.mxu0
  %v2799 = vadd.f32 0.0, %v2798
  %v2800 = vpop.f32.mrf.mxu0
  %2801 = vdwg.mxu0
  %v2802 = vadd.f32 %v2636, %v2740
  %v2803 = vadd.f32 %v2637, %v2743
  %v2804 = vadd.f32 %v2638, %v2748
  %v2805 = vadd.f32 %v2639, %v2751
  %v2806 = vadd.f32 %v2640, %v2756
  %v2807 = vadd.f32 %v2641, %v2759
  %v2808 = vadd.f32 %v2642, %v2764
  %v2809 = vadd.f32 %v2643, %v2767
  %v2810 = vadd.f32 %v2644, %v2772
  %v2811 = vadd.f32 %v2645, %v2775
  %v2812 = vadd.f32 %v2646, %v2780
  %v2813 = vadd.f32 %v2647, %v2783
  %v2814 = vadd.f32 %v2648, %v2788
  %v2815 = vadd.f32 %v2649, %v2791
  %v2816 = vadd.f32 %v2650, %v2796
  %v2817 = vadd.f32 %v2651, %v2799
  %v2818 = vld [vmem:[%s2004 + $0x9] sm:$0xff]
  %v2819 = vld [vmem:[%s2004 + $0x21] sm:$0xff]
  %v2820 = vld [vmem:[%s2004 + $0x39] sm:$0xff]
  %v2821 = vld [vmem:[%s2004 + $0x51] sm:$0xff]
  %v2822 = vld [vmem:[%s2004 + $0x69] sm:$0xff]
  %v2823 = vld [vmem:[%s2004 + $0x81] sm:$0xff]
  %v2824 = vld [vmem:[%s2004 + $0x99] sm:$0xff]
  %v2825 = vld [vmem:[%s2004 + $0xb1] sm:$0xff]
  %v2826 = vld [vmem:[%s2004 + $0xf9] sm:$0xff]
  %v2827 = vld [vmem:[%s2004 + $0x111] sm:$0xff]
  %v2828 = vld [vmem:[%s2004 + $0x129] sm:$0xff]
  %v2829 = vld [vmem:[%s2004 + $0x141] sm:$0xff]
  %v2830 = vld [vmem:[%s2004 + $0x159] sm:$0xff]
  %v2831 = vld [vmem:[%s2004 + $0x171] sm:$0xff]
  %v2832 = vld [vmem:[%s2004 + $0x189] sm:$0xff]
  %v2833 = vld [vmem:[%s2004 + $0x1a1] sm:$0xff]
  %v2834 = vpack.c.bf16 %v2819, %v2818
  %v2835 = vpack.c.bf16 %v2821, %v2820
  %v2836 = vpack.c.bf16 %v2823, %v2822
  %v2837 = vpack.c.bf16 %v2825, %v2824
  %v2838 = vpack.c.bf16 %v2827, %v2826
  %v2839 = vpack.c.bf16 %v2829, %v2828
  %v2840 = vpack.c.bf16 %v2831, %v2830
  %v2841 = vpack.c.bf16 %v2833, %v2832
  %s2842 = scalar_lea.vmem %s3, 20
  %v2843 = vld [vmem:[%s2842] sm:$0xf]
  %v2845 = vsel %vm21, %v2834, 0
  %v2848 = vsel %vm21, %v2835, 0
  %v2851 = vsel %vm21, %v2836, 0
  %v2854 = vsel %vm21, %v2837, 0
  %v2857 = vsel %vm21, %v2838, 0
  %v2860 = vsel %vm21, %v2839, 0
  %v2863 = vsel %vm21, %v2840, 0
  %v2866 = vsel %vm21, %v2841, 0
  %v2869 = vsel %vm412, %v2843, 0
  %2871 = vmatprep.subr.bf16.mxu0 0
  %2872 = vmatpush1.bf16.msra.mxu0 0
  %2873 = vmatprep.subr.bf16.mxu0 0
  %2874 = vmatpush1.bf16.msra.mxu0 0
  %2875 = vmatprep.subr.bf16.mxu0 0
  %2876 = vmatpush1.bf16.msra.mxu0 0
  %2877 = vmatprep.subr.bf16.mxu0 0
  %2878 = vmatpush1.bf16.msra.mxu0 0
  %2879 = vmatprep.subr.bf16.mxu0 0
  %2880 = vmatpush1.bf16.msra.mxu0 0
  %2881 = vmatprep.subr.bf16.mxu0 0
  %2882 = vmatpush1.bf16.msra.mxu0 0
  %2883 = vmatprep.subr.bf16.mxu0 0
  %2884 = vmatpush1.bf16.msra.mxu0 0
  %2885 = vmatprep.subr.bf16.mxu0 0
  %2886 = vmatpush1.bf16.msra.mxu0 %v2869
  %2887 = vmatprep.subr.bf16.mxu0 0
  %2888 = vmatpush2.bf16.msra.mxu0 0
  %2889 = vmatprep.subr.bf16.mxu0 0
  %2890 = vmatpush2.bf16.msra.mxu0 0
  %2891 = vmatprep.subr.bf16.mxu0 0
  %2892 = vmatpush2.bf16.msra.mxu0 0
  %2893 = vmatprep.subr.bf16.mxu0 0
  %2894 = vmatpush2.bf16.msra.mxu0 0
  %2895 = vmatprep.subr.bf16.mxu0 0
  %2896 = vmatpush2.bf16.msra.mxu0 0
  %2897 = vmatprep.subr.bf16.mxu0 0
  %2898 = vmatpush2.bf16.msra.mxu0 0
  %2899 = vmatprep.subr.bf16.mxu0 0
  %2900 = vmatpush2.bf16.msra.mxu0 0
  %2901 = vmatprep.subr.bf16.mxu0 0
  %2902 = vmatpush2.bf16.msra.mxu0 0
  %2903 = vmatprep.mubr.bf16.mxu0 0
  %2904 = vmatmul.mubr.bf16.gmra.mxu0 %v2845
  %v2905 = vpop.f32.mrf.mxu0
  %v2906 = vadd.f32 0.0, %v2905
  %v2907 = vpop.f32.mrf.mxu0
  %v2908 = vpop.f32.mrf.mxu0
  %v2909 = vadd.f32 0.0, %v2908
  %v2910 = vpop.f32.mrf.mxu0
  %2911 = vmatprep.mubr.bf16.mxu0 0
  %2912 = vmatmul.mubr.bf16.gmra.mxu0 %v2848
  %v2913 = vpop.f32.mrf.mxu0
  %v2914 = vadd.f32 0.0, %v2913
  %v2915 = vpop.f32.mrf.mxu0
  %v2916 = vpop.f32.mrf.mxu0
  %v2917 = vadd.f32 0.0, %v2916
  %v2918 = vpop.f32.mrf.mxu0
  %2919 = vmatprep.mubr.bf16.mxu0 0
  %2920 = vmatmul.mubr.bf16.gmra.mxu0 %v2851
  %v2921 = vpop.f32.mrf.mxu0
  %v2922 = vadd.f32 0.0, %v2921
  %v2923 = vpop.f32.mrf.mxu0
  %v2924 = vpop.f32.mrf.mxu0
  %v2925 = vadd.f32 0.0, %v2924
  %v2926 = vpop.f32.mrf.mxu0
  %2927 = vmatprep.mubr.bf16.mxu0 0
  %2928 = vmatmul.mubr.bf16.gmra.mxu0 %v2854
  %v2929 = vpop.f32.mrf.mxu0
  %v2930 = vadd.f32 0.0, %v2929
  %v2931 = vpop.f32.mrf.mxu0
  %v2932 = vpop.f32.mrf.mxu0
  %v2933 = vadd.f32 0.0, %v2932
  %v2934 = vpop.f32.mrf.mxu0
  %2935 = vmatprep.mubr.bf16.mxu0 0
  %2936 = vmatmul.mubr.bf16.gmra.mxu0 %v2857
  %v2937 = vpop.f32.mrf.mxu0
  %v2938 = vadd.f32 0.0, %v2937
  %v2939 = vpop.f32.mrf.mxu0
  %v2940 = vpop.f32.mrf.mxu0
  %v2941 = vadd.f32 0.0, %v2940
  %v2942 = vpop.f32.mrf.mxu0
  %2943 = vmatprep.mubr.bf16.mxu0 0
  %2944 = vmatmul.mubr.bf16.gmra.mxu0 %v2860
  %v2945 = vpop.f32.mrf.mxu0
  %v2946 = vadd.f32 0.0, %v2945
  %v2947 = vpop.f32.mrf.mxu0
  %v2948 = vpop.f32.mrf.mxu0
  %v2949 = vadd.f32 0.0, %v2948
  %v2950 = vpop.f32.mrf.mxu0
  %2951 = vmatprep.mubr.bf16.mxu0 0
  %2952 = vmatmul.mubr.bf16.gmra.mxu0 %v2863
  %v2953 = vpop.f32.mrf.mxu0
  %v2954 = vadd.f32 0.0, %v2953
  %v2955 = vpop.f32.mrf.mxu0
  %v2956 = vpop.f32.mrf.mxu0
  %v2957 = vadd.f32 0.0, %v2956
  %v2958 = vpop.f32.mrf.mxu0
  %2959 = vmatprep.mubr.bf16.mxu0 0
  %2960 = vmatmul.mubr.bf16.gmra.mxu0 %v2866
  %v2961 = vpop.f32.mrf.mxu0
  %v2962 = vadd.f32 0.0, %v2961
  %v2963 = vpop.f32.mrf.mxu0
  %v2964 = vpop.f32.mrf.mxu0
  %v2965 = vadd.f32 0.0, %v2964
  %v2966 = vpop.f32.mrf.mxu0
  %2967 = vdwg.mxu0
  %v2968 = vadd.f32 %v2802, %v2906
  %v2969 = vadd.f32 %v2803, %v2909
  %v2970 = vadd.f32 %v2804, %v2914
  %v2971 = vadd.f32 %v2805, %v2917
  %v2972 = vadd.f32 %v2806, %v2922
  %v2973 = vadd.f32 %v2807, %v2925
  %v2974 = vadd.f32 %v2808, %v2930
  %v2975 = vadd.f32 %v2809, %v2933
  %v2976 = vadd.f32 %v2810, %v2938
  %v2977 = vadd.f32 %v2811, %v2941
  %v2978 = vadd.f32 %v2812, %v2946
  %v2979 = vadd.f32 %v2813, %v2949
  %v2980 = vadd.f32 %v2814, %v2954
  %v2981 = vadd.f32 %v2815, %v2957
  %v2982 = vadd.f32 %v2816, %v2962
  %v2983 = vadd.f32 %v2817, %v2965
  %s2984 = scalar_lea.vmem [#allocation3], 48
  %v2985 = vld [vmem:[%s2984 + $0x7] sm:$0xff]
  %v2986 = vld [vmem:[%s2984 + $0x1f] sm:$0xff]
  %v2987 = vld [vmem:[%s2984 + $0x37] sm:$0xff]
  %v2988 = vld [vmem:[%s2984 + $0x4f] sm:$0xff]
  %v2989 = vld [vmem:[%s2984 + $0x67] sm:$0xff]
  %v2990 = vld [vmem:[%s2984 + $0x7f] sm:$0xff]
  %v2991 = vld [vmem:[%s2984 + $0x97] sm:$0xff]
  %v2992 = vld [vmem:[%s2984 + $0xaf] sm:$0xff]
  %v2993 = vld [vmem:[%s2984 + $0xf7] sm:$0xff]
  %v2994 = vld [vmem:[%s2984 + $0x10f] sm:$0xff]
  %v2995 = vld [vmem:[%s2984 + $0x127] sm:$0xff]
  %v2996 = vld [vmem:[%s2984 + $0x13f] sm:$0xff]
  %v2997 = vld [vmem:[%s2984 + $0x157] sm:$0xff]
  %v2998 = vld [vmem:[%s2984 + $0x16f] sm:$0xff]
  %v2999 = vld [vmem:[%s2984 + $0x187] sm:$0xff]
  %v3000 = vld [vmem:[%s2984 + $0x19f] sm:$0xff]
  %v3001 = vpack.c.bf16 %v2986, %v2985
  %v3002 = vpack.c.bf16 %v2988, %v2987
  %v3003 = vpack.c.bf16 %v2990, %v2989
  %v3004 = vpack.c.bf16 %v2992, %v2991
  %v3005 = vpack.c.bf16 %v2994, %v2993
  %v3006 = vpack.c.bf16 %v2996, %v2995
  %v3007 = vpack.c.bf16 %v2998, %v2997
  %v3008 = vpack.c.bf16 %v3000, %v2999
  %s3009 = scalar_lea.vmem %s3, 24
  %v3010 = vld [vmem:[%s3009] sm:$0xf]
  %v3012 = vsel %vm21, %v3001, 0
  %v3015 = vsel %vm21, %v3002, 0
  %v3018 = vsel %vm21, %v3003, 0
  %v3021 = vsel %vm21, %v3004, 0
  %v3024 = vsel %vm21, %v3005, 0
  %v3027 = vsel %vm21, %v3006, 0
  %v3030 = vsel %vm21, %v3007, 0
  %v3033 = vsel %vm21, %v3008, 0
  %v3036 = vsel %vm412, %v3010, 0
  %3038 = vmatprep.subr.bf16.mxu0 0
  %3039 = vmatpush1.bf16.msra.mxu0 0
  %3040 = vmatprep.subr.bf16.mxu0 0
  %3041 = vmatpush1.bf16.msra.mxu0 0
  %3042 = vmatprep.subr.bf16.mxu0 0
  %3043 = vmatpush1.bf16.msra.mxu0 0
  %3044 = vmatprep.subr.bf16.mxu0 0
  %3045 = vmatpush1.bf16.msra.mxu0 0
  %3046 = vmatprep.subr.bf16.mxu0 0
  %3047 = vmatpush1.bf16.msra.mxu0 0
  %3048 = vmatprep.subr.bf16.mxu0 0
  %3049 = vmatpush1.bf16.msra.mxu0 0
  %3050 = vmatprep.subr.bf16.mxu0 0
  %3051 = vmatpush1.bf16.msra.mxu0 0
  %3052 = vmatprep.subr.bf16.mxu0 0
  %3053 = vmatpush1.bf16.msra.mxu0 %v3036
  %3054 = vmatprep.subr.bf16.mxu0 0
  %3055 = vmatpush2.bf16.msra.mxu0 0
  %3056 = vmatprep.subr.bf16.mxu0 0
  %3057 = vmatpush2.bf16.msra.mxu0 0
  %3058 = vmatprep.subr.bf16.mxu0 0
  %3059 = vmatpush2.bf16.msra.mxu0 0
  %3060 = vmatprep.subr.bf16.mxu0 0
  %3061 = vmatpush2.bf16.msra.mxu0 0
  %3062 = vmatprep.subr.bf16.mxu0 0
  %3063 = vmatpush2.bf16.msra.mxu0 0
  %3064 = vmatprep.subr.bf16.mxu0 0
  %3065 = vmatpush2.bf16.msra.mxu0 0
  %3066 = vmatprep.subr.bf16.mxu0 0
  %3067 = vmatpush2.bf16.msra.mxu0 0
  %3068 = vmatprep.subr.bf16.mxu0 0
  %3069 = vmatpush2.bf16.msra.mxu0 0
  %3070 = vmatprep.mubr.bf16.mxu0 0
  %3071 = vmatmul.mubr.bf16.gmra.mxu0 %v3012
  %v3072 = vpop.f32.mrf.mxu0
  %v3073 = vadd.f32 0.0, %v3072
  %v3074 = vpop.f32.mrf.mxu0
  %v3075 = vpop.f32.mrf.mxu0
  %v3076 = vadd.f32 0.0, %v3075
  %v3077 = vpop.f32.mrf.mxu0
  %3078 = vmatprep.mubr.bf16.mxu0 0
  %3079 = vmatmul.mubr.bf16.gmra.mxu0 %v3015
  %v3080 = vpop.f32.mrf.mxu0
  %v3081 = vadd.f32 0.0, %v3080
  %v3082 = vpop.f32.mrf.mxu0
  %v3083 = vpop.f32.mrf.mxu0
  %v3084 = vadd.f32 0.0, %v3083
  %v3085 = vpop.f32.mrf.mxu0
  %3086 = vmatprep.mubr.bf16.mxu0 0
  %3087 = vmatmul.mubr.bf16.gmra.mxu0 %v3018
  %v3088 = vpop.f32.mrf.mxu0
  %v3089 = vadd.f32 0.0, %v3088
  %v3090 = vpop.f32.mrf.mxu0
  %v3091 = vpop.f32.mrf.mxu0
  %v3092 = vadd.f32 0.0, %v3091
  %v3093 = vpop.f32.mrf.mxu0
  %3094 = vmatprep.mubr.bf16.mxu0 0
  %3095 = vmatmul.mubr.bf16.gmra.mxu0 %v3021
  %v3096 = vpop.f32.mrf.mxu0
  %v3097 = vadd.f32 0.0, %v3096
  %v3098 = vpop.f32.mrf.mxu0
  %v3099 = vpop.f32.mrf.mxu0
  %v3100 = vadd.f32 0.0, %v3099
  %v3101 = vpop.f32.mrf.mxu0
  %3102 = vmatprep.mubr.bf16.mxu0 0
  %3103 = vmatmul.mubr.bf16.gmra.mxu0 %v3024
  %v3104 = vpop.f32.mrf.mxu0
  %v3105 = vadd.f32 0.0, %v3104
  %v3106 = vpop.f32.mrf.mxu0
  %v3107 = vpop.f32.mrf.mxu0
  %v3108 = vadd.f32 0.0, %v3107
  %v3109 = vpop.f32.mrf.mxu0
  %3110 = vmatprep.mubr.bf16.mxu0 0
  %3111 = vmatmul.mubr.bf16.gmra.mxu0 %v3027
  %v3112 = vpop.f32.mrf.mxu0
  %v3113 = vadd.f32 0.0, %v3112
  %v3114 = vpop.f32.mrf.mxu0
  %v3115 = vpop.f32.mrf.mxu0
  %v3116 = vadd.f32 0.0, %v3115
  %v3117 = vpop.f32.mrf.mxu0
  %3118 = vmatprep.mubr.bf16.mxu0 0
  %3119 = vmatmul.mubr.bf16.gmra.mxu0 %v3030
  %v3120 = vpop.f32.mrf.mxu0
  %v3121 = vadd.f32 0.0, %v3120
  %v3122 = vpop.f32.mrf.mxu0
  %v3123 = vpop.f32.mrf.mxu0
  %v3124 = vadd.f32 0.0, %v3123
  %v3125 = vpop.f32.mrf.mxu0
  %3126 = vmatprep.mubr.bf16.mxu0 0
  %3127 = vmatmul.mubr.bf16.gmra.mxu0 %v3033
  %v3128 = vpop.f32.mrf.mxu0
  %v3129 = vadd.f32 0.0, %v3128
  %v3130 = vpop.f32.mrf.mxu0
  %v3131 = vpop.f32.mrf.mxu0
  %v3132 = vadd.f32 0.0, %v3131
  %v3133 = vpop.f32.mrf.mxu0
  %3134 = vdwg.mxu0
  %v3135 = vadd.f32 %v2968, %v3073
  %v3136 = vadd.f32 %v2969, %v3076
  %v3137 = vadd.f32 %v2970, %v3081
  %v3138 = vadd.f32 %v2971, %v3084
  %v3139 = vadd.f32 %v2972, %v3089
  %v3140 = vadd.f32 %v2973, %v3092
  %v3141 = vadd.f32 %v2974, %v3097
  %v3142 = vadd.f32 %v2975, %v3100
  %v3143 = vadd.f32 %v2976, %v3105
  %v3144 = vadd.f32 %v2977, %v3108
  %v3145 = vadd.f32 %v2978, %v3113
  %v3146 = vadd.f32 %v2979, %v3116
  %v3147 = vadd.f32 %v2980, %v3121
  %v3148 = vadd.f32 %v2981, %v3124
  %v3149 = vadd.f32 %v2982, %v3129
  %v3150 = vadd.f32 %v2983, %v3132
  %v3151 = vld [vmem:[%s2984 + $0x8] sm:$0xff]
  %v3152 = vld [vmem:[%s2984 + $0x20] sm:$0xff]
  %v3153 = vld [vmem:[%s2984 + $0x38] sm:$0xff]
  %v3154 = vld [vmem:[%s2984 + $0x50] sm:$0xff]
  %v3155 = vld [vmem:[%s2984 + $0x68] sm:$0xff]
  %v3156 = vld [vmem:[%s2984 + $0x80] sm:$0xff]
  %v3157 = vld [vmem:[%s2984 + $0x98] sm:$0xff]
  %v3158 = vld [vmem:[%s2984 + $0xb0] sm:$0xff]
  %v3159 = vld [vmem:[%s2984 + $0xf8] sm:$0xff]
  %v3160 = vld [vmem:[%s2984 + $0x110] sm:$0xff]
  %v3161 = vld [vmem:[%s2984 + $0x128] sm:$0xff]
  %v3162 = vld [vmem:[%s2984 + $0x140] sm:$0xff]
  %v3163 = vld [vmem:[%s2984 + $0x158] sm:$0xff]
  %v3164 = vld [vmem:[%s2984 + $0x170] sm:$0xff]
  %v3165 = vld [vmem:[%s2984 + $0x188] sm:$0xff]
  %v3166 = vld [vmem:[%s2984 + $0x1a0] sm:$0xff]
  %v3167 = vpack.c.bf16 %v3152, %v3151
  %v3168 = vpack.c.bf16 %v3154, %v3153
  %v3169 = vpack.c.bf16 %v3156, %v3155
  %v3170 = vpack.c.bf16 %v3158, %v3157
  %v3171 = vpack.c.bf16 %v3160, %v3159
  %v3172 = vpack.c.bf16 %v3162, %v3161
  %v3173 = vpack.c.bf16 %v3164, %v3163
  %v3174 = vpack.c.bf16 %v3166, %v3165
  %s3175 = scalar_lea.vmem %s3, 28
  %v3176 = vld [vmem:[%s3175] sm:$0xf]
  %v3178 = vsel %vm21, %v3167, 0
  %v3181 = vsel %vm21, %v3168, 0
  %v3184 = vsel %vm21, %v3169, 0
  %v3187 = vsel %vm21, %v3170, 0
  %v3190 = vsel %vm21, %v3171, 0
  %v3193 = vsel %vm21, %v3172, 0
  %v3196 = vsel %vm21, %v3173, 0
  %v3199 = vsel %vm21, %v3174, 0
  %v3202 = vsel %vm412, %v3176, 0
  %3204 = vmatprep.subr.bf16.mxu0 0
  %3205 = vmatpush1.bf16.msra.mxu0 0
  %3206 = vmatprep.subr.bf16.mxu0 0
  %3207 = vmatpush1.bf16.msra.mxu0 0
  %3208 = vmatprep.subr.bf16.mxu0 0
  %3209 = vmatpush1.bf16.msra.mxu0 0
  %3210 = vmatprep.subr.bf16.mxu0 0
  %3211 = vmatpush1.bf16.msra.mxu0 0
  %3212 = vmatprep.subr.bf16.mxu0 0
  %3213 = vmatpush1.bf16.msra.mxu0 0
  %3214 = vmatprep.subr.bf16.mxu0 0
  %3215 = vmatpush1.bf16.msra.mxu0 0
  %3216 = vmatprep.subr.bf16.mxu0 0
  %3217 = vmatpush1.bf16.msra.mxu0 0
  %3218 = vmatprep.subr.bf16.mxu0 0
  %3219 = vmatpush1.bf16.msra.mxu0 %v3202
  %3220 = vmatprep.subr.bf16.mxu0 0
  %3221 = vmatpush2.bf16.msra.mxu0 0
  %3222 = vmatprep.subr.bf16.mxu0 0
  %3223 = vmatpush2.bf16.msra.mxu0 0
  %3224 = vmatprep.subr.bf16.mxu0 0
  %3225 = vmatpush2.bf16.msra.mxu0 0
  %3226 = vmatprep.subr.bf16.mxu0 0
  %3227 = vmatpush2.bf16.msra.mxu0 0
  %3228 = vmatprep.subr.bf16.mxu0 0
  %3229 = vmatpush2.bf16.msra.mxu0 0
  %3230 = vmatprep.subr.bf16.mxu0 0
  %3231 = vmatpush2.bf16.msra.mxu0 0
  %3232 = vmatprep.subr.bf16.mxu0 0
  %3233 = vmatpush2.bf16.msra.mxu0 0
  %3234 = vmatprep.subr.bf16.mxu0 0
  %3235 = vmatpush2.bf16.msra.mxu0 0
  %3236 = vmatprep.mubr.bf16.mxu0 0
  %3237 = vmatmul.mubr.bf16.gmra.mxu0 %v3178
  %v3238 = vpop.f32.mrf.mxu0
  %v3239 = vadd.f32 0.0, %v3238
  %v3240 = vpop.f32.mrf.mxu0
  %v3241 = vpop.f32.mrf.mxu0
  %v3242 = vadd.f32 0.0, %v3241
  %v3243 = vpop.f32.mrf.mxu0
  %3244 = vmatprep.mubr.bf16.mxu0 0
  %3245 = vmatmul.mubr.bf16.gmra.mxu0 %v3181
  %v3246 = vpop.f32.mrf.mxu0
  %v3247 = vadd.f32 0.0, %v3246
  %v3248 = vpop.f32.mrf.mxu0
  %v3249 = vpop.f32.mrf.mxu0
  %v3250 = vadd.f32 0.0, %v3249
  %v3251 = vpop.f32.mrf.mxu0
  %3252 = vmatprep.mubr.bf16.mxu0 0
  %3253 = vmatmul.mubr.bf16.gmra.mxu0 %v3184
  %v3254 = vpop.f32.mrf.mxu0
  %v3255 = vadd.f32 0.0, %v3254
  %v3256 = vpop.f32.mrf.mxu0
  %v3257 = vpop.f32.mrf.mxu0
  %v3258 = vadd.f32 0.0, %v3257
  %v3259 = vpop.f32.mrf.mxu0
  %3260 = vmatprep.mubr.bf16.mxu0 0
  %3261 = vmatmul.mubr.bf16.gmra.mxu0 %v3187
  %v3262 = vpop.f32.mrf.mxu0
  %v3263 = vadd.f32 0.0, %v3262
  %v3264 = vpop.f32.mrf.mxu0
  %v3265 = vpop.f32.mrf.mxu0
  %v3266 = vadd.f32 0.0, %v3265
  %v3267 = vpop.f32.mrf.mxu0
  %3268 = vmatprep.mubr.bf16.mxu0 0
  %3269 = vmatmul.mubr.bf16.gmra.mxu0 %v3190
  %v3270 = vpop.f32.mrf.mxu0
  %v3271 = vadd.f32 0.0, %v3270
  %v3272 = vpop.f32.mrf.mxu0
  %v3273 = vpop.f32.mrf.mxu0
  %v3274 = vadd.f32 0.0, %v3273
  %v3275 = vpop.f32.mrf.mxu0
  %3276 = vmatprep.mubr.bf16.mxu0 0
  %3277 = vmatmul.mubr.bf16.gmra.mxu0 %v3193
  %v3278 = vpop.f32.mrf.mxu0
  %v3279 = vadd.f32 0.0, %v3278
  %v3280 = vpop.f32.mrf.mxu0
  %v3281 = vpop.f32.mrf.mxu0
  %v3282 = vadd.f32 0.0, %v3281
  %v3283 = vpop.f32.mrf.mxu0
  %3284 = vmatprep.mubr.bf16.mxu0 0
  %3285 = vmatmul.mubr.bf16.gmra.mxu0 %v3196
  %v3286 = vpop.f32.mrf.mxu0
  %v3287 = vadd.f32 0.0, %v3286
  %v3288 = vpop.f32.mrf.mxu0
  %v3289 = vpop.f32.mrf.mxu0
  %v3290 = vadd.f32 0.0, %v3289
  %v3291 = vpop.f32.mrf.mxu0
  %3292 = vmatprep.mubr.bf16.mxu0 0
  %3293 = vmatmul.mubr.bf16.gmra.mxu0 %v3199
  %v3294 = vpop.f32.mrf.mxu0
  %v3295 = vadd.f32 0.0, %v3294
  %v3296 = vpop.f32.mrf.mxu0
  %v3297 = vpop.f32.mrf.mxu0
  %v3298 = vadd.f32 0.0, %v3297
  %v3299 = vpop.f32.mrf.mxu0
  %3300 = vdwg.mxu0
  %v3301 = vadd.f32 %v3135, %v3239
  %v3302 = vadd.f32 %v3136, %v3242
  %v3303 = vadd.f32 %v3137, %v3247
  %v3304 = vadd.f32 %v3138, %v3250
  %v3305 = vadd.f32 %v3139, %v3255
  %v3306 = vadd.f32 %v3140, %v3258
  %v3307 = vadd.f32 %v3141, %v3263
  %v3308 = vadd.f32 %v3142, %v3266
  %v3309 = vadd.f32 %v3143, %v3271
  %v3310 = vadd.f32 %v3144, %v3274
  %v3311 = vadd.f32 %v3145, %v3279
  %v3312 = vadd.f32 %v3146, %v3282
  %v3313 = vadd.f32 %v3147, %v3287
  %v3314 = vadd.f32 %v3148, %v3290
  %v3315 = vadd.f32 %v3149, %v3295
  %v3316 = vadd.f32 %v3150, %v3298
  %v3317 = vld [vmem:[%s2984 + $0x9] sm:$0xff]
  %v3318 = vld [vmem:[%s2984 + $0x21] sm:$0xff]
  %v3319 = vld [vmem:[%s2984 + $0x39] sm:$0xff]
  %v3320 = vld [vmem:[%s2984 + $0x51] sm:$0xff]
  %v3321 = vld [vmem:[%s2984 + $0x69] sm:$0xff]
  %v3322 = vld [vmem:[%s2984 + $0x81] sm:$0xff]
  %v3323 = vld [vmem:[%s2984 + $0x99] sm:$0xff]
  %v3324 = vld [vmem:[%s2984 + $0xb1] sm:$0xff]
  %v3325 = vld [vmem:[%s2984 + $0xf9] sm:$0xff]
  %v3326 = vld [vmem:[%s2984 + $0x111] sm:$0xff]
  %v3327 = vld [vmem:[%s2984 + $0x129] sm:$0xff]
  %v3328 = vld [vmem:[%s2984 + $0x141] sm:$0xff]
  %v3329 = vld [vmem:[%s2984 + $0x159] sm:$0xff]
  %v3330 = vld [vmem:[%s2984 + $0x171] sm:$0xff]
  %v3331 = vld [vmem:[%s2984 + $0x189] sm:$0xff]
  %v3332 = vld [vmem:[%s2984 + $0x1a1] sm:$0xff]
  %v3333 = vpack.c.bf16 %v3318, %v3317
  %v3334 = vpack.c.bf16 %v3320, %v3319
  %v3335 = vpack.c.bf16 %v3322, %v3321
  %v3336 = vpack.c.bf16 %v3324, %v3323
  %v3337 = vpack.c.bf16 %v3326, %v3325
  %v3338 = vpack.c.bf16 %v3328, %v3327
  %v3339 = vpack.c.bf16 %v3330, %v3329
  %v3340 = vpack.c.bf16 %v3332, %v3331
  %s3341 = scalar_lea.vmem %s3, 32
  %v3342 = vld [vmem:[%s3341] sm:$0xf]
  %v3344 = vsel %vm21, %v3333, 0
  %v3347 = vsel %vm21, %v3334, 0
  %v3350 = vsel %vm21, %v3335, 0
  %v3353 = vsel %vm21, %v3336, 0
  %v3356 = vsel %vm21, %v3337, 0
  %v3359 = vsel %vm21, %v3338, 0
  %v3362 = vsel %vm21, %v3339, 0
  %v3365 = vsel %vm21, %v3340, 0
  %v3368 = vsel %vm412, %v3342, 0
  %3370 = vmatprep.subr.bf16.mxu0 0
  %3371 = vmatpush1.bf16.msra.mxu0 0
  %3372 = vmatprep.subr.bf16.mxu0 0
  %3373 = vmatpush1.bf16.msra.mxu0 0
  %3374 = vmatprep.subr.bf16.mxu0 0
  %3375 = vmatpush1.bf16.msra.mxu0 0
  %3376 = vmatprep.subr.bf16.mxu0 0
  %3377 = vmatpush1.bf16.msra.mxu0 0
  %3378 = vmatprep.subr.bf16.mxu0 0
  %3379 = vmatpush1.bf16.msra.mxu0 0
  %3380 = vmatprep.subr.bf16.mxu0 0
  %3381 = vmatpush1.bf16.msra.mxu0 0
  %3382 = vmatprep.subr.bf16.mxu0 0
  %3383 = vmatpush1.bf16.msra.mxu0 0
  %3384 = vmatprep.subr.bf16.mxu0 0
  %3385 = vmatpush1.bf16.msra.mxu0 %v3368
  %3386 = vmatprep.subr.bf16.mxu0 0
  %3387 = vmatpush2.bf16.msra.mxu0 0
  %3388 = vmatprep.subr.bf16.mxu0 0
  %3389 = vmatpush2.bf16.msra.mxu0 0
  %3390 = vmatprep.subr.bf16.mxu0 0
  %3391 = vmatpush2.bf16.msra.mxu0 0
  %3392 = vmatprep.subr.bf16.mxu0 0
  %3393 = vmatpush2.bf16.msra.mxu0 0
  %3394 = vmatprep.subr.bf16.mxu0 0
  %3395 = vmatpush2.bf16.msra.mxu0 0
  %3396 = vmatprep.subr.bf16.mxu0 0
  %3397 = vmatpush2.bf16.msra.mxu0 0
  %3398 = vmatprep.subr.bf16.mxu0 0
  %3399 = vmatpush2.bf16.msra.mxu0 0
  %3400 = vmatprep.subr.bf16.mxu0 0
  %3401 = vmatpush2.bf16.msra.mxu0 0
  %3402 = vmatprep.mubr.bf16.mxu0 0
  %3403 = vmatmul.mubr.bf16.gmra.mxu0 %v3344
  %v3404 = vpop.f32.mrf.mxu0
  %v3405 = vadd.f32 0.0, %v3404
  %v3406 = vpop.f32.mrf.mxu0
  %v3407 = vpop.f32.mrf.mxu0
  %v3408 = vadd.f32 0.0, %v3407
  %v3409 = vpop.f32.mrf.mxu0
  %3410 = vmatprep.mubr.bf16.mxu0 0
  %3411 = vmatmul.mubr.bf16.gmra.mxu0 %v3347
  %v3412 = vpop.f32.mrf.mxu0
  %v3413 = vadd.f32 0.0, %v3412
  %v3414 = vpop.f32.mrf.mxu0
  %v3415 = vpop.f32.mrf.mxu0
  %v3416 = vadd.f32 0.0, %v3415
  %v3417 = vpop.f32.mrf.mxu0
  %3418 = vmatprep.mubr.bf16.mxu0 0
  %3419 = vmatmul.mubr.bf16.gmra.mxu0 %v3350
  %v3420 = vpop.f32.mrf.mxu0
  %v3421 = vadd.f32 0.0, %v3420
  %v3422 = vpop.f32.mrf.mxu0
  %v3423 = vpop.f32.mrf.mxu0
  %v3424 = vadd.f32 0.0, %v3423
  %v3425 = vpop.f32.mrf.mxu0
  %3426 = vmatprep.mubr.bf16.mxu0 0
  %3427 = vmatmul.mubr.bf16.gmra.mxu0 %v3353
  %v3428 = vpop.f32.mrf.mxu0
  %v3429 = vadd.f32 0.0, %v3428
  %v3430 = vpop.f32.mrf.mxu0
  %v3431 = vpop.f32.mrf.mxu0
  %v3432 = vadd.f32 0.0, %v3431
  %v3433 = vpop.f32.mrf.mxu0
  %3434 = vmatprep.mubr.bf16.mxu0 0
  %3435 = vmatmul.mubr.bf16.gmra.mxu0 %v3356
  %v3436 = vpop.f32.mrf.mxu0
  %v3437 = vadd.f32 0.0, %v3436
  %v3438 = vpop.f32.mrf.mxu0
  %v3439 = vpop.f32.mrf.mxu0
  %v3440 = vadd.f32 0.0, %v3439
  %v3441 = vpop.f32.mrf.mxu0
  %3442 = vmatprep.mubr.bf16.mxu0 0
  %3443 = vmatmul.mubr.bf16.gmra.mxu0 %v3359
  %v3444 = vpop.f32.mrf.mxu0
  %v3445 = vadd.f32 0.0, %v3444
  %v3446 = vpop.f32.mrf.mxu0
  %v3447 = vpop.f32.mrf.mxu0
  %v3448 = vadd.f32 0.0, %v3447
  %v3449 = vpop.f32.mrf.mxu0
  %3450 = vmatprep.mubr.bf16.mxu0 0
  %3451 = vmatmul.mubr.bf16.gmra.mxu0 %v3362
  %v3452 = vpop.f32.mrf.mxu0
  %v3453 = vadd.f32 0.0, %v3452
  %v3454 = vpop.f32.mrf.mxu0
  %v3455 = vpop.f32.mrf.mxu0
  %v3456 = vadd.f32 0.0, %v3455
  %v3457 = vpop.f32.mrf.mxu0
  %3458 = vmatprep.mubr.bf16.mxu0 0
  %3459 = vmatmul.mubr.bf16.gmra.mxu0 %v3365
  %v3460 = vpop.f32.mrf.mxu0
  %v3461 = vadd.f32 0.0, %v3460
  %v3462 = vpop.f32.mrf.mxu0
  %v3463 = vpop.f32.mrf.mxu0
  %v3464 = vadd.f32 0.0, %v3463
  %v3465 = vpop.f32.mrf.mxu0
  %3466 = vdwg.mxu0
  %v3467 = vadd.f32 %v3301, %v3405
  %v3468 = vadd.f32 %v3302, %v3408
  %v3469 = vadd.f32 %v3303, %v3413
  %v3470 = vadd.f32 %v3304, %v3416
  %v3471 = vadd.f32 %v3305, %v3421
  %v3472 = vadd.f32 %v3306, %v3424
  %v3473 = vadd.f32 %v3307, %v3429
  %v3474 = vadd.f32 %v3308, %v3432
  %v3475 = vadd.f32 %v3309, %v3437
  %v3476 = vadd.f32 %v3310, %v3440
  %v3477 = vadd.f32 %v3311, %v3445
  %v3478 = vadd.f32 %v3312, %v3448
  %v3479 = vadd.f32 %v3313, %v3453
  %v3480 = vadd.f32 %v3314, %v3456
  %v3481 = vadd.f32 %v3315, %v3461
  %v3482 = vadd.f32 %v3316, %v3464
  %v3483 = vld [vmem:[%s4] sm:$0x1]
  %v3485 = vlaneseq
  %v3486 = vshrl.u32 %v3485, 7
  %v3487 = vsub.s32 0, %v3486
  %v3488 = vrot.slane %v3483, %v3487
  %v3490 = vadd.f32 %v3467, %v3488
  %v3491 = vadd.f32 %v3468, %v3488
  %v3492 = vadd.f32 %v3469, %v3488
  %v3493 = vadd.f32 %v3470, %v3488
  %v3494 = vadd.f32 %v3471, %v3488
  %v3495 = vadd.f32 %v3472, %v3488
  %v3496 = vadd.f32 %v3473, %v3488
  %v3497 = vadd.f32 %v3474, %v3488
  %v3498 = vadd.f32 %v3475, %v3488
  %v3499 = vadd.f32 %v3476, %v3488
  %v3500 = vadd.f32 %v3477, %v3488
  %v3501 = vadd.f32 %v3478, %v3488
  %v3502 = vadd.f32 %v3479, %v3488
  %v3503 = vadd.f32 %v3480, %v3488
  %v3504 = vadd.f32 %v3481, %v3488
  %v3505 = vadd.f32 %v3482, %v3488
  %vm3506 = vcmask 130048
  %3507 = vst.msk [vmem:[%s5] sm:$0xff] %vm3506, %v3490
  %3508 = vst.msk [vmem:[%s5 + $0x8] sm:$0xff] %vm3506, %v3491
  %3509 = vst.msk [vmem:[%s5 + $0x10] sm:$0xff] %vm3506, %v3492
  %3510 = vst.msk [vmem:[%s5 + $0x18] sm:$0xff] %vm3506, %v3493
  %3511 = vst.msk [vmem:[%s5 + $0x20] sm:$0xff] %vm3506, %v3494
  %3512 = vst.msk [vmem:[%s5 + $0x28] sm:$0xff] %vm3506, %v3495
  %3513 = vst.msk [vmem:[%s5 + $0x30] sm:$0xff] %vm3506, %v3496
  %3514 = vst.msk [vmem:[%s5 + $0x38] sm:$0xff] %vm3506, %v3497
  %3515 = vst.msk [vmem:[%s5 + $0x40] sm:$0xff] %vm3506, %v3498
  %3516 = vst.msk [vmem:[%s5 + $0x48] sm:$0xff] %vm3506, %v3499
  %3517 = vst.msk [vmem:[%s5 + $0x50] sm:$0xff] %vm3506, %v3500
  %3518 = vst.msk [vmem:[%s5 + $0x58] sm:$0xff] %vm3506, %v3501
  %3519 = vst.msk [vmem:[%s5 + $0x60] sm:$0xff] %vm3506, %v3502
  %3520 = vst.msk [vmem:[%s5 + $0x68] sm:$0xff] %vm3506, %v3503
  %3521 = vst.msk [vmem:[%s5 + $0x70] sm:$0xff] %vm3506, %v3504
  %3522 = vst.msk [vmem:[%s5 + $0x78] sm:$0xff] %vm3506, %v3505
  // Predicated region
  $region22: #{tpu_custom_call.1} parent=0 // pred_check
    _
  $region23: #{tpu_custom_call.1} parent=0 // pred_check_branch
    %3524 = sbr.rel (0) target = $region25
  $region24: #{tpu_custom_call.1} parent=0 // pred_region
    _
  $region25: #{tpu_custom_call.1} parent=0 // pred_fallthru
    _
  // Predicated region
  $region26: #{tpu_custom_call.1} parent=0 // pred_check
    _
  $region27: #{tpu_custom_call.1} parent=0 // pred_check_branch
    %3526 = sbr.rel (0) target = $region29
  $region28: #{tpu_custom_call.1} parent=0 // pred_region
    _
  $region29: #{tpu_custom_call.1} parent=0 // pred_fallthru
    _

</llo_original>
